<compile_context>
chip_gen: v7x
topology: tpu7x:2x2x1
jax: 0.10.0
libtpu: 0.0.40
codegen_flags: <defaults>
</compile_context>

<pallas_src>
import math

import jax
import jax.numpy as jnp
from jax.experimental import pallas as pl
from jax.experimental.pallas import tpu as pltpu

_VMEM_LIMIT_BYTES = 64 * 1024 * 1024   # explicit budget; fits v5e/v6e/v7x


# ---------------------------------------------------------------------------
# small static helpers (all shape math is Python-level / trace-time)
# ---------------------------------------------------------------------------
def _round_up(x, m):
    return ((x + m - 1) // m) * m


def _largest_divisor_leq(n, cap):
    best = 1
    for d in range(1, min(n, cap) + 1):
        if n % d == 0:
            best = d
    return best


def _pick_row_tile(n):
    # n is always a multiple of 8 here.
    for d in (256, 128, 64, 32, 16, 8):
        if n % d == 0:
            return d
    return n


def _pick_col_tile(m):
    # m is always a multiple of 128 here.
    for d in (512, 256, 128):
        if m % d == 0:
            return d
    return m


def _pick_time_tile(t, cap):
    # t is a multiple of 8 when called; returns a multiple-of-8 divisor of t.
    best = 8
    for d in range(8, min(t, cap) + 1, 8):
        if t % d == 0:
            best = d
    return best


# ---------------------------------------------------------------------------
# Kernel 1: tiled matmul + bias  (hoisted per-layer input projection)
#   (N, K) f32  @  (K, M) bf16  +  (1, M) f32  ->  (N, M) f32
# K (= E or H_pad) is kept untiled; N and M are tiled and fully parallel.
# ---------------------------------------------------------------------------
def _matmul_bias_kernel(x_ref, w_ref, b_ref, o_ref):
    x = x_ref[...].astype(w_ref.dtype)
    o_ref[...] = (jnp.dot(x, w_ref[...], preferred_element_type=jnp.float32)
                  + b_ref[...])


def matmul_bias(x, w, b):
    n, k = x.shape
    _, m = w.shape
    tn = _pick_row_tile(n)
    tm = _pick_col_tile(m)
    return pl.pallas_call(
        _matmul_bias_kernel,
        out_shape=jax.ShapeDtypeStruct((n, m), jnp.float32),
        grid_spec=pltpu.PrefetchScalarGridSpec(
            num_scalar_prefetch=0,
            grid=(n // tn, m // tm),
            in_specs=[
                pl.BlockSpec((tn, k), lambda i, j: (i, 0)),
                pl.BlockSpec((k, tm), lambda i, j: (0, j)),
                pl.BlockSpec((1, tm), lambda i, j: (0, j)),
            ],
            out_specs=pl.BlockSpec((tn, tm), lambda i, j: (i, j)),
        ),
        compiler_params=pltpu.CompilerParams(
            dimension_semantics=("parallel", "parallel"),
            vmem_limit_bytes=_VMEM_LIMIT_BYTES),
    )(x, w, b)


# ---------------------------------------------------------------------------
# Kernel 2: LSTM recurrence over time chunks.
# grid = (batch_blocks [parallel], time_chunks [arbitrary]).
# gates_in = X @ W_ih + (b_ih + b_hh) is precomputed; each step only does
# h @ W_hh plus elementwise gates.  Gate order follows PyTorch: [i, f, g, o].
# ---------------------------------------------------------------------------
def _lstm_chunk_kernel(gin_ref, h0_ref, c0_ref, whh_hbm,
                       y_ref, hT_ref, cT_ref,
                       whh_vmem, dma_sem):
    t = pl.program_id(1)

    @pl.when(t == 0)
    def _init():
        # One-time, single-buffered copy of the recurrent weights into VMEM,
        # and seed the resident h/c accumulators from the initial state.
        cp = pltpu.make_async_copy(whh_hbm, whh_vmem, dma_sem)
        cp.start()
        cp.wait()
        hT_ref[...] = h0_ref[...]
        cT_ref[...] = c0_ref[...]

    w = whh_vmem[...]                      # (H_pad, 4*H_pad), bf16
    h = hT_ref[...]                        # (BB, H_pad), f32
    c = cT_ref[...]                        # (BB, H_pad), f32
    hp = h.shape[-1]
    tt = gin_ref.shape[0]

    # Fully unrolled over the time chunk; h/c stay in vregs between steps.
    for s in range(tt):
        gates = gin_ref[s] + jnp.dot(h.astype(w.dtype), w,
                                     preferred_element_type=jnp.float32)
        i_g = jax.nn.sigmoid(gates[:, 0 * hp:1 * hp])
        f_g = jax.nn.sigmoid(gates[:, 1 * hp:2 * hp])
        g_g = jnp.tanh(gates[:, 2 * hp:3 * hp])
        o_g = jax.nn.sigmoid(gates[:, 3 * hp:4 * hp])
        c = f_g * c + i_g * g_g
        h = o_g * jnp.tanh(c)
        y_ref[s] = h

    hT_ref[...] = h
    cT_ref[...] = c


def lstm_layer(gates_in, h0, c0, w_hh, *, tt, bb):
    """gates_in: (T, Bp, 4*Hp) f32 (precomputed x@W_ih + bias).
    Returns y (T, Bp, Hp) f32, h_T (Bp, Hp), c_T (Bp, Hp)."""
    T, bp, g4 = gates_in.shape
    hp = g4 // 4
    return pl.pallas_call(
        _lstm_chunk_kernel,
        out_shape=(
            jax.ShapeDtypeStruct((T, bp, hp), jnp.float32),
            jax.ShapeDtypeStruct((bp, hp), jnp.float32),
            jax.ShapeDtypeStruct((bp, hp), jnp.float32),
        ),
        grid_spec=pltpu.PrefetchScalarGridSpec(
            num_scalar_prefetch=0,
            grid=(bp // bb, T // tt),
            in_specs=[
                pl.BlockSpec((tt, bb, g4), lambda b, t: (t, b, 0)),
                pl.BlockSpec((bb, hp), lambda b, t: (b, 0)),
                pl.BlockSpec((bb, hp), lambda b, t: (b, 0)),
                pl.BlockSpec(memory_space=pl.ANY),        # W_hh stays in HBM
            ],
            out_specs=[
                pl.BlockSpec((tt, bb, hp), lambda b, t: (t, b, 0)),
                pl.BlockSpec((bb, hp), lambda b, t: (b, 0)),
                pl.BlockSpec((bb, hp), lambda b, t: (b, 0)),
            ],
            scratch_shapes=[
                pltpu.VMEM((hp, g4), w_hh.dtype),         # single-buffered W_hh
                pltpu.SemaphoreType.DMA(()),
            ],
        ),
        compiler_params=pltpu.CompilerParams(
            dimension_semantics=("parallel", "arbitrary"),
            vmem_limit_bytes=_VMEM_LIMIT_BYTES),
    )(gates_in, h0, c0, w_hh)


# ---------------------------------------------------------------------------
# Kernel 3: vocab projection, time-major input -> batch-first output.
# grid = (batch_blocks, time_blocks, vocab_blocks), all parallel.
# ---------------------------------------------------------------------------
def _vocab_proj_kernel(y_ref, w_ref, b_ref, o_ref):
    tt, bb, hp = y_ref.shape
    tv = o_ref.shape[-1]
    w = w_ref[...]
    y2 = y_ref[...].reshape(tt * bb, hp).astype(w.dtype)
    out = jnp.dot(y2, w, preferred_element_type=jnp.float32) + b_ref[...]
    # Scatter time-major rows into the batch-first output block.
    for s in range(tt):
        o_ref[:, s:s + 1, :] = out[s * bb:(s + 1) * bb, :].reshape(bb, 1, tv)


def vocab_projection(y, w, b, *, tt, bb):
    """y: (T, Bp, Hp) f32 time-major -> logits (Bp, T, Vp) f32 batch-first."""
    T, bp, hp = y.shape
    vp = w.shape[-1]
    tv = _pick_col_tile(vp)
    return pl.pallas_call(
        _vocab_proj_kernel,
        out_shape=jax.ShapeDtypeStruct((bp, T, vp), jnp.float32),
        grid_spec=pltpu.PrefetchScalarGridSpec(
            num_scalar_prefetch=0,
            grid=(bp // bb, T // tt, vp // tv),
            in_specs=[
                pl.BlockSpec((tt, bb, hp), lambda b, t, j: (t, b, 0)),
                pl.BlockSpec((hp, tv), lambda b, t, j: (0, j)),
                pl.BlockSpec((1, tv), lambda b, t, j: (0, j)),
            ],
            out_specs=pl.BlockSpec((bb, tt, tv), lambda b, t, j: (b, t, j)),
        ),
        compiler_params=pltpu.CompilerParams(
            dimension_semantics=("parallel", "parallel", "parallel"),
            vmem_limit_bytes=_VMEM_LIMIT_BYTES),
    )(y, w, b)


# ---------------------------------------------------------------------------
# BinsLstm in JAX + Pallas
# ---------------------------------------------------------------------------
class BinsLstmPallas:
    def __init__(self, vocab_size, embedding_dim, hidden_size, num_layers,
                 dropout=0.3, seed=0, param_dtype=jnp.bfloat16):
        self.vocab_size = vocab_size
        self.embedding_dim = embedding_dim
        self.hidden_size = hidden_size
        self.num_layers = num_layers
        self.dropout = dropout  # stored but unused, exactly like the reference

        self.H_pad = _round_up(hidden_size, 128)
        self.V_pad = _round_up(vocab_size, 128)
        Hp, Vp = self.H_pad, self.V_pad

        key = jax.random.PRNGKey(seed)
        keys = jax.random.split(key, 3 + 4 * num_layers)

        # Embedding ~ N(0, 1), like nn.Embedding default.
        self.embedding = jax.random.normal(
            keys[0], (vocab_size, embedding_dim), dtype=jnp.float32)

        # LSTM params, PyTorch init U(-1/sqrt(H), 1/sqrt(H)), gate order
        # [i, f, g, o]. Stored pre-transposed (x @ W form), gate blocks placed
        # at 128-aligned column offsets, b_ih + b_hh combined, bf16 weights.
        k = 1.0 / math.sqrt(hidden_size)
        self.lstm_params = []
        for layer in range(num_layers):
            in_size = embedding_dim if layer == 0 else hidden_size
            in_pad = embedding_dim if layer == 0 else Hp
            kk = keys[3 + 4 * layer: 3 + 4 * layer + 4]
            w_ih = jax.random.uniform(kk[0], (4 * hidden_size, in_size),
                                      minval=-k, maxval=k, dtype=jnp.float32)
            w_hh = jax.random.uniform(kk[1], (4 * hidden_size, hidden_size),
                                      minval=-k, maxval=k, dtype=jnp.float32)
            b_ih = jax.random.uniform(kk[2], (4 * hidden_size,),
                                      minval=-k, maxval=k, dtype=jnp.float32)
            b_hh = jax.random.uniform(kk[3], (4 * hidden_size,),
                                      minval=-k, maxval=k, dtype=jnp.float32)
            w_ih_p = self._pad_gates(w_ih.T, in_pad, hidden_size, Hp, param_dtype)
            w_hh_p = self._pad_gates(w_hh.T, Hp, hidden_size, Hp, param_dtype)
            bias_p = self._pad_gates((b_ih + b_hh).reshape(1, -1), 1,
                                     hidden_size, Hp, jnp.float32)
            self.lstm_params.append((w_ih_p, w_hh_p, bias_p))

        # Linear: U(-1/sqrt(H), 1/sqrt(H)); stored (Hp, Vp), bf16 weight.
        kl = 1.0 / math.sqrt(hidden_size)
        lin_w = jax.random.uniform(keys[1], (vocab_size, hidden_size),
                                   minval=-kl, maxval=kl, dtype=jnp.float32)
        lin_b = jax.random.uniform(keys[2], (vocab_size,),
                                   minval=-kl, maxval=kl, dtype=jnp.float32)
        self.lin_w = (jnp.zeros((Hp, Vp), jnp.float32)
                      .at[:hidden_size, :vocab_size].set(lin_w.T)
                      .astype(param_dtype))
        self.lin_b = jnp.zeros((1, Vp), jnp.float32).at[:, :vocab_size].set(lin_b)

        self._fwd = jax.jit(self._forward_impl)

    @staticmethod
    def _pad_gates(w_t, rows_pad, H, Hp, dtype):
        """w_t: (rows, 4*H) with gates [i|f|g|o]; returns (rows_pad, 4*Hp) with
        each gate block at a 128-aligned column offset, zero padding."""
        rows = w_t.shape[0]
        out = jnp.zeros((rows_pad, 4 * Hp), jnp.float32)
        for g in range(4):
            out = out.at[:rows, g * Hp: g * Hp + H].set(
                w_t[:, g * H:(g + 1) * H])
        return out.astype(dtype)

    def init_hidden(self, bzs):
        h0 = jnp.zeros((self.num_layers, bzs, self.hidden_size), jnp.float32)
        c0 = jnp.zeros((self.num_layers, bzs, self.hidden_size), jnp.float32)
        return (h0, c0)

    def forward(self, x, hidden):
        """x: (B, T) int32 token ids; hidden: (h0, c0) each (L, B, H)."""
        h0, c0 = hidden
        return self._fwd(x, h0, c0)

    # -- implementation ----------------------------------------------------
    def _forward_impl(self, x, h0_all, c0_all):
        B, T = x.shape
        H, Hp, V, Vp = self.hidden_size, self.H_pad, self.vocab_size, self.V_pad
        L = self.num_layers

        Bp = _round_up(B, 8)
        bb = Bp if Bp <= 128 else 128
        Bp = _round_up(Bp, bb)
        tt = _largest_divisor_leq(T, 16)       # time chunk for the recurrence

        # Pad batch in token space (cheap) and gather the embedding time-major:
        # no activation transposes anywhere downstream.
        x_p = jnp.zeros((Bp, T), x.dtype).at[:B].set(x)
        layer_in = jnp.take(self.embedding, x_p.T, axis=0)       # (T, Bp, E)

        h0_p = jnp.zeros((L, Bp, Hp), jnp.float32).at[:, :B, :H].set(h0_all)
        c0_p = jnp.zeros((L, Bp, Hp), jnp.float32).at[:, :B, :H].set(c0_all)

        h_fin, c_fin = [], []
        n = T * Bp
        for layer in range(L):
            w_ih, w_hh, bias = self.lstm_params[layer]
            # Hoisted input projection for all timesteps at once.
            gates_in = matmul_bias(
                layer_in.reshape(n, layer_in.shape[-1]), w_ih, bias)
            gates_in = gates_in.reshape(T, Bp, 4 * Hp)
            y, h_t, c_t = lstm_layer(gates_in, h0_p[layer], c0_p[layer], w_hh,
                                     tt=tt, bb=bb)
            h_fin.append(h_t)
            c_fin.append(c_t)
            layer_in = y                                         # (T, Bp, Hp)
            # TODO(synk): fuse all layers over one time chunk in a single kernel
            # to avoid the per-layer-boundary HBM round trip of (T, Bp, Hp).

        # Vocab projection (pad time to a multiple of 8 so its output block is
        # lane/sublane legal; padded timesteps are sliced off).
        Tp = _round_up(T, 8)
        if Tp != T:
            layer_in = jnp.concatenate(
                [layer_in, jnp.zeros((Tp - T, Bp, Hp), jnp.float32)], axis=0)
        tto = _pick_time_tile(Tp, 32)
        logits_p = vocab_projection(layer_in, self.lin_w, self.lin_b,
                                    tt=tto, bb=bb)               # (Bp, Tp, Vp)
        logits = logits_p[:B, :T, :V]
        h_n = jnp.stack(h_fin, axis=0)[:, :B, :H]
        c_n = jnp.stack(c_fin, axis=0)[:, :B, :H]
        return logits, (h_n, c_n)

    # -- pure-JAX replica of the same math, for validation ------------------
    def reference_forward(self, x, hidden):
        h0_all, c0_all = hidden
        B, T = x.shape
        H, Hp, V = self.hidden_size, self.H_pad, self.vocab_size
        L = self.num_layers
        Bp = _round_up(B, 8)
        bb = Bp if Bp <= 128 else 128
        Bp = _round_up(Bp, bb)

        x_p = jnp.zeros((Bp, T), x.dtype).at[:B].set(x)
        layer_in = jnp.take(self.embedding, x_p.T, axis=0)
        h0_p = jnp.zeros((L, Bp, Hp), jnp.float32).at[:, :B, :H].set(h0_all)
        c0_p = jnp.zeros((L, Bp, Hp), jnp.float32).at[:, :B, :H].set(c0_all)

        h_fin, c_fin = [], []
        for layer in range(L):
            w_ih, w_hh, bias = self.lstm_params[layer]
            gi = jnp.dot(layer_in.astype(w_ih.dtype), w_ih,
                         preferred_element_type=jnp.float32) + bias
            h, c = h0_p[layer], c0_p[layer]
            ys = []
            for t in range(T):
                g = gi[t] + jnp.dot(h.astype(w_hh.dtype), w_hh,
                                    preferred_element_type=jnp.float32)
                i_g = jax.nn.sigmoid(g[:, 0 * Hp:1 * Hp])
                f_g = jax.nn.sigmoid(g[:, 1 * Hp:2 * Hp])
                g_g = jnp.tanh(g[:, 2 * Hp:3 * Hp])
                o_g = jax.nn.sigmoid(g[:, 3 * Hp:4 * Hp])
                c = f_g * c + i_g * g_g
                h = o_g * jnp.tanh(c)
                ys.append(h)
            layer_in = jnp.stack(ys, axis=0)
            h_fin.append(h)
            c_fin.append(c)

        logits = jnp.dot(layer_in.astype(self.lin_w.dtype), self.lin_w,
                         preferred_element_type=jnp.float32) + self.lin_b
        logits = jnp.transpose(logits, (1, 0, 2))[:B, :, :V]
        h_n = jnp.stack(h_fin, axis=0)[:, :B, :H]
        c_n = jnp.stack(c_fin, axis=0)[:, :B, :H]
        return logits, (h_n, c_n)


if __name__ == "__main__":
    vocab_size = 64
    embedding_dim = 32
    hidden_size = 32
    num_layers = 2
    batch = 2
    seq = 8

    model = BinsLstmPallas(vocab_size, embedding_dim, hidden_size, num_layers,
                           dropout=0.3, seed=0)

    key = jax.random.PRNGKey(0)
    x = jax.random.randint(key, (batch, seq), 0, vocab_size, dtype=jnp.int32)
    hidden = model.init_hidden(batch)

    out, (h_n, c_n) = model.forward(x, hidden)
    jax.block_until_ready((out, h_n, c_n))

    assert out.shape == (batch, seq, vocab_size)
    assert h_n.shape == (num_layers, batch, hidden_size)
    assert c_n.shape == (num_layers, batch, hidden_size)
    assert bool(jnp.all(jnp.isfinite(out)))

    # Validate the Pallas path against a pure-JAX replica of the same math.
    ref_out, (ref_h, ref_c) = model.reference_forward(x, hidden)
    assert jnp.allclose(out, ref_out, atol=2e-2, rtol=2e-2), \
        float(jnp.max(jnp.abs(out - ref_out)))
    assert jnp.allclose(h_n, ref_h, atol=2e-2, rtol=2e-2)
    assert jnp.allclose(c_n, ref_c, atol=2e-2, rtol=2e-2)

    print("KERNEL_OK")
</pallas_src>

<mosaic_0001>
module attributes {stable_mosaic.version = 11 : i64} {
  func.func @_vocab_proj_kernel(%arg0: i32, %arg1: i32, %arg2: i32, %arg3: memref<8x8x128xf32, #tpu.memory_space<vmem>>, %arg4: memref<128x128xbf16, #tpu.memory_space<vmem>>, %arg5: memref<1x128xf32, #tpu.memory_space<vmem>>, %arg6: memref<8x8x128xf32, #tpu.memory_space<vmem>>) attributes {dimension_semantics = [#tpu.dimension_semantics<parallel>, #tpu.dimension_semantics<parallel>, #tpu.dimension_semantics<parallel>], iteration_bounds = array<i64: 1, 1, 1>, scalar_prefetch = 0 : i64, scratch_operands = 0 : i64, tpu.core_type = #tpu.core_type<tc>, window_params = [{transform_indices = @transform_0, window_bounds = array<i64: 8, 8, 128>}, {transform_indices = @transform_1, window_bounds = array<i64: 128, 128>}, {transform_indices = @transform_2, window_bounds = array<i64: 1, 128>}, {transform_indices = @transform_3, window_bounds = array<i64: 8, 8, 128>}]} {
    %c0 = arith.constant 0 : index
    %c0_0 = arith.constant 0 : index
    %0 = vector.load %arg4[%c0, %c0_0] : memref<128x128xbf16, #tpu.memory_space<vmem>>, vector<128x128xbf16>
    %c0_1 = arith.constant 0 : index
    %c0_2 = arith.constant 0 : index
    %c0_3 = arith.constant 0 : index
    %1 = vector.load %arg3[%c0_1, %c0_2, %c0_3] : memref<8x8x128xf32, #tpu.memory_space<vmem>>, vector<8x8x128xf32>
    %2 = vector.shape_cast %1 : vector<8x8x128xf32> to vector<64x128xf32>
    %3 = arith.truncf %2 : vector<64x128xf32> to vector<64x128xbf16>
    %cst = arith.constant dense<0.000000e+00> : vector<64x128xf32>
    %4 = tpu.matmul %3, %0, %cst {dimension_numbers = #tpu.dot_dimension_numbers<[1], [0], [0], [1], [0, 0, 1, 1], [], []>} : vector<64x128xbf16>, vector<128x128xbf16>, vector<64x128xf32> -> vector<64x128xf32>
    %c0_4 = arith.constant 0 : index
    %c0_5 = arith.constant 0 : index
    %5 = vector.load %arg5[%c0_4, %c0_5] : memref<1x128xf32, #tpu.memory_space<vmem>>, vector<1x128xf32>
    %6 = vector.broadcast %5 : vector<1x128xf32> to vector<64x128xf32>
    %7 = arith.addf %4, %6 : vector<64x128xf32>
    %8 = vector.extract_strided_slice %7 {offsets = [0, 0], sizes = [8, 128], strides = [1, 1]} : vector<64x128xf32> to vector<8x128xf32>
    %9 = vector.shape_cast %8 : vector<8x128xf32> to vector<8x1x128xf32>
    %c0_6 = arith.constant 0 : index
    %c0_7 = arith.constant 0 : index
    %c0_8 = arith.constant 0 : index
    %10 = vector.load %arg6[%c0_6, %c0_7, %c0_8] : memref<8x8x128xf32, #tpu.memory_space<vmem>>, vector<8x1x128xf32>
    tpu.vector_store %arg6[%c0_6, %c0_7, %c0_8], %9 {strides = array<i32>} : memref<8x8x128xf32, #tpu.memory_space<vmem>>, vector<8x1x128xf32>,
    %11 = vector.extract_strided_slice %7 {offsets = [8, 0], sizes = [8, 128], strides = [1, 1]} : vector<64x128xf32> to vector<8x128xf32>
    %12 = vector.shape_cast %11 : vector<8x128xf32> to vector<8x1x128xf32>
    %c0_9 = arith.constant 0 : index
    %c1 = arith.constant 1 : index
    %c0_10 = arith.constant 0 : index
    %13 = vector.load %arg6[%c0_9, %c1, %c0_10] : memref<8x8x128xf32, #tpu.memory_space<vmem>>, vector<8x1x128xf32>
    tpu.vector_store %arg6[%c0_9, %c1, %c0_10], %12 {strides = array<i32>} : memref<8x8x128xf32, #tpu.memory_space<vmem>>, vector<8x1x128xf32>,
    %14 = vector.extract_strided_slice %7 {offsets = [16, 0], sizes = [8, 128], strides = [1, 1]} : vector<64x128xf32> to vector<8x128xf32>
    %15 = vector.shape_cast %14 : vector<8x128xf32> to vector<8x1x128xf32>
    %c0_11 = arith.constant 0 : index
    %c2 = arith.constant 2 : index
    %c0_12 = arith.constant 0 : index
    %16 = vector.load %arg6[%c0_11, %c2, %c0_12] : memref<8x8x128xf32, #tpu.memory_space<vmem>>, vector<8x1x128xf32>
    tpu.vector_store %arg6[%c0_11, %c2, %c0_12], %15 {strides = array<i32>} : memref<8x8x128xf32, #tpu.memory_space<vmem>>, vector<8x1x128xf32>,
    %17 = vector.extract_strided_slice %7 {offsets = [24, 0], sizes = [8, 128], strides = [1, 1]} : vector<64x128xf32> to vector<8x128xf32>
    %18 = vector.shape_cast %17 : vector<8x128xf32> to vector<8x1x128xf32>
    %c0_13 = arith.constant 0 : index
    %c3 = arith.constant 3 : index
    %c0_14 = arith.constant 0 : index
    %19 = vector.load %arg6[%c0_13, %c3, %c0_14] : memref<8x8x128xf32, #tpu.memory_space<vmem>>, vector<8x1x128xf32>
    tpu.vector_store %arg6[%c0_13, %c3, %c0_14], %18 {strides = array<i32>} : memref<8x8x128xf32, #tpu.memory_space<vmem>>, vector<8x1x128xf32>,
    %20 = vector.extract_strided_slice %7 {offsets = [32, 0], sizes = [8, 128], strides = [1, 1]} : vector<64x128xf32> to vector<8x128xf32>
    %21 = vector.shape_cast %20 : vector<8x128xf32> to vector<8x1x128xf32>
    %c0_15 = arith.constant 0 : index
    %c4 = arith.constant 4 : index
    %c0_16 = arith.constant 0 : index
    %22 = vector.load %arg6[%c0_15, %c4, %c0_16] : memref<8x8x128xf32, #tpu.memory_space<vmem>>, vector<8x1x128xf32>
    tpu.vector_store %arg6[%c0_15, %c4, %c0_16], %21 {strides = array<i32>} : memref<8x8x128xf32, #tpu.memory_space<vmem>>, vector<8x1x128xf32>,
    %23 = vector.extract_strided_slice %7 {offsets = [40, 0], sizes = [8, 128], strides = [1, 1]} : vector<64x128xf32> to vector<8x128xf32>
    %24 = vector.shape_cast %23 : vector<8x128xf32> to vector<8x1x128xf32>
    %c0_17 = arith.constant 0 : index
    %c5 = arith.constant 5 : index
    %c0_18 = arith.constant 0 : index
    %25 = vector.load %arg6[%c0_17, %c5, %c0_18] : memref<8x8x128xf32, #tpu.memory_space<vmem>>, vector<8x1x128xf32>
    tpu.vector_store %arg6[%c0_17, %c5, %c0_18], %24 {strides = array<i32>} : memref<8x8x128xf32, #tpu.memory_space<vmem>>, vector<8x1x128xf32>,
    %26 = vector.extract_strided_slice %7 {offsets = [48, 0], sizes = [8, 128], strides = [1, 1]} : vector<64x128xf32> to vector<8x128xf32>
    %27 = vector.shape_cast %26 : vector<8x128xf32> to vector<8x1x128xf32>
    %c0_19 = arith.constant 0 : index
    %c6 = arith.constant 6 : index
    %c0_20 = arith.constant 0 : index
    %28 = vector.load %arg6[%c0_19, %c6, %c0_20] : memref<8x8x128xf32, #tpu.memory_space<vmem>>, vector<8x1x128xf32>
    tpu.vector_store %arg6[%c0_19, %c6, %c0_20], %27 {strides = array<i32>} : memref<8x8x128xf32, #tpu.memory_space<vmem>>, vector<8x1x128xf32>,
    %29 = vector.extract_strided_slice %7 {offsets = [56, 0], sizes = [8, 128], strides = [1, 1]} : vector<64x128xf32> to vector<8x128xf32>
    %30 = vector.shape_cast %29 : vector<8x128xf32> to vector<8x1x128xf32>
    %c0_21 = arith.constant 0 : index
    %c7 = arith.constant 7 : index
    %c0_22 = arith.constant 0 : index
    %31 = vector.load %arg6[%c0_21, %c7, %c0_22] : memref<8x8x128xf32, #tpu.memory_space<vmem>>, vector<8x1x128xf32>
    tpu.vector_store %arg6[%c0_21, %c7, %c0_22], %30 {strides = array<i32>} : memref<8x8x128xf32, #tpu.memory_space<vmem>>, vector<8x1x128xf32>,
    return
  }
  func.func @transform_0(%arg0: i32, %arg1: i32, %arg2: i32) -> (i32, i32, i32) {
    %c0_i32 = arith.constant 0 : i32
    %c0_i32_0 = arith.constant 0 : i32
    return %arg1, %arg0, %c0_i32 : i32, i32, i32
  }
  func.func @transform_1(%arg0: i32, %arg1: i32, %arg2: i32) -> (i32, i32) {
    %c0_i32 = arith.constant 0 : i32
    %c0_i32_0 = arith.constant 0 : i32
    return %c0_i32, %arg2 : i32, i32
  }
  func.func @transform_2(%arg0: i32, %arg1: i32, %arg2: i32) -> (i32, i32) {
    %c0_i32 = arith.constant 0 : i32
    %c0_i32_0 = arith.constant 0 : i32
    return %c0_i32, %arg2 : i32, i32
  }
  func.func @transform_3(%arg0: i32, %arg1: i32, %arg2: i32) -> (i32, i32, i32) {
    %c0_i32 = arith.constant 0 : i32
    return %arg0, %arg1, %arg2 : i32, i32, i32
  }
}

module attributes {stable_mosaic.version = 11 : i64} {
  func.func @_matmul_bias_kernel(%arg0: i32, %arg1: i32, %arg2: memref<64x32xf32, #tpu.memory_space<vmem>>, %arg3: memref<32x512xbf16, #tpu.memory_space<vmem>>, %arg4: memref<1x512xf32, #tpu.memory_space<vmem>>, %arg5: memref<64x512xf32, #tpu.memory_space<vmem>>) attributes {dimension_semantics = [#tpu.dimension_semantics<parallel>, #tpu.dimension_semantics<parallel>], iteration_bounds = array<i64: 1, 1>, scalar_prefetch = 0 : i64, scratch_operands = 0 : i64, tpu.core_type = #tpu.core_type<tc>, window_params = [{transform_indices = @transform_0, window_bounds = array<i64: 64, 32>}, {transform_indices = @transform_1, window_bounds = array<i64: 32, 512>}, {transform_indices = @transform_2, window_bounds = array<i64: 1, 512>}, {transform_indices = @transform_3, window_bounds = array<i64: 64, 512>}]} {
    %c0 = arith.constant 0 : index
    %c0_0 = arith.constant 0 : index
    %0 = vector.load %arg2[%c0, %c0_0] : memref<64x32xf32, #tpu.memory_space<vmem>>, vector<64x32xf32>
    %1 = arith.truncf %0 : vector<64x32xf32> to vector<64x32xbf16>
    %c0_1 = arith.constant 0 : index
    %c0_2 = arith.constant 0 : index
    %2 = vector.load %arg3[%c0_1, %c0_2] : memref<32x512xbf16, #tpu.memory_space<vmem>>, vector<32x512xbf16>
    %cst = arith.constant dense<0.000000e+00> : vector<64x512xf32>
    %3 = tpu.matmul %1, %2, %cst {dimension_numbers = #tpu.dot_dimension_numbers<[1], [0], [0], [1], [0, 0, 1, 1], [], []>} : vector<64x32xbf16>, vector<32x512xbf16>, vector<64x512xf32> -> vector<64x512xf32>
    %c0_3 = arith.constant 0 : index
    %c0_4 = arith.constant 0 : index
    %4 = vector.load %arg4[%c0_3, %c0_4] : memref<1x512xf32, #tpu.memory_space<vmem>>, vector<1x512xf32>
    %5 = vector.broadcast %4 : vector<1x512xf32> to vector<64x512xf32>
    %6 = arith.addf %3, %5 : vector<64x512xf32>
    %c0_5 = arith.constant 0 : index
    %c0_6 = arith.constant 0 : index
    %7 = vector.load %arg5[%c0_5, %c0_6] : memref<64x512xf32, #tpu.memory_space<vmem>>, vector<64x512xf32>
    tpu.vector_store %arg5[%c0_5, %c0_6], %6 {strides = array<i32>} : memref<64x512xf32, #tpu.memory_space<vmem>>, vector<64x512xf32>,
    return
  }
  func.func @transform_0(%arg0: i32, %arg1: i32) -> (i32, i32) {
    %c0_i32 = arith.constant 0 : i32
    %c0_i32_0 = arith.constant 0 : i32
    return %arg0, %c0_i32 : i32, i32
  }
  func.func @transform_1(%arg0: i32, %arg1: i32) -> (i32, i32) {
    %c0_i32 = arith.constant 0 : i32
    %c0_i32_0 = arith.constant 0 : i32
    return %c0_i32, %arg1 : i32, i32
  }
  func.func @transform_2(%arg0: i32, %arg1: i32) -> (i32, i32) {
    %c0_i32 = arith.constant 0 : i32
    %c0_i32_0 = arith.constant 0 : i32
    return %c0_i32, %arg1 : i32, i32
  }
  func.func @transform_3(%arg0: i32, %arg1: i32) -> (i32, i32) {
    %c0_i32 = arith.constant 0 : i32
    return %arg0, %arg1 : i32, i32
  }
}

module attributes {stable_mosaic.version = 11 : i64} {
  func.func @_matmul_bias_kernel(%arg0: i32, %arg1: i32, %arg2: memref<64x128xf32, #tpu.memory_space<vmem>>, %arg3: memref<128x512xbf16, #tpu.memory_space<vmem>>, %arg4: memref<1x512xf32, #tpu.memory_space<vmem>>, %arg5: memref<64x512xf32, #tpu.memory_space<vmem>>) attributes {dimension_semantics = [#tpu.dimension_semantics<parallel>, #tpu.dimension_semantics<parallel>], iteration_bounds = array<i64: 1, 1>, scalar_prefetch = 0 : i64, scratch_operands = 0 : i64, tpu.core_type = #tpu.core_type<tc>, window_params = [{transform_indices = @transform_0, window_bounds = array<i64: 64, 128>}, {transform_indices = @transform_1, window_bounds = array<i64: 128, 512>}, {transform_indices = @transform_2, window_bounds = array<i64: 1, 512>}, {transform_indices = @transform_3, window_bounds = array<i64: 64, 512>}]} {
    %c0 = arith.constant 0 : index
    %c0_0 = arith.constant 0 : index
    %0 = vector.load %arg2[%c0, %c0_0] : memref<64x128xf32, #tpu.memory_space<vmem>>, vector<64x128xf32>
    %1 = arith.truncf %0 : vector<64x128xf32> to vector<64x128xbf16>
    %c0_1 = arith.constant 0 : index
    %c0_2 = arith.constant 0 : index
    %2 = vector.load %arg3[%c0_1, %c0_2] : memref<128x512xbf16, #tpu.memory_space<vmem>>, vector<128x512xbf16>
    %cst = arith.constant dense<0.000000e+00> : vector<64x512xf32>
    %3 = tpu.matmul %1, %2, %cst {dimension_numbers = #tpu.dot_dimension_numbers<[1], [0], [0], [1], [0, 0, 1, 1], [], []>} : vector<64x128xbf16>, vector<128x512xbf16>, vector<64x512xf32> -> vector<64x512xf32>
    %c0_3 = arith.constant 0 : index
    %c0_4 = arith.constant 0 : index
    %4 = vector.load %arg4[%c0_3, %c0_4] : memref<1x512xf32, #tpu.memory_space<vmem>>, vector<1x512xf32>
    %5 = vector.broadcast %4 : vector<1x512xf32> to vector<64x512xf32>
    %6 = arith.addf %3, %5 : vector<64x512xf32>
    %c0_5 = arith.constant 0 : index
    %c0_6 = arith.constant 0 : index
    %7 = vector.load %arg5[%c0_5, %c0_6] : memref<64x512xf32, #tpu.memory_space<vmem>>, vector<64x512xf32>
    tpu.vector_store %arg5[%c0_5, %c0_6], %6 {strides = array<i32>} : memref<64x512xf32, #tpu.memory_space<vmem>>, vector<64x512xf32>,
    return
  }
  func.func @transform_0(%arg0: i32, %arg1: i32) -> (i32, i32) {
    %c0_i32 = arith.constant 0 : i32
    %c0_i32_0 = arith.constant 0 : i32
    return %arg0, %c0_i32 : i32, i32
  }
  func.func @transform_1(%arg0: i32, %arg1: i32) -> (i32, i32) {
    %c0_i32 = arith.constant 0 : i32
    %c0_i32_0 = arith.constant 0 : i32
    return %c0_i32, %arg1 : i32, i32
  }
  func.func @transform_2(%arg0: i32, %arg1: i32) -> (i32, i32) {
    %c0_i32 = arith.constant 0 : i32
    %c0_i32_0 = arith.constant 0 : i32
    return %c0_i32, %arg1 : i32, i32
  }
  func.func @transform_3(%arg0: i32, %arg1: i32) -> (i32, i32) {
    %c0_i32 = arith.constant 0 : i32
    return %arg0, %arg1 : i32, i32
  }
}

module attributes {stable_mosaic.version = 11 : i64} {
  func.func @_lstm_chunk_kernel(%arg0: i32, %arg1: i32, %arg2: memref<8x8x512xf32, #tpu.memory_space<vmem>>, %arg3: memref<8x128xf32, #tpu.memory_space<vmem>>, %arg4: memref<8x128xf32, #tpu.memory_space<vmem>>, %arg5: memref<128x512xbf16, #tpu.memory_space<any>>, %arg6: memref<8x8x128xf32, #tpu.memory_space<vmem>>, %arg7: memref<8x128xf32, #tpu.memory_space<vmem>>, %arg8: memref<8x128xf32, #tpu.memory_space<vmem>>, %arg9: memref<128x512xbf16, #tpu.memory_space<vmem>>, %arg10: memref<!tpu.dma_semaphore, #tpu.memory_space<semaphore_mem>>) attributes {dimension_semantics = [#tpu.dimension_semantics<parallel>, #tpu.dimension_semantics<arbitrary>], iteration_bounds = array<i64: 1, 1>, scalar_prefetch = 0 : i64, scratch_operands = 2 : i64, tpu.core_type = #tpu.core_type<tc>, window_params = [{transform_indices = @transform_0, window_bounds = array<i64: 8, 8, 512>}, {transform_indices = @transform_1, window_bounds = array<i64: 8, 128>}, {transform_indices = @transform_2, window_bounds = array<i64: 8, 128>}, {}, {transform_indices = @transform_4, window_bounds = array<i64: 8, 8, 128>}, {transform_indices = @transform_5, window_bounds = array<i64: 8, 128>}, {transform_indices = @transform_6, window_bounds = array<i64: 8, 128>}]} {
    %c0_i32 = arith.constant 0 : i32
    %0 = arith.cmpi eq, %arg1, %c0_i32 : i32
    %1 = arith.extui %0 : i1 to i32
    %c0_i32_0 = arith.constant 0 : i32
    %2 = arith.cmpi ne, %1, %c0_i32_0 : i32
    scf.if %2 {
      tpu.enqueue_dma source(%arg5 : memref<128x512xbf16, #tpu.memory_space<any>>) target(%arg9 : memref<128x512xbf16, #tpu.memory_space<vmem>>) target_semaphore(%arg10 : memref<!tpu.dma_semaphore, #tpu.memory_space<semaphore_mem>>)
      tpu.wait_dma2 semaphore(%arg10 : memref<!tpu.dma_semaphore, #tpu.memory_space<semaphore_mem>>) src(%arg5 : memref<128x512xbf16, #tpu.memory_space<any>>) dst(%arg9 : memref<128x512xbf16, #tpu.memory_space<vmem>>)
      %c0_82 = arith.constant 0 : index
      %c0_83 = arith.constant 0 : index
      %272 = vector.load %arg3[%c0_82, %c0_83] : memref<8x128xf32, #tpu.memory_space<vmem>>, vector<8x128xf32>
      %c0_84 = arith.constant 0 : index
      %c0_85 = arith.constant 0 : index
      %273 = vector.load %arg7[%c0_84, %c0_85] : memref<8x128xf32, #tpu.memory_space<vmem>>, vector<8x128xf32>
      tpu.vector_store %arg7[%c0_84, %c0_85], %272 {strides = array<i32>} : memref<8x128xf32, #tpu.memory_space<vmem>>, vector<8x128xf32>,
      %c0_86 = arith.constant 0 : index
      %c0_87 = arith.constant 0 : index
      %274 = vector.load %arg4[%c0_86, %c0_87] : memref<8x128xf32, #tpu.memory_space<vmem>>, vector<8x128xf32>
      %c0_88 = arith.constant 0 : index
      %c0_89 = arith.constant 0 : index
      %275 = vector.load %arg8[%c0_88, %c0_89] : memref<8x128xf32, #tpu.memory_space<vmem>>, vector<8x128xf32>
      tpu.vector_store %arg8[%c0_88, %c0_89], %274 {strides = array<i32>} : memref<8x128xf32, #tpu.memory_space<vmem>>, vector<8x128xf32>,
    } else {
    }
    %c0 = arith.constant 0 : index
    %c0_1 = arith.constant 0 : index
    %3 = vector.load %arg9[%c0, %c0_1] : memref<128x512xbf16, #tpu.memory_space<vmem>>, vector<128x512xbf16>
    %c0_2 = arith.constant 0 : index
    %c0_3 = arith.constant 0 : index
    %4 = vector.load %arg7[%c0_2, %c0_3] : memref<8x128xf32, #tpu.memory_space<vmem>>, vector<8x128xf32>
    %c0_4 = arith.constant 0 : index
    %c0_5 = arith.constant 0 : index
    %5 = vector.load %arg8[%c0_4, %c0_5] : memref<8x128xf32, #tpu.memory_space<vmem>>, vector<8x128xf32>
    %c0_6 = arith.constant 0 : index
    %c0_7 = arith.constant 0 : index
    %c0_8 = arith.constant 0 : index
    %6 = vector.load %arg2[%c0_6, %c0_7, %c0_8] : memref<8x8x512xf32, #tpu.memory_space<vmem>>, vector<1x8x512xf32>
    %7 = vector.shape_cast %6 : vector<1x8x512xf32> to vector<8x512xf32>
    %8 = arith.truncf %4 : vector<8x128xf32> to vector<8x128xbf16>
    %cst = arith.constant dense<0.000000e+00> : vector<8x512xf32>
    %9 = tpu.matmul %8, %3, %cst {dimension_numbers = #tpu.dot_dimension_numbers<[1], [0], [0], [1], [0, 0, 1, 1], [], []>} : vector<8x128xbf16>, vector<128x512xbf16>, vector<8x512xf32> -> vector<8x512xf32>
    %10 = arith.addf %7, %9 : vector<8x512xf32>
    %11 = vector.extract_strided_slice %10 {offsets = [0, 0], sizes = [8, 128], strides = [1, 1]} : vector<8x512xf32> to vector<8x128xf32>
    %12 = arith.negf %11 : vector<8x128xf32>
    %13 = math.exp %12 : vector<8x128xf32>
    %cst_9 = arith.constant 1.000000e+00 : f32
    %14 = vector.broadcast %cst_9 : f32 to vector<8x128xf32>
    %15 = arith.addf %14, %13 : vector<8x128xf32>
    %16 = arith.divf %14, %15 : vector<8x128xf32>
    %17 = vector.extract_strided_slice %10 {offsets = [0, 128], sizes = [8, 128], strides = [1, 1]} : vector<8x512xf32> to vector<8x128xf32>
    %18 = arith.negf %17 : vector<8x128xf32>
    %19 = math.exp %18 : vector<8x128xf32>
    %cst_10 = arith.constant 1.000000e+00 : f32
    %20 = vector.broadcast %cst_10 : f32 to vector<8x128xf32>
    %21 = arith.addf %20, %19 : vector<8x128xf32>
    %22 = arith.divf %20, %21 : vector<8x128xf32>
    %23 = vector.extract_strided_slice %10 {offsets = [0, 256], sizes = [8, 128], strides = [1, 1]} : vector<8x512xf32> to vector<8x128xf32>
    %24 = math.tanh %23 : vector<8x128xf32>
    %25 = vector.extract_strided_slice %10 {offsets = [0, 384], sizes = [8, 128], strides = [1, 1]} : vector<8x512xf32> to vector<8x128xf32>
    %26 = arith.negf %25 : vector<8x128xf32>
    %27 = math.exp %26 : vector<8x128xf32>
    %cst_11 = arith.constant 1.000000e+00 : f32
    %28 = vector.broadcast %cst_11 : f32 to vector<8x128xf32>
    %29 = arith.addf %28, %27 : vector<8x128xf32>
    %30 = arith.divf %28, %29 : vector<8x128xf32>
    %31 = arith.mulf %22, %5 : vector<8x128xf32>
    %32 = arith.mulf %16, %24 : vector<8x128xf32>
    %33 = arith.addf %31, %32 : vector<8x128xf32>
    %34 = math.tanh %33 : vector<8x128xf32>
    %35 = arith.mulf %30, %34 : vector<8x128xf32>
    %c0_12 = arith.constant 0 : index
    %c0_13 = arith.constant 0 : index
    %c0_14 = arith.constant 0 : index
    %36 = vector.load %arg6[%c0_12, %c0_13, %c0_14] : memref<8x8x128xf32, #tpu.memory_space<vmem>>, vector<1x8x128xf32>
    %37 = vector.shape_cast %36 : vector<1x8x128xf32> to vector<8x128xf32>
    %38 = vector.shape_cast %35 : vector<8x128xf32> to vector<1x8x128xf32>
    tpu.vector_store %arg6[%c0_12, %c0_13, %c0_14], %38 {strides = array<i32>} : memref<8x8x128xf32, #tpu.memory_space<vmem>>, vector<1x8x128xf32>,
    %c1 = arith.constant 1 : index
    %c0_15 = arith.constant 0 : index
    %c0_16 = arith.constant 0 : index
    %39 = vector.load %arg2[%c1, %c0_15, %c0_16] : memref<8x8x512xf32, #tpu.memory_space<vmem>>, vector<1x8x512xf32>
    %40 = vector.shape_cast %39 : vector<1x8x512xf32> to vector<8x512xf32>
    %41 = arith.truncf %35 : vector<8x128xf32> to vector<8x128xbf16>
    %cst_17 = arith.constant dense<0.000000e+00> : vector<8x512xf32>
    %42 = tpu.matmul %41, %3, %cst_17 {dimension_numbers = #tpu.dot_dimension_numbers<[1], [0], [0], [1], [0, 0, 1, 1], [], []>} : vector<8x128xbf16>, vector<128x512xbf16>, vector<8x512xf32> -> vector<8x512xf32>
    %43 = arith.addf %40, %42 : vector<8x512xf32>
    %44 = vector.extract_strided_slice %43 {offsets = [0, 0], sizes = [8, 128], strides = [1, 1]} : vector<8x512xf32> to vector<8x128xf32>
    %45 = arith.negf %44 : vector<8x128xf32>
    %46 = math.exp %45 : vector<8x128xf32>
    %cst_18 = arith.constant 1.000000e+00 : f32
    %47 = vector.broadcast %cst_18 : f32 to vector<8x128xf32>
    %48 = arith.addf %47, %46 : vector<8x128xf32>
    %49 = arith.divf %47, %48 : vector<8x128xf32>
    %50 = vector.extract_strided_slice %43 {offsets = [0, 128], sizes = [8, 128], strides = [1, 1]} : vector<8x512xf32> to vector<8x128xf32>
    %51 = arith.negf %50 : vector<8x128xf32>
    %52 = math.exp %51 : vector<8x128xf32>
    %cst_19 = arith.constant 1.000000e+00 : f32
    %53 = vector.broadcast %cst_19 : f32 to vector<8x128xf32>
    %54 = arith.addf %53, %52 : vector<8x128xf32>
    %55 = arith.divf %53, %54 : vector<8x128xf32>
    %56 = vector.extract_strided_slice %43 {offsets = [0, 256], sizes = [8, 128], strides = [1, 1]} : vector<8x512xf32> to vector<8x128xf32>
    %57 = math.tanh %56 : vector<8x128xf32>
    %58 = vector.extract_strided_slice %43 {offsets = [0, 384], sizes = [8, 128], strides = [1, 1]} : vector<8x512xf32> to vector<8x128xf32>
    %59 = arith.negf %58 : vector<8x128xf32>
    %60 = math.exp %59 : vector<8x128xf32>
    %cst_20 = arith.constant 1.000000e+00 : f32
    %61 = vector.broadcast %cst_20 : f32 to vector<8x128xf32>
    %62 = arith.addf %61, %60 : vector<8x128xf32>
    %63 = arith.divf %61, %62 : vector<8x128xf32>
    %64 = arith.mulf %55, %33 : vector<8x128xf32>
    %65 = arith.mulf %49, %57 : vector<8x128xf32>
    %66 = arith.addf %64, %65 : vector<8x128xf32>
    %67 = math.tanh %66 : vector<8x128xf32>
    %68 = arith.mulf %63, %67 : vector<8x128xf32>
    %c1_21 = arith.constant 1 : index
    %c0_22 = arith.constant 0 : index
    %c0_23 = arith.constant 0 : index
    %69 = vector.load %arg6[%c1_21, %c0_22, %c0_23] : memref<8x8x128xf32, #tpu.memory_space<vmem>>, vector<1x8x128xf32>
    %70 = vector.shape_cast %69 : vector<1x8x128xf32> to vector<8x128xf32>
    %71 = vector.shape_cast %68 : vector<8x128xf32> to vector<1x8x128xf32>
    tpu.vector_store %arg6[%c1_21, %c0_22, %c0_23], %71 {strides = array<i32>} : memref<8x8x128xf32, #tpu.memory_space<vmem>>, vector<1x8x128xf32>,
    %c2 = arith.constant 2 : index
    %c0_24 = arith.constant 0 : index
    %c0_25 = arith.constant 0 : index
    %72 = vector.load %arg2[%c2, %c0_24, %c0_25] : memref<8x8x512xf32, #tpu.memory_space<vmem>>, vector<1x8x512xf32>
    %73 = vector.shape_cast %72 : vector<1x8x512xf32> to vector<8x512xf32>
    %74 = arith.truncf %68 : vector<8x128xf32> to vector<8x128xbf16>
    %cst_26 = arith.constant dense<0.000000e+00> : vector<8x512xf32>
    %75 = tpu.matmul %74, %3, %cst_26 {dimension_numbers = #tpu.dot_dimension_numbers<[1], [0], [0], [1], [0, 0, 1, 1], [], []>} : vector<8x128xbf16>, vector<128x512xbf16>, vector<8x512xf32> -> vector<8x512xf32>
    %76 = arith.addf %73, %75 : vector<8x512xf32>
    %77 = vector.extract_strided_slice %76 {offsets = [0, 0], sizes = [8, 128], strides = [1, 1]} : vector<8x512xf32> to vector<8x128xf32>
    %78 = arith.negf %77 : vector<8x128xf32>
    %79 = math.exp %78 : vector<8x128xf32>
    %cst_27 = arith.constant 1.000000e+00 : f32
    %80 = vector.broadcast %cst_27 : f32 to vector<8x128xf32>
    %81 = arith.addf %80, %79 : vector<8x128xf32>
    %82 = arith.divf %80, %81 : vector<8x128xf32>
    %83 = vector.extract_strided_slice %76 {offsets = [0, 128], sizes = [8, 128], strides = [1, 1]} : vector<8x512xf32> to vector<8x128xf32>
    %84 = arith.negf %83 : vector<8x128xf32>
    %85 = math.exp %84 : vector<8x128xf32>
    %cst_28 = arith.constant 1.000000e+00 : f32
    %86 = vector.broadcast %cst_28 : f32 to vector<8x128xf32>
    %87 = arith.addf %86, %85 : vector<8x128xf32>
    %88 = arith.divf %86, %87 : vector<8x128xf32>
    %89 = vector.extract_strided_slice %76 {offsets = [0, 256], sizes = [8, 128], strides = [1, 1]} : vector<8x512xf32> to vector<8x128xf32>
    %90 = math.tanh %89 : vector<8x128xf32>
    %91 = vector.extract_strided_slice %76 {offsets = [0, 384], sizes = [8, 128], strides = [1, 1]} : vector<8x512xf32> to vector<8x128xf32>
    %92 = arith.negf %91 : vector<8x128xf32>
    %93 = math.exp %92 : vector<8x128xf32>
    %cst_29 = arith.constant 1.000000e+00 : f32
    %94 = vector.broadcast %cst_29 : f32 to vector<8x128xf32>
    %95 = arith.addf %94, %93 : vector<8x128xf32>
    %96 = arith.divf %94, %95 : vector<8x128xf32>
    %97 = arith.mulf %88, %66 : vector<8x128xf32>
    %98 = arith.mulf %82, %90 : vector<8x128xf32>
    %99 = arith.addf %97, %98 : vector<8x128xf32>
    %100 = math.tanh %99 : vector<8x128xf32>
    %101 = arith.mulf %96, %100 : vector<8x128xf32>
    %c2_30 = arith.constant 2 : index
    %c0_31 = arith.constant 0 : index
    %c0_32 = arith.constant 0 : index
    %102 = vector.load %arg6[%c2_30, %c0_31, %c0_32] : memref<8x8x128xf32, #tpu.memory_space<vmem>>, vector<1x8x128xf32>
    %103 = vector.shape_cast %102 : vector<1x8x128xf32> to vector<8x128xf32>
    %104 = vector.shape_cast %101 : vector<8x128xf32> to vector<1x8x128xf32>
    tpu.vector_store %arg6[%c2_30, %c0_31, %c0_32], %104 {strides = array<i32>} : memref<8x8x128xf32, #tpu.memory_space<vmem>>, vector<1x8x128xf32>,
    %c3 = arith.constant 3 : index
    %c0_33 = arith.constant 0 : index
    %c0_34 = arith.constant 0 : index
    %105 = vector.load %arg2[%c3, %c0_33, %c0_34] : memref<8x8x512xf32, #tpu.memory_space<vmem>>, vector<1x8x512xf32>
    %106 = vector.shape_cast %105 : vector<1x8x512xf32> to vector<8x512xf32>
    %107 = arith.truncf %101 : vector<8x128xf32> to vector<8x128xbf16>
    %cst_35 = arith.constant dense<0.000000e+00> : vector<8x512xf32>
    %108 = tpu.matmul %107, %3, %cst_35 {dimension_numbers = #tpu.dot_dimension_numbers<[1], [0], [0], [1], [0, 0, 1, 1], [], []>} : vector<8x128xbf16>, vector<128x512xbf16>, vector<8x512xf32> -> vector<8x512xf32>
    %109 = arith.addf %106, %108 : vector<8x512xf32>
    %110 = vector.extract_strided_slice %109 {offsets = [0, 0], sizes = [8, 128], strides = [1, 1]} : vector<8x512xf32> to vector<8x128xf32>
    %111 = arith.negf %110 : vector<8x128xf32>
    %112 = math.exp %111 : vector<8x128xf32>
    %cst_36 = arith.constant 1.000000e+00 : f32
    %113 = vector.broadcast %cst_36 : f32 to vector<8x128xf32>
    %114 = arith.addf %113, %112 : vector<8x128xf32>
    %115 = arith.divf %113, %114 : vector<8x128xf32>
    %116 = vector.extract_strided_slice %109 {offsets = [0, 128], sizes = [8, 128], strides = [1, 1]} : vector<8x512xf32> to vector<8x128xf32>
    %117 = arith.negf %116 : vector<8x128xf32>
    %118 = math.exp %117 : vector<8x128xf32>
    %cst_37 = arith.constant 1.000000e+00 : f32
    %119 = vector.broadcast %cst_37 : f32 to vector<8x128xf32>
    %120 = arith.addf %119, %118 : vector<8x128xf32>
    %121 = arith.divf %119, %120 : vector<8x128xf32>
    %122 = vector.extract_strided_slice %109 {offsets = [0, 256], sizes = [8, 128], strides = [1, 1]} : vector<8x512xf32> to vector<8x128xf32>
    %123 = math.tanh %122 : vector<8x128xf32>
    %124 = vector.extract_strided_slice %109 {offsets = [0, 384], sizes = [8, 128], strides = [1, 1]} : vector<8x512xf32> to vector<8x128xf32>
    %125 = arith.negf %124 : vector<8x128xf32>
    %126 = math.exp %125 : vector<8x128xf32>
    %cst_38 = arith.constant 1.000000e+00 : f32
    %127 = vector.broadcast %cst_38 : f32 to vector<8x128xf32>
    %128 = arith.addf %127, %126 : vector<8x128xf32>
    %129 = arith.divf %127, %128 : vector<8x128xf32>
    %130 = arith.mulf %121, %99 : vector<8x128xf32>
    %131 = arith.mulf %115, %123 : vector<8x128xf32>
    %132 = arith.addf %130, %131 : vector<8x128xf32>
    %133 = math.tanh %132 : vector<8x128xf32>
    %134 = arith.mulf %129, %133 : vector<8x128xf32>
    %c3_39 = arith.constant 3 : index
    %c0_40 = arith.constant 0 : index
    %c0_41 = arith.constant 0 : index
    %135 = vector.load %arg6[%c3_39, %c0_40, %c0_41] : memref<8x8x128xf32, #tpu.memory_space<vmem>>, vector<1x8x128xf32>
    %136 = vector.shape_cast %135 : vector<1x8x128xf32> to vector<8x128xf32>
    %137 = vector.shape_cast %134 : vector<8x128xf32> to vector<1x8x128xf32>
    tpu.vector_store %arg6[%c3_39, %c0_40, %c0_41], %137 {strides = array<i32>} : memref<8x8x128xf32, #tpu.memory_space<vmem>>, vector<1x8x128xf32>,
    %c4 = arith.constant 4 : index
    %c0_42 = arith.constant 0 : index
    %c0_43 = arith.constant 0 : index
    %138 = vector.load %arg2[%c4, %c0_42, %c0_43] : memref<8x8x512xf32, #tpu.memory_space<vmem>>, vector<1x8x512xf32>
    %139 = vector.shape_cast %138 : vector<1x8x512xf32> to vector<8x512xf32>
    %140 = arith.truncf %134 : vector<8x128xf32> to vector<8x128xbf16>
    %cst_44 = arith.constant dense<0.000000e+00> : vector<8x512xf32>
    %141 = tpu.matmul %140, %3, %cst_44 {dimension_numbers = #tpu.dot_dimension_numbers<[1], [0], [0], [1], [0, 0, 1, 1], [], []>} : vector<8x128xbf16>, vector<128x512xbf16>, vector<8x512xf32> -> vector<8x512xf32>
    %142 = arith.addf %139, %141 : vector<8x512xf32>
    %143 = vector.extract_strided_slice %142 {offsets = [0, 0], sizes = [8, 128], strides = [1, 1]} : vector<8x512xf32> to vector<8x128xf32>
    %144 = arith.negf %143 : vector<8x128xf32>
    %145 = math.exp %144 : vector<8x128xf32>
    %cst_45 = arith.constant 1.000000e+00 : f32
    %146 = vector.broadcast %cst_45 : f32 to vector<8x128xf32>
    %147 = arith.addf %146, %145 : vector<8x128xf32>
    %148 = arith.divf %146, %147 : vector<8x128xf32>
    %149 = vector.extract_strided_slice %142 {offsets = [0, 128], sizes = [8, 128], strides = [1, 1]} : vector<8x512xf32> to vector<8x128xf32>
    %150 = arith.negf %149 : vector<8x128xf32>
    %151 = math.exp %150 : vector<8x128xf32>
    %cst_46 = arith.constant 1.000000e+00 : f32
    %152 = vector.broadcast %cst_46 : f32 to vector<8x128xf32>
    %153 = arith.addf %152, %151 : vector<8x128xf32>
    %154 = arith.divf %152, %153 : vector<8x128xf32>
    %155 = vector.extract_strided_slice %142 {offsets = [0, 256], sizes = [8, 128], strides = [1, 1]} : vector<8x512xf32> to vector<8x128xf32>
    %156 = math.tanh %155 : vector<8x128xf32>
    %157 = vector.extract_strided_slice %142 {offsets = [0, 384], sizes = [8, 128], strides = [1, 1]} : vector<8x512xf32> to vector<8x128xf32>
    %158 = arith.negf %157 : vector<8x128xf32>
    %159 = math.exp %158 : vector<8x128xf32>
    %cst_47 = arith.constant 1.000000e+00 : f32
    %160 = vector.broadcast %cst_47 : f32 to vector<8x128xf32>
    %161 = arith.addf %160, %159 : vector<8x128xf32>
    %162 = arith.divf %160, %161 : vector<8x128xf32>
    %163 = arith.mulf %154, %132 : vector<8x128xf32>
    %164 = arith.mulf %148, %156 : vector<8x128xf32>
    %165 = arith.addf %163, %164 : vector<8x128xf32>
    %166 = math.tanh %165 : vector<8x128xf32>
    %167 = arith.mulf %162, %166 : vector<8x128xf32>
    %c4_48 = arith.constant 4 : index
    %c0_49 = arith.constant 0 : index
    %c0_50 = arith.constant 0 : index
    %168 = vector.load %arg6[%c4_48, %c0_49, %c0_50] : memref<8x8x128xf32, #tpu.memory_space<vmem>>, vector<1x8x128xf32>
    %169 = vector.shape_cast %168 : vector<1x8x128xf32> to vector<8x128xf32>
    %170 = vector.shape_cast %167 : vector<8x128xf32> to vector<1x8x128xf32>
    tpu.vector_store %arg6[%c4_48, %c0_49, %c0_50], %170 {strides = array<i32>} : memref<8x8x128xf32, #tpu.memory_space<vmem>>, vector<1x8x128xf32>,
    %c5 = arith.constant 5 : index
    %c0_51 = arith.constant 0 : index
    %c0_52 = arith.constant 0 : index
    %171 = vector.load %arg2[%c5, %c0_51, %c0_52] : memref<8x8x512xf32, #tpu.memory_space<vmem>>, vector<1x8x512xf32>
    %172 = vector.shape_cast %171 : vector<1x8x512xf32> to vector<8x512xf32>
    %173 = arith.truncf %167 : vector<8x128xf32> to vector<8x128xbf16>
    %cst_53 = arith.constant dense<0.000000e+00> : vector<8x512xf32>
    %174 = tpu.matmul %173, %3, %cst_53 {dimension_numbers = #tpu.dot_dimension_numbers<[1], [0], [0], [1], [0, 0, 1, 1], [], []>} : vector<8x128xbf16>, vector<128x512xbf16>, vector<8x512xf32> -> vector<8x512xf32>
    %175 = arith.addf %172, %174 : vector<8x512xf32>
    %176 = vector.extract_strided_slice %175 {offsets = [0, 0], sizes = [8, 128], strides = [1, 1]} : vector<8x512xf32> to vector<8x128xf32>
    %177 = arith.negf %176 : vector<8x128xf32>
    %178 = math.exp %177 : vector<8x128xf32>
    %cst_54 = arith.constant 1.000000e+00 : f32
    %179 = vector.broadcast %cst_54 : f32 to vector<8x128xf32>
    %180 = arith.addf %179, %178 : vector<8x128xf32>
    %181 = arith.divf %179, %180 : vector<8x128xf32>
    %182 = vector.extract_strided_slice %175 {offsets = [0, 128], sizes = [8, 128], strides = [1, 1]} : vector<8x512xf32> to vector<8x128xf32>
    %183 = arith.negf %182 : vector<8x128xf32>
    %184 = math.exp %183 : vector<8x128xf32>
    %cst_55 = arith.constant 1.000000e+00 : f32
    %185 = vector.broadcast %cst_55 : f32 to vector<8x128xf32>
    %186 = arith.addf %185, %184 : vector<8x128xf32>
    %187 = arith.divf %185, %186 : vector<8x128xf32>
    %188 = vector.extract_strided_slice %175 {offsets = [0, 256], sizes = [8, 128], strides = [1, 1]} : vector<8x512xf32> to vector<8x128xf32>
    %189 = math.tanh %188 : vector<8x128xf32>
    %190 = vector.extract_strided_slice %175 {offsets = [0, 384], sizes = [8, 128], strides = [1, 1]} : vector<8x512xf32> to vector<8x128xf32>
    %191 = arith.negf %190 : vector<8x128xf32>
    %192 = math.exp %191 : vector<8x128xf32>
    %cst_56 = arith.constant 1.000000e+00 : f32
    %193 = vector.broadcast %cst_56 : f32 to vector<8x128xf32>
    %194 = arith.addf %193, %192 : vector<8x128xf32>
    %195 = arith.divf %193, %194 : vector<8x128xf32>
    %196 = arith.mulf %187, %165 : vector<8x128xf32>
    %197 = arith.mulf %181, %189 : vector<8x128xf32>
    %198 = arith.addf %196, %197 : vector<8x128xf32>
    %199 = math.tanh %198 : vector<8x128xf32>
    %200 = arith.mulf %195, %199 : vector<8x128xf32>
    %c5_57 = arith.constant 5 : index
    %c0_58 = arith.constant 0 : index
    %c0_59 = arith.constant 0 : index
    %201 = vector.load %arg6[%c5_57, %c0_58, %c0_59] : memref<8x8x128xf32, #tpu.memory_space<vmem>>, vector<1x8x128xf32>
    %202 = vector.shape_cast %201 : vector<1x8x128xf32> to vector<8x128xf32>
    %203 = vector.shape_cast %200 : vector<8x128xf32> to vector<1x8x128xf32>
    tpu.vector_store %arg6[%c5_57, %c0_58, %c0_59], %203 {strides = array<i32>} : memref<8x8x128xf32, #tpu.memory_space<vmem>>, vector<1x8x128xf32>,
    %c6 = arith.constant 6 : index
    %c0_60 = arith.constant 0 : index
    %c0_61 = arith.constant 0 : index
    %204 = vector.load %arg2[%c6, %c0_60, %c0_61] : memref<8x8x512xf32, #tpu.memory_space<vmem>>, vector<1x8x512xf32>
    %205 = vector.shape_cast %204 : vector<1x8x512xf32> to vector<8x512xf32>
    %206 = arith.truncf %200 : vector<8x128xf32> to vector<8x128xbf16>
    %cst_62 = arith.constant dense<0.000000e+00> : vector<8x512xf32>
    %207 = tpu.matmul %206, %3, %cst_62 {dimension_numbers = #tpu.dot_dimension_numbers<[1], [0], [0], [1], [0, 0, 1, 1], [], []>} : vector<8x128xbf16>, vector<128x512xbf16>, vector<8x512xf32> -> vector<8x512xf32>
    %208 = arith.addf %205, %207 : vector<8x512xf32>
    %209 = vector.extract_strided_slice %208 {offsets = [0, 0], sizes = [8, 128], strides = [1, 1]} : vector<8x512xf32> to vector<8x128xf32>
    %210 = arith.negf %209 : vector<8x128xf32>
    %211 = math.exp %210 : vector<8x128xf32>
    %cst_63 = arith.constant 1.000000e+00 : f32
    %212 = vector.broadcast %cst_63 : f32 to vector<8x128xf32>
    %213 = arith.addf %212, %211 : vector<8x128xf32>
    %214 = arith.divf %212, %213 : vector<8x128xf32>
    %215 = vector.extract_strided_slice %208 {offsets = [0, 128], sizes = [8, 128], strides = [1, 1]} : vector<8x512xf32> to vector<8x128xf32>
    %216 = arith.negf %215 : vector<8x128xf32>
    %217 = math.exp %216 : vector<8x128xf32>
    %cst_64 = arith.constant 1.000000e+00 : f32
    %218 = vector.broadcast %cst_64 : f32 to vector<8x128xf32>
    %219 = arith.addf %218, %217 : vector<8x128xf32>
    %220 = arith.divf %218, %219 : vector<8x128xf32>
    %221 = vector.extract_strided_slice %208 {offsets = [0, 256], sizes = [8, 128], strides = [1, 1]} : vector<8x512xf32> to vector<8x128xf32>
    %222 = math.tanh %221 : vector<8x128xf32>
    %223 = vector.extract_strided_slice %208 {offsets = [0, 384], sizes = [8, 128], strides = [1, 1]} : vector<8x512xf32> to vector<8x128xf32>
    %224 = arith.negf %223 : vector<8x128xf32>
    %225 = math.exp %224 : vector<8x128xf32>
    %cst_65 = arith.constant 1.000000e+00 : f32
    %226 = vector.broadcast %cst_65 : f32 to vector<8x128xf32>
    %227 = arith.addf %226, %225 : vector<8x128xf32>
    %228 = arith.divf %226, %227 : vector<8x128xf32>
    %229 = arith.mulf %220, %198 : vector<8x128xf32>
    %230 = arith.mulf %214, %222 : vector<8x128xf32>
    %231 = arith.addf %229, %230 : vector<8x128xf32>
    %232 = math.tanh %231 : vector<8x128xf32>
    %233 = arith.mulf %228, %232 : vector<8x128xf32>
    %c6_66 = arith.constant 6 : index
    %c0_67 = arith.constant 0 : index
    %c0_68 = arith.constant 0 : index
    %234 = vector.load %arg6[%c6_66, %c0_67, %c0_68] : memref<8x8x128xf32, #tpu.memory_space<vmem>>, vector<1x8x128xf32>
    %235 = vector.shape_cast %234 : vector<1x8x128xf32> to vector<8x128xf32>
    %236 = vector.shape_cast %233 : vector<8x128xf32> to vector<1x8x128xf32>
    tpu.vector_store %arg6[%c6_66, %c0_67, %c0_68], %236 {strides = array<i32>} : memref<8x8x128xf32, #tpu.memory_space<vmem>>, vector<1x8x128xf32>,
    %c7 = arith.constant 7 : index
    %c0_69 = arith.constant 0 : index
    %c0_70 = arith.constant 0 : index
    %237 = vector.load %arg2[%c7, %c0_69, %c0_70] : memref<8x8x512xf32, #tpu.memory_space<vmem>>, vector<1x8x512xf32>
    %238 = vector.shape_cast %237 : vector<1x8x512xf32> to vector<8x512xf32>
    %239 = arith.truncf %233 : vector<8x128xf32> to vector<8x128xbf16>
    %cst_71 = arith.constant dense<0.000000e+00> : vector<8x512xf32>
    %240 = tpu.matmul %239, %3, %cst_71 {dimension_numbers = #tpu.dot_dimension_numbers<[1], [0], [0], [1], [0, 0, 1, 1], [], []>} : vector<8x128xbf16>, vector<128x512xbf16>, vector<8x512xf32> -> vector<8x512xf32>
    %241 = arith.addf %238, %240 : vector<8x512xf32>
    %242 = vector.extract_strided_slice %241 {offsets = [0, 0], sizes = [8, 128], strides = [1, 1]} : vector<8x512xf32> to vector<8x128xf32>
    %243 = arith.negf %242 : vector<8x128xf32>
    %244 = math.exp %243 : vector<8x128xf32>
    %cst_72 = arith.constant 1.000000e+00 : f32
    %245 = vector.broadcast %cst_72 : f32 to vector<8x128xf32>
    %246 = arith.addf %245, %244 : vector<8x128xf32>
    %247 = arith.divf %245, %246 : vector<8x128xf32>
    %248 = vector.extract_strided_slice %241 {offsets = [0, 128], sizes = [8, 128], strides = [1, 1]} : vector<8x512xf32> to vector<8x128xf32>
    %249 = arith.negf %248 : vector<8x128xf32>
    %250 = math.exp %249 : vector<8x128xf32>
    %cst_73 = arith.constant 1.000000e+00 : f32
    %251 = vector.broadcast %cst_73 : f32 to vector<8x128xf32>
    %252 = arith.addf %251, %250 : vector<8x128xf32>
    %253 = arith.divf %251, %252 : vector<8x128xf32>
    %254 = vector.extract_strided_slice %241 {offsets = [0, 256], sizes = [8, 128], strides = [1, 1]} : vector<8x512xf32> to vector<8x128xf32>
    %255 = math.tanh %254 : vector<8x128xf32>
    %256 = vector.extract_strided_slice %241 {offsets = [0, 384], sizes = [8, 128], strides = [1, 1]} : vector<8x512xf32> to vector<8x128xf32>
    %257 = arith.negf %256 : vector<8x128xf32>
    %258 = math.exp %257 : vector<8x128xf32>
    %cst_74 = arith.constant 1.000000e+00 : f32
    %259 = vector.broadcast %cst_74 : f32 to vector<8x128xf32>
    %260 = arith.addf %259, %258 : vector<8x128xf32>
    %261 = arith.divf %259, %260 : vector<8x128xf32>
    %262 = arith.mulf %253, %231 : vector<8x128xf32>
    %263 = arith.mulf %247, %255 : vector<8x128xf32>
    %264 = arith.addf %262, %263 : vector<8x128xf32>
    %265 = math.tanh %264 : vector<8x128xf32>
    %266 = arith.mulf %261, %265 : vector<8x128xf32>
    %c7_75 = arith.constant 7 : index
    %c0_76 = arith.constant 0 : index
    %c0_77 = arith.constant 0 : index
    %267 = vector.load %arg6[%c7_75, %c0_76, %c0_77] : memref<8x8x128xf32, #tpu.memory_space<vmem>>, vector<1x8x128xf32>
    %268 = vector.shape_cast %267 : vector<1x8x128xf32> to vector<8x128xf32>
    %269 = vector.shape_cast %266 : vector<8x128xf32> to vector<1x8x128xf32>
    tpu.vector_store %arg6[%c7_75, %c0_76, %c0_77], %269 {strides = array<i32>} : memref<8x8x128xf32, #tpu.memory_space<vmem>>, vector<1x8x128xf32>,
    %c0_78 = arith.constant 0 : index
    %c0_79 = arith.constant 0 : index
    %270 = vector.load %arg7[%c0_78, %c0_79] : memref<8x128xf32, #tpu.memory_space<vmem>>, vector<8x128xf32>
    tpu.vector_store %arg7[%c0_78, %c0_79], %266 {strides = array<i32>} : memref<8x128xf32, #tpu.memory_space<vmem>>, vector<8x128xf32>,
    %c0_80 = arith.constant 0 : index
    %c0_81 = arith.constant 0 : index
    %271 = vector.load %arg8[%c0_80, %c0_81] : memref<8x128xf32, #tpu.memory_space<vmem>>, vector<8x128xf32>
    tpu.vector_store %arg8[%c0_80, %c0_81], %264 {strides = array<i32>} : memref<8x128xf32, #tpu.memory_space<vmem>>, vector<8x128xf32>,
    return
  }
  func.func @transform_0(%arg0: i32, %arg1: i32) -> (i32, i32, i32) {
    %c0_i32 = arith.constant 0 : i32
    %c0_i32_0 = arith.constant 0 : i32
    return %arg1, %arg0, %c0_i32 : i32, i32, i32
  }
  func.func @transform_1(%arg0: i32, %arg1: i32) -> (i32, i32) {
    %c0_i32 = arith.constant 0 : i32
    %c0_i32_0 = arith.constant 0 : i32
    return %arg0, %c0_i32 : i32, i32
  }
  func.func @transform_2(%arg0: i32, %arg1: i32) -> (i32, i32) {
    %c0_i32 = arith.constant 0 : i32
    %c0_i32_0 = arith.constant 0 : i32
    return %arg0, %c0_i32 : i32, i32
  }
  func.func @transform_4(%arg0: i32, %arg1: i32) -> (i32, i32, i32) {
    %c0_i32 = arith.constant 0 : i32
    %c0_i32_0 = arith.constant 0 : i32
    return %arg1, %arg0, %c0_i32 : i32, i32, i32
  }
  func.func @transform_5(%arg0: i32, %arg1: i32) -> (i32, i32) {
    %c0_i32 = arith.constant 0 : i32
    %c0_i32_0 = arith.constant 0 : i32
    return %arg0, %c0_i32 : i32, i32
  }
  func.func @transform_6(%arg0: i32, %arg1: i32) -> (i32, i32) {
    %c0_i32 = arith.constant 0 : i32
    %c0_i32_0 = arith.constant 0 : i32
    return %arg0, %c0_i32 : i32, i32
  }
}

</mosaic_0001>

<llo_original>
// kernel: _forward_impl.7
$region0: #{_forward_impl.7}
  #allocation0 [shape = 'u32[]', space=smem, size = 0x4, offset = 0x4, fixed_abs, tag = 'smem constant byte address 0x4 - core index']
  #allocation1 [shape = 'u32[144,128]{1,0:T(1,128)}', space=vmem, size = 0x12000, scoped, tag = 'internal scratch']
  %s0 = inlined_call_operand.hbm [shape: f32[64,128], index: 0, kind: input, shape index: {}]
  %s1 = inlined_call_operand.hbm [shape: bf16[128,512], index: 1, kind: input, shape index: {}]
  %s2 = inlined_call_operand.hbm [shape: f32[1,512], index: 2, kind: input, shape index: {}]
  %s3 = inlined_call_operand.hbm [shape: f32[64,512], index: 3, kind: output, shape index: {}]
  %s4 = sld [smem:[#allocation0]]
  $region34: #{_forward_impl.7} parent=0
    _
  %s6 = ssub.s32 1, %s4
  %s7 = scalar_select 0, %s6, %s4
  $region1: #{_forward_impl.7} parent=0
    #allocation2 [shape = 'u8[32768]{0}', space=vmem, size = 0x8000, scoped, tag = 'input window, operand 0, single buffered']
    #allocation3 [shape = 's32[1]{0}', space=sflag, size = 0x4, scoped, tag = 'scoped memory for _forward_impl.7']
    #allocation4 [shape = 's32[1]{0}', space=sflag, size = 0x4, scoped, tag = 'scoped memory for _forward_impl.7']
    #allocation5 [shape = 'u8[131072]{0}', space=vmem, size = 0x20000, scoped, tag = 'input window, operand 1, single buffered']
    #allocation6 [shape = 's32[1]{0}', space=sflag, size = 0x4, scoped, tag = 'scoped memory for _forward_impl.7']
    #allocation7 [shape = 'u8[2048]{0}', space=vmem, size = 0x800, scoped, tag = 'input window, operand 2, single buffered']
    #allocation8 [shape = 'u8[131072]{0}', space=vmem, size = 0x20000, scoped, tag = 'output window, operand 0, single buffered']
    %8 = vsyncpa [#allocation3], 0
    %9 = vsyncpa [#allocation6], 0
    %10 = vsyncpa [#allocation4], 0
    // Predicated region
    $region2: #{_forward_impl.7} parent=1 // pred_check
      _
    $region3: #{_forward_impl.7} parent=1 // pred_check_branch
      %12 = sbr.rel (0) target = $region5
    $region4: #{_forward_impl.7} parent=1 // pred_region
      %s14 = ssub.s32 1024, 1024
      %15 = vsyncadd [#allocation3], %s14
      %s16 = sshll.u32 [#allocation2], 4
      %s17 = int_to_ptr.vmem [resolvable:$true] %s16
      %22 = dma.hbm_to_vmem [thread:$0]  %s0, 1024, %s17, [#allocation3], 128, 128, 8
    $region5: #{_forward_impl.7} parent=1 // pred_fallthru
      _
    // Predicated region
    $region6: #{_forward_impl.7} parent=1 // pred_check
      _
    $region7: #{_forward_impl.7} parent=1 // pred_check_branch
      %24 = sbr.rel (0) target = $region9
    $region8: #{_forward_impl.7} parent=1 // pred_region
      %s26 = ssub.s32 4096, 4096
      %27 = vsyncadd [#allocation6], %s26
      %s28 = sshll.u32 [#allocation5], 4
      %s29 = int_to_ptr.vmem [resolvable:$true] %s28
      %34 = dma.hbm_to_vmem [thread:$0]  %s1, 4096, %s29, [#allocation6], 256, 256, 16
    $region9: #{_forward_impl.7} parent=1 // pred_fallthru
      _
    // Predicated region
    $region10: #{_forward_impl.7} parent=1 // pred_check
      _
    $region11: #{_forward_impl.7} parent=1 // pred_check_branch
      %36 = sbr.rel (0) target = $region13
    $region12: #{_forward_impl.7} parent=1 // pred_region
      %s38 = ssub.s32 64, 64
      %39 = vsyncadd [#allocation6], %s38
      %s41 = sshll.u32 [#allocation7], 4
      %s42 = int_to_ptr.vmem [resolvable:$true] %s41
      %44 = dma.hbm_to_vmem [thread:$0]  %s2, 64, %s42, [#allocation6]
    $region13: #{_forward_impl.7} parent=1 // pred_fallthru
      _
    // Predicated region
    $region14: #{_forward_impl.7} parent=1 // pred_check
      _
    $region15: #{_forward_impl.7} parent=1 // pred_check_branch
      %46 = sbr.rel (0) target = $region17
    $region16: #{_forward_impl.7} parent=1 // pred_region
      %47 = dma.done [#allocation3], 1024
    $region17: #{_forward_impl.7} parent=1 // pred_fallthru
      _
    // Predicated region
    $region18: #{_forward_impl.7} parent=1 // pred_check
      _
    $region19: #{_forward_impl.7} parent=1 // pred_check_branch
      %49 = sbr.rel (0) target = $region21
    $region20: #{_forward_impl.7} parent=1 // pred_region
      %50 = dma.done [#allocation6], 4096
    $region21: #{_forward_impl.7} parent=1 // pred_fallthru
      _
    // Predicated region
    $region22: #{_forward_impl.7} parent=1 // pred_check
      _
    $region23: #{_forward_impl.7} parent=1 // pred_check_branch
      %52 = sbr.rel (0) target = $region25
    $region24: #{_forward_impl.7} parent=1 // pred_region
      %53 = dma.done [#allocation6], 64
    $region25: #{_forward_impl.7} parent=1 // pred_fallthru
      _
    %v55 = vld [vmem:[#allocation2] sm:$0xff]
    %v56 = vld [vmem:[#allocation2 + $0x8] sm:$0xff]
    %v57 = vld [vmem:[#allocation2 + $0x10] sm:$0xff]
    %v58 = vld [vmem:[#allocation2 + $0x18] sm:$0xff]
    %v59 = vld [vmem:[#allocation2 + $0x20] sm:$0xff]
    %v60 = vld [vmem:[#allocation2 + $0x28] sm:$0xff]
    %v61 = vld [vmem:[#allocation2 + $0x30] sm:$0xff]
    %v62 = vld [vmem:[#allocation2 + $0x38] sm:$0xff]
    %v63 = vpack.c.bf16 %v56, %v55
    %v64 = vpack.c.bf16 %v58, %v57
    %v65 = vpack.c.bf16 %v60, %v59
    %v66 = vpack.c.bf16 %v62, %v61
    %v67 = vld [vmem:[#allocation5] sm:$0xff]
    %v68 = vld [vmem:[#allocation5 + $0x8] sm:$0xff]
    %v69 = vld [vmem:[#allocation5 + $0x10] sm:$0xff]
    %v70 = vld [vmem:[#allocation5 + $0x18] sm:$0xff]
    %v71 = vld [vmem:[#allocation5 + $0x20] sm:$0xff]
    %v72 = vld [vmem:[#allocation5 + $0x28] sm:$0xff]
    %v73 = vld [vmem:[#allocation5 + $0x30] sm:$0xff]
    %v74 = vld [vmem:[#allocation5 + $0x38] sm:$0xff]
    %v75 = vld [vmem:[#allocation5 + $0x40] sm:$0xff]
    %v76 = vld [vmem:[#allocation5 + $0x48] sm:$0xff]
    %v77 = vld [vmem:[#allocation5 + $0x50] sm:$0xff]
    %v78 = vld [vmem:[#allocation5 + $0x58] sm:$0xff]
    %v79 = vld [vmem:[#allocation5 + $0x60] sm:$0xff]
    %v80 = vld [vmem:[#allocation5 + $0x68] sm:$0xff]
    %v81 = vld [vmem:[#allocation5 + $0x70] sm:$0xff]
    %v82 = vld [vmem:[#allocation5 + $0x78] sm:$0xff]
    %v83 = vld [vmem:[#allocation5 + $0x80] sm:$0xff]
    %v84 = vld [vmem:[#allocation5 + $0x88] sm:$0xff]
    %v85 = vld [vmem:[#allocation5 + $0x90] sm:$0xff]
    %v86 = vld [vmem:[#allocation5 + $0x98] sm:$0xff]
    %v87 = vld [vmem:[#allocation5 + $0xa0] sm:$0xff]
    %v88 = vld [vmem:[#allocation5 + $0xa8] sm:$0xff]
    %v89 = vld [vmem:[#allocation5 + $0xb0] sm:$0xff]
    %v90 = vld [vmem:[#allocation5 + $0xb8] sm:$0xff]
    %v91 = vld [vmem:[#allocation5 + $0xc0] sm:$0xff]
    %v92 = vld [vmem:[#allocation5 + $0xc8] sm:$0xff]
    %v93 = vld [vmem:[#allocation5 + $0xd0] sm:$0xff]
    %v94 = vld [vmem:[#allocation5 + $0xd8] sm:$0xff]
    %v95 = vld [vmem:[#allocation5 + $0xe0] sm:$0xff]
    %v96 = vld [vmem:[#allocation5 + $0xe8] sm:$0xff]
    %v97 = vld [vmem:[#allocation5 + $0xf0] sm:$0xff]
    %v98 = vld [vmem:[#allocation5 + $0xf8] sm:$0xff]
    %v99 = vld [vmem:[#allocation7] sm:$0xf]
    %v101 = vlaneseq
    %v102 = vshrl.u32 %v101, 7
    %v103 = vsub.s32 0, %v102
    %v104 = vrot.slane %v99, %v103
    %v105 = vlaneseq
    %v106 = vshrl.u32 %v105, 7
    %v107 = vsub.s32 1, %v106
    %v108 = vrot.slane %v99, %v107
    %v109 = vlaneseq
    %v110 = vshrl.u32 %v109, 7
    %v111 = vsub.s32 2, %v110
    %v112 = vrot.slane %v99, %v111
    %v113 = vlaneseq
    %v114 = vshrl.u32 %v113, 7
    %v115 = vsub.s32 3, %v114
    %v116 = vrot.slane %v99, %v115
    %v153 = vunpack.c.l.b16 %v67
    %v154 = vunpack.c.h.b16 %v67
    %v155 = vunpack.c.l.b16 %v68
    %v156 = vunpack.c.h.b16 %v68
    %v157 = vunpack.c.l.b16 %v69
    %v158 = vunpack.c.h.b16 %v69
    %v159 = vunpack.c.l.b16 %v70
    %v160 = vunpack.c.h.b16 %v70
    %v161 = vunpack.c.l.b16 %v71
    %v162 = vunpack.c.h.b16 %v71
    %v163 = vunpack.c.l.b16 %v72
    %v164 = vunpack.c.h.b16 %v72
    %v165 = vunpack.c.l.b16 %v73
    %v166 = vunpack.c.h.b16 %v73
    %v167 = vunpack.c.l.b16 %v74
    %v168 = vunpack.c.h.b16 %v74
    %v169 = vunpack.c.l.b16 %v75
    %v170 = vunpack.c.h.b16 %v75
    %v171 = vunpack.c.l.b16 %v76
    %v172 = vunpack.c.h.b16 %v76
    %v173 = vunpack.c.l.b16 %v77
    %v174 = vunpack.c.h.b16 %v77
    %v175 = vunpack.c.l.b16 %v78
    %v176 = vunpack.c.h.b16 %v78
    %v177 = vunpack.c.l.b16 %v79
    %v178 = vunpack.c.h.b16 %v79
    %v179 = vunpack.c.l.b16 %v80
    %v180 = vunpack.c.h.b16 %v80
    %v181 = vunpack.c.l.b16 %v81
    %v182 = vunpack.c.h.b16 %v81
    %v183 = vunpack.c.l.b16 %v82
    %v184 = vunpack.c.h.b16 %v82
    %v185 = vunpack.c.l.b16 %v83
    %v186 = vunpack.c.h.b16 %v83
    %v187 = vunpack.c.l.b16 %v84
    %v188 = vunpack.c.h.b16 %v84
    %v189 = vunpack.c.l.b16 %v85
    %v190 = vunpack.c.h.b16 %v85
    %v191 = vunpack.c.l.b16 %v86
    %v192 = vunpack.c.h.b16 %v86
    %v193 = vunpack.c.l.b16 %v87
    %v194 = vunpack.c.h.b16 %v87
    %v195 = vunpack.c.l.b16 %v88
    %v196 = vunpack.c.h.b16 %v88
    %v197 = vunpack.c.l.b16 %v89
    %v198 = vunpack.c.h.b16 %v89
    %v199 = vunpack.c.l.b16 %v90
    %v200 = vunpack.c.h.b16 %v90
    %v201 = vunpack.c.l.b16 %v91
    %v202 = vunpack.c.h.b16 %v91
    %v203 = vunpack.c.l.b16 %v92
    %v204 = vunpack.c.h.b16 %v92
    %v205 = vunpack.c.l.b16 %v93
    %v206 = vunpack.c.h.b16 %v93
    %v207 = vunpack.c.l.b16 %v94
    %v208 = vunpack.c.h.b16 %v94
    %v209 = vunpack.c.l.b16 %v95
    %v210 = vunpack.c.h.b16 %v95
    %v211 = vunpack.c.l.b16 %v96
    %v212 = vunpack.c.h.b16 %v96
    %v213 = vunpack.c.l.b16 %v97
    %v214 = vunpack.c.h.b16 %v97
    %v215 = vunpack.c.l.b16 %v98
    %v216 = vunpack.c.h.b16 %v98
    %v217 = vpack.c.b16 %v157, %v153
    %v218 = vpack.c.b16 %v158, %v154
    %v219 = vpack.c.b16 %v159, %v155
    %v220 = vpack.c.b16 %v160, %v156
    %v221 = vpack.c.b16 %v165, %v161
    %v222 = vpack.c.b16 %v166, %v162
    %v223 = vpack.c.b16 %v167, %v163
    %v224 = vpack.c.b16 %v168, %v164
    %v225 = vpack.c.b16 %v173, %v169
    %v226 = vpack.c.b16 %v174, %v170
    %v227 = vpack.c.b16 %v175, %v171
    %v228 = vpack.c.b16 %v176, %v172
    %v229 = vpack.c.b16 %v181, %v177
    %v230 = vpack.c.b16 %v182, %v178
    %v231 = vpack.c.b16 %v183, %v179
    %v232 = vpack.c.b16 %v184, %v180
    %v233 = vpack.c.b16 %v189, %v185
    %v234 = vpack.c.b16 %v190, %v186
    %v235 = vpack.c.b16 %v191, %v187
    %v236 = vpack.c.b16 %v192, %v188
    %v237 = vpack.c.b16 %v197, %v193
    %v238 = vpack.c.b16 %v198, %v194
    %v239 = vpack.c.b16 %v199, %v195
    %v240 = vpack.c.b16 %v200, %v196
    %v241 = vpack.c.b16 %v205, %v201
    %v242 = vpack.c.b16 %v206, %v202
    %v243 = vpack.c.b16 %v207, %v203
    %v244 = vpack.c.b16 %v208, %v204
    %v245 = vpack.c.b16 %v213, %v209
    %v246 = vpack.c.b16 %v214, %v210
    %v247 = vpack.c.b16 %v215, %v211
    %v248 = vpack.c.b16 %v216, %v212
    %281 = vmatprep.subr.bf16.mxu0 %v218
    %282 = vmatpush1.bf16.msra.mxu0 %v217
    %283 = vmatprep.subr.bf16.mxu0 %v222
    %284 = vmatpush1.bf16.msra.mxu0 %v221
    %285 = vmatprep.subr.bf16.mxu0 %v226
    %286 = vmatpush1.bf16.msra.mxu0 %v225
    %287 = vmatprep.subr.bf16.mxu0 %v230
    %288 = vmatpush1.bf16.msra.mxu0 %v229
    %289 = vmatprep.subr.bf16.mxu0 %v234
    %290 = vmatpush1.bf16.msra.mxu0 %v233
    %291 = vmatprep.subr.bf16.mxu0 %v238
    %292 = vmatpush1.bf16.msra.mxu0 %v237
    %293 = vmatprep.subr.bf16.mxu0 %v242
    %294 = vmatpush1.bf16.msra.mxu0 %v241
    %295 = vmatprep.subr.bf16.mxu0 %v246
    %296 = vmatpush1.bf16.msra.mxu0 %v245
    %297 = vmatprep.subr.bf16.mxu0 0
    %298 = vmatpush1.bf16.msra.mxu0 0
    %299 = vmatprep.subr.bf16.mxu0 0
    %300 = vmatpush1.bf16.msra.mxu0 0
    %301 = vmatprep.subr.bf16.mxu0 0
    %302 = vmatpush1.bf16.msra.mxu0 0
    %303 = vmatprep.subr.bf16.mxu0 0
    %304 = vmatpush1.bf16.msra.mxu0 0
    %305 = vmatprep.subr.bf16.mxu0 0
    %306 = vmatpush1.bf16.msra.mxu0 0
    %307 = vmatprep.subr.bf16.mxu0 0
    %308 = vmatpush1.bf16.msra.mxu0 0
    %309 = vmatprep.subr.bf16.mxu0 0
    %310 = vmatpush1.bf16.msra.mxu0 0
    %311 = vmatprep.subr.bf16.mxu0 0
    %312 = vmatpush1.bf16.msra.mxu0 0
    %313 = vmatprep.mubr.bf16.mxu0 0
    %314 = vmatmul.mubr.bf16.gmra.mrb[0].mxu0 %v63
    %v315 = vpop.f32.mrb[0].mxu0
    %v316 = vadd.f32 %v104, %v315
    %v317 = vpop.f32.mrb[0].mxu0
    %v318 = vadd.f32 %v108, %v317
    %v319 = vpop.f32.mrb[0].mxu0
    %v320 = vadd.f32 %v104, %v319
    %v321 = vpop.f32.mrb[0].mxu0
    %v322 = vadd.f32 %v108, %v321
    %323 = vmatprep.mubr.bf16.mxu0 0
    %324 = vmatmul.mubr.bf16.gmra.mrb[0].mxu0 %v64
    %v325 = vpop.f32.mrb[0].mxu0
    %v326 = vadd.f32 %v104, %v325
    %v327 = vpop.f32.mrb[0].mxu0
    %v328 = vadd.f32 %v108, %v327
    %v329 = vpop.f32.mrb[0].mxu0
    %v330 = vadd.f32 %v104, %v329
    %v331 = vpop.f32.mrb[0].mxu0
    %v332 = vadd.f32 %v108, %v331
    %333 = vmatprep.mubr.bf16.mxu0 0
    %334 = vmatmul.mubr.bf16.gmra.mrb[0].mxu0 %v65
    %v335 = vpop.f32.mrb[0].mxu0
    %v336 = vadd.f32 %v104, %v335
    %v337 = vpop.f32.mrb[0].mxu0
    %v338 = vadd.f32 %v108, %v337
    %v339 = vpop.f32.mrb[0].mxu0
    %v340 = vadd.f32 %v104, %v339
    %v341 = vpop.f32.mrb[0].mxu0
    %v342 = vadd.f32 %v108, %v341
    %343 = vmatprep.mubr.bf16.mxu0 0
    %344 = vmatmul.mubr.bf16.gmra.mrb[0].mxu0 %v66
    %v345 = vpop.f32.mrb[0].mxu0
    %v346 = vadd.f32 %v104, %v345
    %v347 = vpop.f32.mrb[0].mxu0
    %v348 = vadd.f32 %v108, %v347
    %v349 = vpop.f32.mrb[0].mxu0
    %v350 = vadd.f32 %v104, %v349
    %v351 = vpop.f32.mrb[0].mxu0
    %v352 = vadd.f32 %v108, %v351
    %353 = vdwg.mxu0
    %354 = vmatprep.subr.bf16.mxu0 %v220
    %355 = vmatpush1.bf16.msra.mxu0 %v219
    %356 = vmatprep.subr.bf16.mxu0 %v224
    %357 = vmatpush1.bf16.msra.mxu0 %v223
    %358 = vmatprep.subr.bf16.mxu0 %v228
    %359 = vmatpush1.bf16.msra.mxu0 %v227
    %360 = vmatprep.subr.bf16.mxu0 %v232
    %361 = vmatpush1.bf16.msra.mxu0 %v231
    %362 = vmatprep.subr.bf16.mxu0 %v236
    %363 = vmatpush1.bf16.msra.mxu0 %v235
    %364 = vmatprep.subr.bf16.mxu0 %v240
    %365 = vmatpush1.bf16.msra.mxu0 %v239
    %366 = vmatprep.subr.bf16.mxu0 %v244
    %367 = vmatpush1.bf16.msra.mxu0 %v243
    %368 = vmatprep.subr.bf16.mxu0 %v248
    %369 = vmatpush1.bf16.msra.mxu0 %v247
    %370 = vmatprep.subr.bf16.mxu0 0
    %371 = vmatpush1.bf16.msra.mxu0 0
    %372 = vmatprep.subr.bf16.mxu0 0
    %373 = vmatpush1.bf16.msra.mxu0 0
    %374 = vmatprep.subr.bf16.mxu0 0
    %375 = vmatpush1.bf16.msra.mxu0 0
    %376 = vmatprep.subr.bf16.mxu0 0
    %377 = vmatpush1.bf16.msra.mxu0 0
    %378 = vmatprep.subr.bf16.mxu0 0
    %379 = vmatpush1.bf16.msra.mxu0 0
    %380 = vmatprep.subr.bf16.mxu0 0
    %381 = vmatpush1.bf16.msra.mxu0 0
    %382 = vmatprep.subr.bf16.mxu0 0
    %383 = vmatpush1.bf16.msra.mxu0 0
    %384 = vmatprep.subr.bf16.mxu0 0
    %385 = vmatpush1.bf16.msra.mxu0 0
    %386 = vmatprep.mubr.bf16.mxu0 0
    %387 = vmatmul.mubr.bf16.gmra.mrb[0].mxu0 %v63
    %v388 = vpop.f32.mrb[0].mxu0
    %v389 = vadd.f32 %v112, %v388
    %v390 = vpop.f32.mrb[0].mxu0
    %v391 = vadd.f32 %v116, %v390
    %v392 = vpop.f32.mrb[0].mxu0
    %v393 = vadd.f32 %v112, %v392
    %v394 = vpop.f32.mrb[0].mxu0
    %v395 = vadd.f32 %v116, %v394
    %396 = vmatprep.mubr.bf16.mxu0 0
    %397 = vmatmul.mubr.bf16.gmra.mrb[0].mxu0 %v64
    %v398 = vpop.f32.mrb[0].mxu0
    %v399 = vadd.f32 %v112, %v398
    %v400 = vpop.f32.mrb[0].mxu0
    %v401 = vadd.f32 %v116, %v400
    %v402 = vpop.f32.mrb[0].mxu0
    %v403 = vadd.f32 %v112, %v402
    %v404 = vpop.f32.mrb[0].mxu0
    %v405 = vadd.f32 %v116, %v404
    %406 = vmatprep.mubr.bf16.mxu0 0
    %407 = vmatmul.mubr.bf16.gmra.mrb[0].mxu0 %v65
    %v408 = vpop.f32.mrb[0].mxu0
    %v409 = vadd.f32 %v112, %v408
    %v410 = vpop.f32.mrb[0].mxu0
    %v411 = vadd.f32 %v116, %v410
    %v412 = vpop.f32.mrb[0].mxu0
    %v413 = vadd.f32 %v112, %v412
    %v414 = vpop.f32.mrb[0].mxu0
    %v415 = vadd.f32 %v116, %v414
    %416 = vmatprep.mubr.bf16.mxu0 0
    %417 = vmatmul.mubr.bf16.gmra.mrb[0].mxu0 %v66
    %v418 = vpop.f32.mrb[0].mxu0
    %v419 = vadd.f32 %v112, %v418
    %v420 = vpop.f32.mrb[0].mxu0
    %v421 = vadd.f32 %v116, %v420
    %v422 = vpop.f32.mrb[0].mxu0
    %v423 = vadd.f32 %v112, %v422
    %v424 = vpop.f32.mrb[0].mxu0
    %v425 = vadd.f32 %v116, %v424
    %426 = vdwg.mxu0
    %427 = vst [vmem:[#allocation8] sm:$0xff] %v316
    %428 = vst [vmem:[#allocation8 + $0x8] sm:$0xff] %v318
    %429 = vst [vmem:[#allocation8 + $0x10] sm:$0xff] %v389
    %430 = vst [vmem:[#allocation8 + $0x18] sm:$0xff] %v391
    %431 = vst [vmem:[#allocation8 + $0x20] sm:$0xff] %v320
    %432 = vst [vmem:[#allocation8 + $0x28] sm:$0xff] %v322
    %433 = vst [vmem:[#allocation8 + $0x30] sm:$0xff] %v393
    %434 = vst [vmem:[#allocation8 + $0x38] sm:$0xff] %v395
    %435 = vst [vmem:[#allocation8 + $0x40] sm:$0xff] %v326
    %436 = vst [vmem:[#allocation8 + $0x48] sm:$0xff] %v328
    %437 = vst [vmem:[#allocation8 + $0x50] sm:$0xff] %v399
    %438 = vst [vmem:[#allocation8 + $0x58] sm:$0xff] %v401
    %439 = vst [vmem:[#allocation8 + $0x60] sm:$0xff] %v330
    %440 = vst [vmem:[#allocation8 + $0x68] sm:$0xff] %v332
    %441 = vst [vmem:[#allocation8 + $0x70] sm:$0xff] %v403
    %442 = vst [vmem:[#allocation8 + $0x78] sm:$0xff] %v405
    %443 = vst [vmem:[#allocation8 + $0x80] sm:$0xff] %v336
    %444 = vst [vmem:[#allocation8 + $0x88] sm:$0xff] %v338
    %445 = vst [vmem:[#allocation8 + $0x90] sm:$0xff] %v409
    %446 = vst [vmem:[#allocation8 + $0x98] sm:$0xff] %v411
    %447 = vst [vmem:[#allocation8 + $0xa0] sm:$0xff] %v340
    %448 = vst [vmem:[#allocation8 + $0xa8] sm:$0xff] %v342
    %449 = vst [vmem:[#allocation8 + $0xb0] sm:$0xff] %v413
    %450 = vst [vmem:[#allocation8 + $0xb8] sm:$0xff] %v415
    %451 = vst [vmem:[#allocation8 + $0xc0] sm:$0xff] %v346
    %452 = vst [vmem:[#allocation8 + $0xc8] sm:$0xff] %v348
    %453 = vst [vmem:[#allocation8 + $0xd0] sm:$0xff] %v419
    %454 = vst [vmem:[#allocation8 + $0xd8] sm:$0xff] %v421
    %455 = vst [vmem:[#allocation8 + $0xe0] sm:$0xff] %v350
    %456 = vst [vmem:[#allocation8 + $0xe8] sm:$0xff] %v352
    %457 = vst [vmem:[#allocation8 + $0xf0] sm:$0xff] %v423
    %458 = vst [vmem:[#allocation8 + $0xf8] sm:$0xff] %v425
    // Predicated region
    $region26: #{_forward_impl.7} parent=1 // pred_check
      _
    $region27: #{_forward_impl.7} parent=1 // pred_check_branch
      %460 = sbr.rel (0) target = $region29
    $region28: #{_forward_impl.7} parent=1 // pred_region
      %s462 = ssub.s32 4096, 4096
      %463 = vsyncadd [#allocation4], %s462
      %s464 = sshll.u32 [#allocation8], 4
      %s465 = int_to_ptr.vmem [resolvable:$true] %s464
      %470 = dma.vmem_to_hbm [thread:$0]  %s465, 4096, %s3, [#allocation4], 512, 512, 32
    $region29: #{_forward_impl.7} parent=1 // pred_fallthru
      _
    // Predicated region
    $region30: #{_forward_impl.7} parent=1 // pred_check
      _
    $region31: #{_forward_impl.7} parent=1 // pred_check_branch
      %472 = sbr.rel (0) target = $region33
    $region32: #{_forward_impl.7} parent=1 // pred_region
      %473 = dma.done [#allocation4], 4096
    $region33: #{_forward_impl.7} parent=1 // pred_fallthru
      _
    %474 = vsyncpa [#allocation3], 1
    %475 = vsyncpa [#allocation6], 1
    %476 = vsyncpa [#allocation4], 1

// kernel: _forward_impl.5
$region0: #{_forward_impl.5}
  #allocation0 [shape = 'u32[]', space=smem, size = 0x4, offset = 0x4, fixed_abs, tag = 'smem constant byte address 0x4 - core index']
  #allocation1 [shape = 'u32[144,128]{1,0:T(1,128)}', space=vmem, size = 0x12000, scoped, tag = 'internal scratch']
  %s0 = inlined_call_operand.hbm [shape: f32[64,32], index: 0, kind: input, shape index: {}]
  %s1 = inlined_call_operand.hbm [shape: bf16[32,512], index: 1, kind: input, shape index: {}]
  %s2 = inlined_call_operand.hbm [shape: f32[1,512], index: 2, kind: input, shape index: {}]
  %s3 = inlined_call_operand.hbm [shape: f32[64,512], index: 3, kind: output, shape index: {}]
  %s4 = sld [smem:[#allocation0]]
  $region34: #{_forward_impl.5} parent=0
    _
  %s6 = ssub.s32 1, %s4
  %s7 = scalar_select 0, %s6, %s4
  $region1: #{_forward_impl.5} parent=0
    #allocation2 [shape = 'u8[32768]{0}', space=vmem, size = 0x8000, scoped, tag = 'input window, operand 0, single buffered']
    #allocation3 [shape = 's32[1]{0}', space=sflag, size = 0x4, scoped, tag = 'scoped memory for _forward_impl.5']
    #allocation4 [shape = 's32[1]{0}', space=sflag, size = 0x4, scoped, tag = 'scoped memory for _forward_impl.5']
    #allocation5 [shape = 'u8[32768]{0}', space=vmem, size = 0x8000, scoped, tag = 'input window, operand 1, single buffered']
    #allocation6 [shape = 's32[1]{0}', space=sflag, size = 0x4, scoped, tag = 'scoped memory for _forward_impl.5']
    #allocation7 [shape = 'u8[2048]{0}', space=vmem, size = 0x800, scoped, tag = 'input window, operand 2, single buffered']
    #allocation8 [shape = 'u8[131072]{0}', space=vmem, size = 0x20000, scoped, tag = 'output window, operand 0, single buffered']
    %8 = vsyncpa [#allocation3], 0
    %9 = vsyncpa [#allocation6], 0
    %10 = vsyncpa [#allocation4], 0
    // Predicated region
    $region2: #{_forward_impl.5} parent=1 // pred_check
      _
    $region3: #{_forward_impl.5} parent=1 // pred_check_branch
      %12 = sbr.rel (0) target = $region5
    $region4: #{_forward_impl.5} parent=1 // pred_region
      %s14 = ssub.s32 1024, 1024
      %15 = vsyncadd [#allocation3], %s14
      %s16 = sshll.u32 [#allocation2], 4
      %s17 = int_to_ptr.vmem [resolvable:$true] %s16
      %22 = dma.hbm_to_vmem [thread:$0]  %s0, 1024, %s17, [#allocation3], 128, 128, 8
    $region5: #{_forward_impl.5} parent=1 // pred_fallthru
      _
    // Predicated region
    $region6: #{_forward_impl.5} parent=1 // pred_check
      _
    $region7: #{_forward_impl.5} parent=1 // pred_check_branch
      %24 = sbr.rel (0) target = $region9
    $region8: #{_forward_impl.5} parent=1 // pred_region
      %s26 = ssub.s32 1024, 1024
      %27 = vsyncadd [#allocation6], %s26
      %s28 = sshll.u32 [#allocation5], 4
      %s29 = int_to_ptr.vmem [resolvable:$true] %s28
      %34 = dma.hbm_to_vmem [thread:$0]  %s1, 1024, %s29, [#allocation6], 256, 256, 16
    $region9: #{_forward_impl.5} parent=1 // pred_fallthru
      _
    // Predicated region
    $region10: #{_forward_impl.5} parent=1 // pred_check
      _
    $region11: #{_forward_impl.5} parent=1 // pred_check_branch
      %36 = sbr.rel (0) target = $region13
    $region12: #{_forward_impl.5} parent=1 // pred_region
      %s38 = ssub.s32 64, 64
      %39 = vsyncadd [#allocation6], %s38
      %s41 = sshll.u32 [#allocation7], 4
      %s42 = int_to_ptr.vmem [resolvable:$true] %s41
      %44 = dma.hbm_to_vmem [thread:$0]  %s2, 64, %s42, [#allocation6]
    $region13: #{_forward_impl.5} parent=1 // pred_fallthru
      _
    // Predicated region
    $region14: #{_forward_impl.5} parent=1 // pred_check
      _
    $region15: #{_forward_impl.5} parent=1 // pred_check_branch
      %46 = sbr.rel (0) target = $region17
    $region16: #{_forward_impl.5} parent=1 // pred_region
      %47 = dma.done [#allocation3], 1024
    $region17: #{_forward_impl.5} parent=1 // pred_fallthru
      _
    // Predicated region
    $region18: #{_forward_impl.5} parent=1 // pred_check
      _
    $region19: #{_forward_impl.5} parent=1 // pred_check_branch
      %49 = sbr.rel (0) target = $region21
    $region20: #{_forward_impl.5} parent=1 // pred_region
      %50 = dma.done [#allocation6], 1024
    $region21: #{_forward_impl.5} parent=1 // pred_fallthru
      _
    // Predicated region
    $region22: #{_forward_impl.5} parent=1 // pred_check
      _
    $region23: #{_forward_impl.5} parent=1 // pred_check_branch
      %52 = sbr.rel (0) target = $region25
    $region24: #{_forward_impl.5} parent=1 // pred_region
      %53 = dma.done [#allocation6], 64
    $region25: #{_forward_impl.5} parent=1 // pred_fallthru
      _
    %v55 = vld [vmem:[#allocation2] sm:$0xff]
    %v56 = vld [vmem:[#allocation2 + $0x8] sm:$0xff]
    %v57 = vld [vmem:[#allocation2 + $0x10] sm:$0xff]
    %v58 = vld [vmem:[#allocation2 + $0x18] sm:$0xff]
    %v59 = vld [vmem:[#allocation2 + $0x20] sm:$0xff]
    %v60 = vld [vmem:[#allocation2 + $0x28] sm:$0xff]
    %v61 = vld [vmem:[#allocation2 + $0x30] sm:$0xff]
    %v62 = vld [vmem:[#allocation2 + $0x38] sm:$0xff]
    %v63 = vpack.c.bf16 %v56, %v55
    %v64 = vpack.c.bf16 %v58, %v57
    %v65 = vpack.c.bf16 %v60, %v59
    %v66 = vpack.c.bf16 %v62, %v61
    %v67 = vld [vmem:[#allocation5] sm:$0xff]
    %v68 = vld [vmem:[#allocation5 + $0x8] sm:$0xff]
    %v69 = vld [vmem:[#allocation5 + $0x10] sm:$0xff]
    %v70 = vld [vmem:[#allocation5 + $0x18] sm:$0xff]
    %v71 = vld [vmem:[#allocation5 + $0x20] sm:$0xff]
    %v72 = vld [vmem:[#allocation5 + $0x28] sm:$0xff]
    %v73 = vld [vmem:[#allocation5 + $0x30] sm:$0xff]
    %v74 = vld [vmem:[#allocation5 + $0x38] sm:$0xff]
    %v75 = vld [vmem:[#allocation7] sm:$0xf]
    %v77 = vlaneseq
    %v78 = vshrl.u32 %v77, 7
    %v79 = vsub.s32 0, %v78
    %v80 = vrot.slane %v75, %v79
    %v81 = vlaneseq
    %v82 = vshrl.u32 %v81, 7
    %v83 = vsub.s32 1, %v82
    %v84 = vrot.slane %v75, %v83
    %v85 = vlaneseq
    %v86 = vshrl.u32 %v85, 7
    %v87 = vsub.s32 2, %v86
    %v88 = vrot.slane %v75, %v87
    %v89 = vlaneseq
    %v90 = vshrl.u32 %v89, 7
    %v91 = vsub.s32 3, %v90
    %v92 = vrot.slane %v75, %v91
    %v105 = vunpack.c.l.b16 %v67
    %v106 = vunpack.c.h.b16 %v67
    %v107 = vunpack.c.l.b16 %v68
    %v108 = vunpack.c.h.b16 %v68
    %v109 = vunpack.c.l.b16 %v69
    %v110 = vunpack.c.h.b16 %v69
    %v111 = vunpack.c.l.b16 %v70
    %v112 = vunpack.c.h.b16 %v70
    %v113 = vunpack.c.l.b16 %v71
    %v114 = vunpack.c.h.b16 %v71
    %v115 = vunpack.c.l.b16 %v72
    %v116 = vunpack.c.h.b16 %v72
    %v117 = vunpack.c.l.b16 %v73
    %v118 = vunpack.c.h.b16 %v73
    %v119 = vunpack.c.l.b16 %v74
    %v120 = vunpack.c.h.b16 %v74
    %v121 = vpack.c.b16 %v109, %v105
    %v122 = vpack.c.b16 %v110, %v106
    %v123 = vpack.c.b16 %v111, %v107
    %v124 = vpack.c.b16 %v112, %v108
    %v125 = vpack.c.b16 %v117, %v113
    %v126 = vpack.c.b16 %v118, %v114
    %v127 = vpack.c.b16 %v119, %v115
    %v128 = vpack.c.b16 %v120, %v116
    %vm137 = vcmask 261120
    %v139 = vsel %vm137, %v63, 0
    %v142 = vsel %vm137, %v64, 0
    %v145 = vsel %vm137, %v65, 0
    %v148 = vsel %vm137, %v66, 0
    %150 = vmatprep.subr.bf16.mxu0 %v122
    %151 = vmatpush1.bf16.msra.mxu0 %v121
    %152 = vmatprep.subr.bf16.mxu0 %v126
    %153 = vmatpush1.bf16.msra.mxu0 %v125
    %154 = vmatprep.subr.bf16.mxu0 0
    %155 = vmatpush1.bf16.msra.mxu0 0
    %156 = vmatprep.subr.bf16.mxu0 0
    %157 = vmatpush1.bf16.msra.mxu0 0
    %158 = vmatprep.subr.bf16.mxu0 0
    %159 = vmatpush1.bf16.msra.mxu0 0
    %160 = vmatprep.subr.bf16.mxu0 0
    %161 = vmatpush1.bf16.msra.mxu0 0
    %162 = vmatprep.subr.bf16.mxu0 0
    %163 = vmatpush1.bf16.msra.mxu0 0
    %164 = vmatprep.subr.bf16.mxu0 0
    %165 = vmatpush1.bf16.msra.mxu0 0
    %166 = vmatprep.subr.bf16.mxu0 0
    %167 = vmatpush1.bf16.msra.mxu0 0
    %168 = vmatprep.subr.bf16.mxu0 0
    %169 = vmatpush1.bf16.msra.mxu0 0
    %170 = vmatprep.subr.bf16.mxu0 0
    %171 = vmatpush1.bf16.msra.mxu0 0
    %172 = vmatprep.subr.bf16.mxu0 0
    %173 = vmatpush1.bf16.msra.mxu0 0
    %174 = vmatprep.subr.bf16.mxu0 0
    %175 = vmatpush1.bf16.msra.mxu0 0
    %176 = vmatprep.subr.bf16.mxu0 0
    %177 = vmatpush1.bf16.msra.mxu0 0
    %178 = vmatprep.subr.bf16.mxu0 0
    %179 = vmatpush1.bf16.msra.mxu0 0
    %180 = vmatprep.subr.bf16.mxu0 0
    %181 = vmatpush1.bf16.msra.mxu0 0
    %182 = vmatprep.mubr.bf16.mxu0 0
    %183 = vmatmul.mubr.bf16.gmra.mrb[0].mxu0 %v139
    %v184 = vpop.f32.mrb[0].mxu0
    %v185 = vadd.f32 %v80, %v184
    %v186 = vpop.f32.mrb[0].mxu0
    %v187 = vadd.f32 %v84, %v186
    %v188 = vpop.f32.mrb[0].mxu0
    %v189 = vadd.f32 %v80, %v188
    %v190 = vpop.f32.mrb[0].mxu0
    %v191 = vadd.f32 %v84, %v190
    %192 = vmatprep.mubr.bf16.mxu0 0
    %193 = vmatmul.mubr.bf16.gmra.mrb[0].mxu0 %v142
    %v194 = vpop.f32.mrb[0].mxu0
    %v195 = vadd.f32 %v80, %v194
    %v196 = vpop.f32.mrb[0].mxu0
    %v197 = vadd.f32 %v84, %v196
    %v198 = vpop.f32.mrb[0].mxu0
    %v199 = vadd.f32 %v80, %v198
    %v200 = vpop.f32.mrb[0].mxu0
    %v201 = vadd.f32 %v84, %v200
    %202 = vmatprep.mubr.bf16.mxu0 0
    %203 = vmatmul.mubr.bf16.gmra.mrb[0].mxu0 %v145
    %v204 = vpop.f32.mrb[0].mxu0
    %v205 = vadd.f32 %v80, %v204
    %v206 = vpop.f32.mrb[0].mxu0
    %v207 = vadd.f32 %v84, %v206
    %v208 = vpop.f32.mrb[0].mxu0
    %v209 = vadd.f32 %v80, %v208
    %v210 = vpop.f32.mrb[0].mxu0
    %v211 = vadd.f32 %v84, %v210
    %212 = vmatprep.mubr.bf16.mxu0 0
    %213 = vmatmul.mubr.bf16.gmra.mrb[0].mxu0 %v148
    %v214 = vpop.f32.mrb[0].mxu0
    %v215 = vadd.f32 %v80, %v214
    %v216 = vpop.f32.mrb[0].mxu0
    %v217 = vadd.f32 %v84, %v216
    %v218 = vpop.f32.mrb[0].mxu0
    %v219 = vadd.f32 %v80, %v218
    %v220 = vpop.f32.mrb[0].mxu0
    %v221 = vadd.f32 %v84, %v220
    %222 = vdwg.mxu0
    %223 = vmatprep.subr.bf16.mxu0 %v124
    %224 = vmatpush1.bf16.msra.mxu0 %v123
    %225 = vmatprep.subr.bf16.mxu0 %v128
    %226 = vmatpush1.bf16.msra.mxu0 %v127
    %227 = vmatprep.subr.bf16.mxu0 0
    %228 = vmatpush1.bf16.msra.mxu0 0
    %229 = vmatprep.subr.bf16.mxu0 0
    %230 = vmatpush1.bf16.msra.mxu0 0
    %231 = vmatprep.subr.bf16.mxu0 0
    %232 = vmatpush1.bf16.msra.mxu0 0
    %233 = vmatprep.subr.bf16.mxu0 0
    %234 = vmatpush1.bf16.msra.mxu0 0
    %235 = vmatprep.subr.bf16.mxu0 0
    %236 = vmatpush1.bf16.msra.mxu0 0
    %237 = vmatprep.subr.bf16.mxu0 0
    %238 = vmatpush1.bf16.msra.mxu0 0
    %239 = vmatprep.subr.bf16.mxu0 0
    %240 = vmatpush1.bf16.msra.mxu0 0
    %241 = vmatprep.subr.bf16.mxu0 0
    %242 = vmatpush1.bf16.msra.mxu0 0
    %243 = vmatprep.subr.bf16.mxu0 0
    %244 = vmatpush1.bf16.msra.mxu0 0
    %245 = vmatprep.subr.bf16.mxu0 0
    %246 = vmatpush1.bf16.msra.mxu0 0
    %247 = vmatprep.subr.bf16.mxu0 0
    %248 = vmatpush1.bf16.msra.mxu0 0
    %249 = vmatprep.subr.bf16.mxu0 0
    %250 = vmatpush1.bf16.msra.mxu0 0
    %251 = vmatprep.subr.bf16.mxu0 0
    %252 = vmatpush1.bf16.msra.mxu0 0
    %253 = vmatprep.subr.bf16.mxu0 0
    %254 = vmatpush1.bf16.msra.mxu0 0
    %255 = vmatprep.mubr.bf16.mxu0 0
    %256 = vmatmul.mubr.bf16.gmra.mrb[0].mxu0 %v139
    %v257 = vpop.f32.mrb[0].mxu0
    %v258 = vadd.f32 %v88, %v257
    %v259 = vpop.f32.mrb[0].mxu0
    %v260 = vadd.f32 %v92, %v259
    %v261 = vpop.f32.mrb[0].mxu0
    %v262 = vadd.f32 %v88, %v261
    %v263 = vpop.f32.mrb[0].mxu0
    %v264 = vadd.f32 %v92, %v263
    %265 = vmatprep.mubr.bf16.mxu0 0
    %266 = vmatmul.mubr.bf16.gmra.mrb[0].mxu0 %v142
    %v267 = vpop.f32.mrb[0].mxu0
    %v268 = vadd.f32 %v88, %v267
    %v269 = vpop.f32.mrb[0].mxu0
    %v270 = vadd.f32 %v92, %v269
    %v271 = vpop.f32.mrb[0].mxu0
    %v272 = vadd.f32 %v88, %v271
    %v273 = vpop.f32.mrb[0].mxu0
    %v274 = vadd.f32 %v92, %v273
    %275 = vmatprep.mubr.bf16.mxu0 0
    %276 = vmatmul.mubr.bf16.gmra.mrb[0].mxu0 %v145
    %v277 = vpop.f32.mrb[0].mxu0
    %v278 = vadd.f32 %v88, %v277
    %v279 = vpop.f32.mrb[0].mxu0
    %v280 = vadd.f32 %v92, %v279
    %v281 = vpop.f32.mrb[0].mxu0
    %v282 = vadd.f32 %v88, %v281
    %v283 = vpop.f32.mrb[0].mxu0
    %v284 = vadd.f32 %v92, %v283
    %285 = vmatprep.mubr.bf16.mxu0 0
    %286 = vmatmul.mubr.bf16.gmra.mrb[0].mxu0 %v148
    %v287 = vpop.f32.mrb[0].mxu0
    %v288 = vadd.f32 %v88, %v287
    %v289 = vpop.f32.mrb[0].mxu0
    %v290 = vadd.f32 %v92, %v289
    %v291 = vpop.f32.mrb[0].mxu0
    %v292 = vadd.f32 %v88, %v291
    %v293 = vpop.f32.mrb[0].mxu0
    %v294 = vadd.f32 %v92, %v293
    %295 = vdwg.mxu0
    %296 = vst [vmem:[#allocation8] sm:$0xff] %v185
    %297 = vst [vmem:[#allocation8 + $0x8] sm:$0xff] %v187
    %298 = vst [vmem:[#allocation8 + $0x10] sm:$0xff] %v258
    %299 = vst [vmem:[#allocation8 + $0x18] sm:$0xff] %v260
    %300 = vst [vmem:[#allocation8 + $0x20] sm:$0xff] %v189
    %301 = vst [vmem:[#allocation8 + $0x28] sm:$0xff] %v191
    %302 = vst [vmem:[#allocation8 + $0x30] sm:$0xff] %v262
    %303 = vst [vmem:[#allocation8 + $0x38] sm:$0xff] %v264
    %304 = vst [vmem:[#allocation8 + $0x40] sm:$0xff] %v195
    %305 = vst [vmem:[#allocation8 + $0x48] sm:$0xff] %v197
    %306 = vst [vmem:[#allocation8 + $0x50] sm:$0xff] %v268
    %307 = vst [vmem:[#allocation8 + $0x58] sm:$0xff] %v270
    %308 = vst [vmem:[#allocation8 + $0x60] sm:$0xff] %v199
    %309 = vst [vmem:[#allocation8 + $0x68] sm:$0xff] %v201
    %310 = vst [vmem:[#allocation8 + $0x70] sm:$0xff] %v272
    %311 = vst [vmem:[#allocation8 + $0x78] sm:$0xff] %v274
    %312 = vst [vmem:[#allocation8 + $0x80] sm:$0xff] %v205
    %313 = vst [vmem:[#allocation8 + $0x88] sm:$0xff] %v207
    %314 = vst [vmem:[#allocation8 + $0x90] sm:$0xff] %v278
    %315 = vst [vmem:[#allocation8 + $0x98] sm:$0xff] %v280
    %316 = vst [vmem:[#allocation8 + $0xa0] sm:$0xff] %v209
    %317 = vst [vmem:[#allocation8 + $0xa8] sm:$0xff] %v211
    %318 = vst [vmem:[#allocation8 + $0xb0] sm:$0xff] %v282
    %319 = vst [vmem:[#allocation8 + $0xb8] sm:$0xff] %v284
    %320 = vst [vmem:[#allocation8 + $0xc0] sm:$0xff] %v215
    %321 = vst [vmem:[#allocation8 + $0xc8] sm:$0xff] %v217
    %322 = vst [vmem:[#allocation8 + $0xd0] sm:$0xff] %v288
    %323 = vst [vmem:[#allocation8 + $0xd8] sm:$0xff] %v290
    %324 = vst [vmem:[#allocation8 + $0xe0] sm:$0xff] %v219
    %325 = vst [vmem:[#allocation8 + $0xe8] sm:$0xff] %v221
    %326 = vst [vmem:[#allocation8 + $0xf0] sm:$0xff] %v292
    %327 = vst [vmem:[#allocation8 + $0xf8] sm:$0xff] %v294
    // Predicated region
    $region26: #{_forward_impl.5} parent=1 // pred_check
      _
    $region27: #{_forward_impl.5} parent=1 // pred_check_branch
      %329 = sbr.rel (0) target = $region29
    $region28: #{_forward_impl.5} parent=1 // pred_region
      %s331 = ssub.s32 4096, 4096
      %332 = vsyncadd [#allocation4], %s331
      %s333 = sshll.u32 [#allocation8], 4
      %s334 = int_to_ptr.vmem [resolvable:$true] %s333
      %339 = dma.vmem_to_hbm [thread:$0]  %s334, 4096, %s3, [#allocation4], 512, 512, 32
    $region29: #{_forward_impl.5} parent=1 // pred_fallthru
      _
    // Predicated region
    $region30: #{_forward_impl.5} parent=1 // pred_check
      _
    $region31: #{_forward_impl.5} parent=1 // pred_check_branch
      %341 = sbr.rel (0) target = $region33
    $region32: #{_forward_impl.5} parent=1 // pred_region
      %342 = dma.done [#allocation4], 4096
    $region33: #{_forward_impl.5} parent=1 // pred_fallthru
      _
    %343 = vsyncpa [#allocation3], 1
    %344 = vsyncpa [#allocation6], 1
    %345 = vsyncpa [#allocation4], 1

// kernel: _forward_impl.9
$region0: #{_forward_impl.9}
  #allocation0 [shape = 'u32[]', space=smem, size = 0x4, offset = 0x4, fixed_abs, tag = 'smem constant byte address 0x4 - core index']
  #allocation1 [shape = 'u32[144,128]{1,0:T(1,128)}', space=vmem, size = 0x12000, scoped, tag = 'internal scratch']
  %s0 = inlined_call_operand.hbm [shape: f32[8,8,128], index: 0, kind: input, shape index: {}]
  %s1 = inlined_call_operand.hbm [shape: bf16[128,128], index: 1, kind: input, shape index: {}]
  %s2 = inlined_call_operand.hbm [shape: f32[1,128], index: 2, kind: input, shape index: {}]
  %s3 = inlined_call_operand.hbm [shape: f32[8,8,128], index: 3, kind: output, shape index: {}]
  %s4 = sld [smem:[#allocation0]]
  $region34: #{_forward_impl.9} parent=0
    _
  %s6 = ssub.s32 1, %s4
  %s7 = scalar_select 0, %s6, %s4
  $region1: #{_forward_impl.9} parent=0
    #allocation2 [shape = 'u8[32768]{0}', space=vmem, size = 0x8000, scoped, tag = 'input window, operand 0, single buffered']
    #allocation3 [shape = 's32[1]{0}', space=sflag, size = 0x4, scoped, tag = 'scoped memory for _forward_impl.9']
    #allocation4 [shape = 's32[1]{0}', space=sflag, size = 0x4, scoped, tag = 'scoped memory for _forward_impl.9']
    #allocation5 [shape = 'u8[32768]{0}', space=vmem, size = 0x8000, scoped, tag = 'input window, operand 1, single buffered']
    #allocation6 [shape = 's32[1]{0}', space=sflag, size = 0x4, scoped, tag = 'scoped memory for _forward_impl.9']
    #allocation7 [shape = 'u8[512]{0}', space=vmem, size = 0x400, scoped, tag = 'input window, operand 2, single buffered']
    #allocation8 [shape = 'u8[32768]{0}', space=vmem, size = 0x8000, scoped, tag = 'output window, operand 0, single buffered']
    %8 = vsyncpa [#allocation3], 0
    %9 = vsyncpa [#allocation6], 0
    %10 = vsyncpa [#allocation4], 0
    // Predicated region
    $region2: #{_forward_impl.9} parent=1 // pred_check
      _
    $region3: #{_forward_impl.9} parent=1 // pred_check_branch
      %12 = sbr.rel (0) target = $region5
    $region4: #{_forward_impl.9} parent=1 // pred_region
      %s14 = ssub.s32 1024, 1024
      %15 = vsyncadd [#allocation3], %s14
      %s16 = sshll.u32 [#allocation2], 4
      %s17 = int_to_ptr.vmem [resolvable:$true] %s16
      %22 = dma.hbm_to_vmem [thread:$0]  %s0, 1024, %s17, [#allocation3], 128, 128, 8
    $region5: #{_forward_impl.9} parent=1 // pred_fallthru
      _
    // Predicated region
    $region6: #{_forward_impl.9} parent=1 // pred_check
      _
    $region7: #{_forward_impl.9} parent=1 // pred_check_branch
      %24 = sbr.rel (0) target = $region9
    $region8: #{_forward_impl.9} parent=1 // pred_region
      %s26 = ssub.s32 1024, 1024
      %27 = vsyncadd [#allocation6], %s26
      %s28 = sshll.u32 [#allocation5], 4
      %s29 = int_to_ptr.vmem [resolvable:$true] %s28
      %34 = dma.hbm_to_vmem [thread:$0]  %s1, 1024, %s29, [#allocation6], 64, 64, 4
    $region9: #{_forward_impl.9} parent=1 // pred_fallthru
      _
    // Predicated region
    $region10: #{_forward_impl.9} parent=1 // pred_check
      _
    $region11: #{_forward_impl.9} parent=1 // pred_check_branch
      %36 = sbr.rel (0) target = $region13
    $region12: #{_forward_impl.9} parent=1 // pred_region
      %s38 = ssub.s32 16, 16
      %39 = vsyncadd [#allocation6], %s38
      %s41 = sshll.u32 [#allocation7], 4
      %s42 = int_to_ptr.vmem [resolvable:$true] %s41
      %44 = dma.hbm_to_vmem [thread:$0]  %s2, 16, %s42, [#allocation6]
    $region13: #{_forward_impl.9} parent=1 // pred_fallthru
      _
    // Predicated region
    $region14: #{_forward_impl.9} parent=1 // pred_check
      _
    $region15: #{_forward_impl.9} parent=1 // pred_check_branch
      %46 = sbr.rel (0) target = $region17
    $region16: #{_forward_impl.9} parent=1 // pred_region
      %47 = dma.done [#allocation3], 1024
    $region17: #{_forward_impl.9} parent=1 // pred_fallthru
      _
    // Predicated region
    $region18: #{_forward_impl.9} parent=1 // pred_check
      _
    $region19: #{_forward_impl.9} parent=1 // pred_check_branch
      %49 = sbr.rel (0) target = $region21
    $region20: #{_forward_impl.9} parent=1 // pred_region
      %50 = dma.done [#allocation6], 1024
    $region21: #{_forward_impl.9} parent=1 // pred_fallthru
      _
    // Predicated region
    $region22: #{_forward_impl.9} parent=1 // pred_check
      _
    $region23: #{_forward_impl.9} parent=1 // pred_check_branch
      %52 = sbr.rel (0) target = $region25
    $region24: #{_forward_impl.9} parent=1 // pred_region
      %53 = dma.done [#allocation6], 16
    $region25: #{_forward_impl.9} parent=1 // pred_fallthru
      _
    %v55 = vld [vmem:[#allocation5] sm:$0xf]
    %v56 = vld [vmem:[#allocation5 + $0x4] sm:$0xf]
    %v57 = vld [vmem:[#allocation5 + $0x8] sm:$0xf]
    %v58 = vld [vmem:[#allocation5 + $0xc] sm:$0xf]
    %v59 = vld [vmem:[#allocation5 + $0x10] sm:$0xf]
    %v60 = vld [vmem:[#allocation5 + $0x14] sm:$0xf]
    %v61 = vld [vmem:[#allocation5 + $0x18] sm:$0xf]
    %v62 = vld [vmem:[#allocation5 + $0x1c] sm:$0xf]
    %v63 = vld [vmem:[#allocation5 + $0x20] sm:$0xf]
    %v64 = vld [vmem:[#allocation5 + $0x24] sm:$0xf]
    %v65 = vld [vmem:[#allocation5 + $0x28] sm:$0xf]
    %v66 = vld [vmem:[#allocation5 + $0x2c] sm:$0xf]
    %v67 = vld [vmem:[#allocation5 + $0x30] sm:$0xf]
    %v68 = vld [vmem:[#allocation5 + $0x34] sm:$0xf]
    %v69 = vld [vmem:[#allocation5 + $0x38] sm:$0xf]
    %v70 = vld [vmem:[#allocation5 + $0x3c] sm:$0xf]
    %v71 = vld [vmem:[#allocation2] sm:$0xff]
    %v72 = vld [vmem:[#allocation2 + $0x8] sm:$0xff]
    %v73 = vld [vmem:[#allocation2 + $0x10] sm:$0xff]
    %v74 = vld [vmem:[#allocation2 + $0x18] sm:$0xff]
    %v75 = vld [vmem:[#allocation2 + $0x20] sm:$0xff]
    %v76 = vld [vmem:[#allocation2 + $0x28] sm:$0xff]
    %v77 = vld [vmem:[#allocation2 + $0x30] sm:$0xff]
    %v78 = vld [vmem:[#allocation2 + $0x38] sm:$0xff]
    %v79 = vpack.c.bf16 %v72, %v71
    %v80 = vpack.c.bf16 %v74, %v73
    %v81 = vpack.c.bf16 %v76, %v75
    %v82 = vpack.c.bf16 %v78, %v77
    %v83 = vld [vmem:[#allocation7] sm:$0x1]
    %v85 = vlaneseq
    %v86 = vshrl.u32 %v85, 7
    %v87 = vsub.s32 0, %v86
    %v88 = vrot.slane %v83, %v87
    %v106 = vunpack.c.l.b16 %v55
    %v107 = vunpack.c.l.b16 %v56
    %v108 = vunpack.c.l.b16 %v57
    %v109 = vunpack.c.l.b16 %v58
    %v110 = vunpack.c.l.b16 %v59
    %v111 = vunpack.c.l.b16 %v60
    %v112 = vunpack.c.l.b16 %v61
    %v113 = vunpack.c.l.b16 %v62
    %v114 = vunpack.c.l.b16 %v63
    %v115 = vunpack.c.l.b16 %v64
    %v116 = vunpack.c.l.b16 %v65
    %v117 = vunpack.c.l.b16 %v66
    %v118 = vunpack.c.l.b16 %v67
    %v119 = vunpack.c.l.b16 %v68
    %v120 = vunpack.c.l.b16 %v69
    %v121 = vunpack.c.l.b16 %v70
    %v122 = vpack.c.b16 %v107, %v106
    %v123 = vpack.c.b16 %v109, %v108
    %v124 = vpack.c.b16 %v111, %v110
    %v125 = vpack.c.b16 %v113, %v112
    %v126 = vpack.c.b16 %v115, %v114
    %v127 = vpack.c.b16 %v117, %v116
    %v128 = vpack.c.b16 %v119, %v118
    %v129 = vpack.c.b16 %v121, %v120
    %138 = vmatprep.subr.bf16.mxu0 0
    %139 = vmatpush1.bf16.msra.mxu0 %v122
    %140 = vmatprep.subr.bf16.mxu0 0
    %141 = vmatpush1.bf16.msra.mxu0 %v123
    %142 = vmatprep.subr.bf16.mxu0 0
    %143 = vmatpush1.bf16.msra.mxu0 %v124
    %144 = vmatprep.subr.bf16.mxu0 0
    %145 = vmatpush1.bf16.msra.mxu0 %v125
    %146 = vmatprep.subr.bf16.mxu0 0
    %147 = vmatpush1.bf16.msra.mxu0 %v126
    %148 = vmatprep.subr.bf16.mxu0 0
    %149 = vmatpush1.bf16.msra.mxu0 %v127
    %150 = vmatprep.subr.bf16.mxu0 0
    %151 = vmatpush1.bf16.msra.mxu0 %v128
    %152 = vmatprep.subr.bf16.mxu0 0
    %153 = vmatpush1.bf16.msra.mxu0 %v129
    %154 = vmatprep.subr.bf16.mxu0 0
    %155 = vmatpush1.bf16.msra.mxu0 0
    %156 = vmatprep.subr.bf16.mxu0 0
    %157 = vmatpush1.bf16.msra.mxu0 0
    %158 = vmatprep.subr.bf16.mxu0 0
    %159 = vmatpush1.bf16.msra.mxu0 0
    %160 = vmatprep.subr.bf16.mxu0 0
    %161 = vmatpush1.bf16.msra.mxu0 0
    %162 = vmatprep.subr.bf16.mxu0 0
    %163 = vmatpush1.bf16.msra.mxu0 0
    %164 = vmatprep.subr.bf16.mxu0 0
    %165 = vmatpush1.bf16.msra.mxu0 0
    %166 = vmatprep.subr.bf16.mxu0 0
    %167 = vmatpush1.bf16.msra.mxu0 0
    %168 = vmatprep.subr.bf16.mxu0 0
    %169 = vmatpush1.bf16.msra.mxu0 0
    %170 = vmatprep.mubr.bf16.mxu0 0
    %171 = vmatmul.mubr.bf16.gmra.mrb[0].mxu0 %v79
    %v172 = vpop.f32.mrb[0].mxu0
    %v173 = vadd.f32 %v88, %v172
    %v174 = vpop.f32.mrb[0].mxu0
    %v175 = vpop.f32.mrb[0].mxu0
    %v176 = vadd.f32 %v88, %v175
    %v177 = vpop.f32.mrb[0].mxu0
    %178 = vmatprep.mubr.bf16.mxu0 0
    %179 = vmatmul.mubr.bf16.gmra.mrb[0].mxu0 %v80
    %v180 = vpop.f32.mrb[0].mxu0
    %v181 = vadd.f32 %v88, %v180
    %v182 = vpop.f32.mrb[0].mxu0
    %v183 = vpop.f32.mrb[0].mxu0
    %v184 = vadd.f32 %v88, %v183
    %v185 = vpop.f32.mrb[0].mxu0
    %186 = vmatprep.mubr.bf16.mxu0 0
    %187 = vmatmul.mubr.bf16.gmra.mrb[0].mxu0 %v81
    %v188 = vpop.f32.mrb[0].mxu0
    %v189 = vadd.f32 %v88, %v188
    %v190 = vpop.f32.mrb[0].mxu0
    %v191 = vpop.f32.mrb[0].mxu0
    %v192 = vadd.f32 %v88, %v191
    %v193 = vpop.f32.mrb[0].mxu0
    %194 = vmatprep.mubr.bf16.mxu0 0
    %195 = vmatmul.mubr.bf16.gmra.mrb[0].mxu0 %v82
    %v196 = vpop.f32.mrb[0].mxu0
    %v197 = vadd.f32 %v88, %v196
    %v198 = vpop.f32.mrb[0].mxu0
    %v199 = vpop.f32.mrb[0].mxu0
    %v200 = vadd.f32 %v88, %v199
    %v201 = vpop.f32.mrb[0].mxu0
    %202 = vdwg.mxu0
    %v204 = vcombine.high %v173, %v173
    %v206 = vunpack.c.l.s4 1966171168
    %v207 = vunpack.c.0.s8 %v206
    %v208 = vlaneseq
    %v209 = vshrl.u32 %v208, 7
    %v210 = vsub.s32 %v207, %v209
    %v211 = vrot.slane %v173, %v210
    %v213 = vunpack.c.l.s4 1966171168
    %v214 = vunpack.c.0.s8 %v213
    %v215 = vlaneseq
    %v216 = vshrl.u32 %v215, 7
    %v217 = vsub.s32 %v214, %v216
    %v218 = vrot.slane %v204, %v217
    %v219 = vcombine.high %v211, %v211
    %v220 = vcombine.high %v218, %v218
    %v222 = vunpack.c.l.s4 1966171168
    %v223 = vunpack.c.0.s8 %v222
    %v224 = vlaneseq
    %v225 = vshrl.u32 %v224, 7
    %v226 = vsub.s32 %v223, %v225
    %v227 = vrot.slane %v211, %v226
    %v229 = vunpack.c.l.s4 1966171168
    %v230 = vunpack.c.0.s8 %v229
    %v231 = vlaneseq
    %v232 = vshrl.u32 %v231, 7
    %v233 = vsub.s32 %v230, %v232
    %v234 = vrot.slane %v218, %v233
    %v236 = vunpack.c.l.s4 1966171168
    %v237 = vunpack.c.0.s8 %v236
    %v238 = vlaneseq
    %v239 = vshrl.u32 %v238, 7
    %v240 = vsub.s32 %v237, %v239
    %v241 = vrot.slane %v219, %v240
    %v243 = vunpack.c.l.s4 1966171168
    %v244 = vunpack.c.0.s8 %v243
    %v245 = vlaneseq
    %v246 = vshrl.u32 %v245, 7
    %v247 = vsub.s32 %v244, %v246
    %v248 = vrot.slane %v220, %v247
    %v249 = vcombine.high %v227, %v227
    %v250 = vcombine.high %v234, %v234
    %v251 = vcombine.high %v241, %v241
    %v252 = vcombine.high %v248, %v248
    %261 = vst [vmem:[#allocation8] sm:$0x1] %v227
    %262 = vst [vmem:[#allocation8 + $0x8] sm:$0x1] %v241
    %263 = vst [vmem:[#allocation8 + $0x10] sm:$0x1] %v249
    %264 = vst [vmem:[#allocation8 + $0x18] sm:$0x1] %v251
    %265 = vst [vmem:[#allocation8 + $0x20] sm:$0x1] %v234
    %266 = vst [vmem:[#allocation8 + $0x28] sm:$0x1] %v248
    %267 = vst [vmem:[#allocation8 + $0x30] sm:$0x1] %v250
    %268 = vst [vmem:[#allocation8 + $0x38] sm:$0x1] %v252
    %v270 = vcombine.high %v176, %v176
    %v272 = vunpack.c.l.s4 1966171168
    %v273 = vunpack.c.0.s8 %v272
    %v274 = vlaneseq
    %v275 = vshrl.u32 %v274, 7
    %v276 = vsub.s32 %v273, %v275
    %v277 = vrot.slane %v176, %v276
    %v279 = vunpack.c.l.s4 1966171168
    %v280 = vunpack.c.0.s8 %v279
    %v281 = vlaneseq
    %v282 = vshrl.u32 %v281, 7
    %v283 = vsub.s32 %v280, %v282
    %v284 = vrot.slane %v270, %v283
    %v285 = vcombine.high %v277, %v277
    %v286 = vcombine.high %v284, %v284
    %v288 = vunpack.c.l.s4 1966171168
    %v289 = vunpack.c.0.s8 %v288
    %v290 = vlaneseq
    %v291 = vshrl.u32 %v290, 7
    %v292 = vsub.s32 %v289, %v291
    %v293 = vrot.slane %v277, %v292
    %v295 = vunpack.c.l.s4 1966171168
    %v296 = vunpack.c.0.s8 %v295
    %v297 = vlaneseq
    %v298 = vshrl.u32 %v297, 7
    %v299 = vsub.s32 %v296, %v298
    %v300 = vrot.slane %v284, %v299
    %v302 = vunpack.c.l.s4 1966171168
    %v303 = vunpack.c.0.s8 %v302
    %v304 = vlaneseq
    %v305 = vshrl.u32 %v304, 7
    %v306 = vsub.s32 %v303, %v305
    %v307 = vrot.slane %v285, %v306
    %v309 = vunpack.c.l.s4 1966171168
    %v310 = vunpack.c.0.s8 %v309
    %v311 = vlaneseq
    %v312 = vshrl.u32 %v311, 7
    %v313 = vsub.s32 %v310, %v312
    %v314 = vrot.slane %v286, %v313
    %v315 = vcombine.high %v293, %v293
    %v316 = vcombine.high %v300, %v300
    %v317 = vcombine.high %v307, %v307
    %v318 = vcombine.high %v314, %v314
    %327 = vst [vmem:[#allocation8 + $0x1] sm:$0x1] %v293
    %328 = vst [vmem:[#allocation8 + $0x9] sm:$0x1] %v307
    %329 = vst [vmem:[#allocation8 + $0x11] sm:$0x1] %v315
    %330 = vst [vmem:[#allocation8 + $0x19] sm:$0x1] %v317
    %331 = vst [vmem:[#allocation8 + $0x21] sm:$0x1] %v300
    %332 = vst [vmem:[#allocation8 + $0x29] sm:$0x1] %v314
    %333 = vst [vmem:[#allocation8 + $0x31] sm:$0x1] %v316
    %334 = vst [vmem:[#allocation8 + $0x39] sm:$0x1] %v318
    %v336 = vcombine.high %v181, %v181
    %v338 = vunpack.c.l.s4 1966171168
    %v339 = vunpack.c.0.s8 %v338
    %v340 = vlaneseq
    %v341 = vshrl.u32 %v340, 7
    %v342 = vsub.s32 %v339, %v341
    %v343 = vrot.slane %v181, %v342
    %v345 = vunpack.c.l.s4 1966171168
    %v346 = vunpack.c.0.s8 %v345
    %v347 = vlaneseq
    %v348 = vshrl.u32 %v347, 7
    %v349 = vsub.s32 %v346, %v348
    %v350 = vrot.slane %v336, %v349
    %v351 = vcombine.high %v343, %v343
    %v352 = vcombine.high %v350, %v350
    %v354 = vunpack.c.l.s4 1966171168
    %v355 = vunpack.c.0.s8 %v354
    %v356 = vlaneseq
    %v357 = vshrl.u32 %v356, 7
    %v358 = vsub.s32 %v355, %v357
    %v359 = vrot.slane %v343, %v358
    %v361 = vunpack.c.l.s4 1966171168
    %v362 = vunpack.c.0.s8 %v361
    %v363 = vlaneseq
    %v364 = vshrl.u32 %v363, 7
    %v365 = vsub.s32 %v362, %v364
    %v366 = vrot.slane %v350, %v365
    %v368 = vunpack.c.l.s4 1966171168
    %v369 = vunpack.c.0.s8 %v368
    %v370 = vlaneseq
    %v371 = vshrl.u32 %v370, 7
    %v372 = vsub.s32 %v369, %v371
    %v373 = vrot.slane %v351, %v372
    %v375 = vunpack.c.l.s4 1966171168
    %v376 = vunpack.c.0.s8 %v375
    %v377 = vlaneseq
    %v378 = vshrl.u32 %v377, 7
    %v379 = vsub.s32 %v376, %v378
    %v380 = vrot.slane %v352, %v379
    %v381 = vcombine.high %v359, %v359
    %v382 = vcombine.high %v366, %v366
    %v383 = vcombine.high %v373, %v373
    %v384 = vcombine.high %v380, %v380
    %393 = vst [vmem:[#allocation8 + $0x2] sm:$0x1] %v359
    %394 = vst [vmem:[#allocation8 + $0xa] sm:$0x1] %v373
    %395 = vst [vmem:[#allocation8 + $0x12] sm:$0x1] %v381
    %396 = vst [vmem:[#allocation8 + $0x1a] sm:$0x1] %v383
    %397 = vst [vmem:[#allocation8 + $0x22] sm:$0x1] %v366
    %398 = vst [vmem:[#allocation8 + $0x2a] sm:$0x1] %v380
    %399 = vst [vmem:[#allocation8 + $0x32] sm:$0x1] %v382
    %400 = vst [vmem:[#allocation8 + $0x3a] sm:$0x1] %v384
    %v402 = vcombine.high %v184, %v184
    %v404 = vunpack.c.l.s4 1966171168
    %v405 = vunpack.c.0.s8 %v404
    %v406 = vlaneseq
    %v407 = vshrl.u32 %v406, 7
    %v408 = vsub.s32 %v405, %v407
    %v409 = vrot.slane %v184, %v408
    %v411 = vunpack.c.l.s4 1966171168
    %v412 = vunpack.c.0.s8 %v411
    %v413 = vlaneseq
    %v414 = vshrl.u32 %v413, 7
    %v415 = vsub.s32 %v412, %v414
    %v416 = vrot.slane %v402, %v415
    %v417 = vcombine.high %v409, %v409
    %v418 = vcombine.high %v416, %v416
    %v420 = vunpack.c.l.s4 1966171168
    %v421 = vunpack.c.0.s8 %v420
    %v422 = vlaneseq
    %v423 = vshrl.u32 %v422, 7
    %v424 = vsub.s32 %v421, %v423
    %v425 = vrot.slane %v409, %v424
    %v427 = vunpack.c.l.s4 1966171168
    %v428 = vunpack.c.0.s8 %v427
    %v429 = vlaneseq
    %v430 = vshrl.u32 %v429, 7
    %v431 = vsub.s32 %v428, %v430
    %v432 = vrot.slane %v416, %v431
    %v434 = vunpack.c.l.s4 1966171168
    %v435 = vunpack.c.0.s8 %v434
    %v436 = vlaneseq
    %v437 = vshrl.u32 %v436, 7
    %v438 = vsub.s32 %v435, %v437
    %v439 = vrot.slane %v417, %v438
    %v441 = vunpack.c.l.s4 1966171168
    %v442 = vunpack.c.0.s8 %v441
    %v443 = vlaneseq
    %v444 = vshrl.u32 %v443, 7
    %v445 = vsub.s32 %v442, %v444
    %v446 = vrot.slane %v418, %v445
    %v447 = vcombine.high %v425, %v425
    %v448 = vcombine.high %v432, %v432
    %v449 = vcombine.high %v439, %v439
    %v450 = vcombine.high %v446, %v446
    %459 = vst [vmem:[#allocation8 + $0x3] sm:$0x1] %v425
    %460 = vst [vmem:[#allocation8 + $0xb] sm:$0x1] %v439
    %461 = vst [vmem:[#allocation8 + $0x13] sm:$0x1] %v447
    %462 = vst [vmem:[#allocation8 + $0x1b] sm:$0x1] %v449
    %463 = vst [vmem:[#allocation8 + $0x23] sm:$0x1] %v432
    %464 = vst [vmem:[#allocation8 + $0x2b] sm:$0x1] %v446
    %465 = vst [vmem:[#allocation8 + $0x33] sm:$0x1] %v448
    %466 = vst [vmem:[#allocation8 + $0x3b] sm:$0x1] %v450
    %v468 = vcombine.high %v189, %v189
    %v470 = vunpack.c.l.s4 1966171168
    %v471 = vunpack.c.0.s8 %v470
    %v472 = vlaneseq
    %v473 = vshrl.u32 %v472, 7
    %v474 = vsub.s32 %v471, %v473
    %v475 = vrot.slane %v189, %v474
    %v477 = vunpack.c.l.s4 1966171168
    %v478 = vunpack.c.0.s8 %v477
    %v479 = vlaneseq
    %v480 = vshrl.u32 %v479, 7
    %v481 = vsub.s32 %v478, %v480
    %v482 = vrot.slane %v468, %v481
    %v483 = vcombine.high %v475, %v475
    %v484 = vcombine.high %v482, %v482
    %v486 = vunpack.c.l.s4 1966171168
    %v487 = vunpack.c.0.s8 %v486
    %v488 = vlaneseq
    %v489 = vshrl.u32 %v488, 7
    %v490 = vsub.s32 %v487, %v489
    %v491 = vrot.slane %v475, %v490
    %v493 = vunpack.c.l.s4 1966171168
    %v494 = vunpack.c.0.s8 %v493
    %v495 = vlaneseq
    %v496 = vshrl.u32 %v495, 7
    %v497 = vsub.s32 %v494, %v496
    %v498 = vrot.slane %v482, %v497
    %v500 = vunpack.c.l.s4 1966171168
    %v501 = vunpack.c.0.s8 %v500
    %v502 = vlaneseq
    %v503 = vshrl.u32 %v502, 7
    %v504 = vsub.s32 %v501, %v503
    %v505 = vrot.slane %v483, %v504
    %v507 = vunpack.c.l.s4 1966171168
    %v508 = vunpack.c.0.s8 %v507
    %v509 = vlaneseq
    %v510 = vshrl.u32 %v509, 7
    %v511 = vsub.s32 %v508, %v510
    %v512 = vrot.slane %v484, %v511
    %v513 = vcombine.high %v491, %v491
    %v514 = vcombine.high %v498, %v498
    %v515 = vcombine.high %v505, %v505
    %v516 = vcombine.high %v512, %v512
    %525 = vst [vmem:[#allocation8 + $0x4] sm:$0x1] %v491
    %526 = vst [vmem:[#allocation8 + $0xc] sm:$0x1] %v505
    %527 = vst [vmem:[#allocation8 + $0x14] sm:$0x1] %v513
    %528 = vst [vmem:[#allocation8 + $0x1c] sm:$0x1] %v515
    %529 = vst [vmem:[#allocation8 + $0x24] sm:$0x1] %v498
    %530 = vst [vmem:[#allocation8 + $0x2c] sm:$0x1] %v512
    %531 = vst [vmem:[#allocation8 + $0x34] sm:$0x1] %v514
    %532 = vst [vmem:[#allocation8 + $0x3c] sm:$0x1] %v516
    %v534 = vcombine.high %v192, %v192
    %v536 = vunpack.c.l.s4 1966171168
    %v537 = vunpack.c.0.s8 %v536
    %v538 = vlaneseq
    %v539 = vshrl.u32 %v538, 7
    %v540 = vsub.s32 %v537, %v539
    %v541 = vrot.slane %v192, %v540
    %v543 = vunpack.c.l.s4 1966171168
    %v544 = vunpack.c.0.s8 %v543
    %v545 = vlaneseq
    %v546 = vshrl.u32 %v545, 7
    %v547 = vsub.s32 %v544, %v546
    %v548 = vrot.slane %v534, %v547
    %v549 = vcombine.high %v541, %v541
    %v550 = vcombine.high %v548, %v548
    %v552 = vunpack.c.l.s4 1966171168
    %v553 = vunpack.c.0.s8 %v552
    %v554 = vlaneseq
    %v555 = vshrl.u32 %v554, 7
    %v556 = vsub.s32 %v553, %v555
    %v557 = vrot.slane %v541, %v556
    %v559 = vunpack.c.l.s4 1966171168
    %v560 = vunpack.c.0.s8 %v559
    %v561 = vlaneseq
    %v562 = vshrl.u32 %v561, 7
    %v563 = vsub.s32 %v560, %v562
    %v564 = vrot.slane %v548, %v563
    %v566 = vunpack.c.l.s4 1966171168
    %v567 = vunpack.c.0.s8 %v566
    %v568 = vlaneseq
    %v569 = vshrl.u32 %v568, 7
    %v570 = vsub.s32 %v567, %v569
    %v571 = vrot.slane %v549, %v570
    %v573 = vunpack.c.l.s4 1966171168
    %v574 = vunpack.c.0.s8 %v573
    %v575 = vlaneseq
    %v576 = vshrl.u32 %v575, 7
    %v577 = vsub.s32 %v574, %v576
    %v578 = vrot.slane %v550, %v577
    %v579 = vcombine.high %v557, %v557
    %v580 = vcombine.high %v564, %v564
    %v581 = vcombine.high %v571, %v571
    %v582 = vcombine.high %v578, %v578
    %591 = vst [vmem:[#allocation8 + $0x5] sm:$0x1] %v557
    %592 = vst [vmem:[#allocation8 + $0xd] sm:$0x1] %v571
    %593 = vst [vmem:[#allocation8 + $0x15] sm:$0x1] %v579
    %594 = vst [vmem:[#allocation8 + $0x1d] sm:$0x1] %v581
    %595 = vst [vmem:[#allocation8 + $0x25] sm:$0x1] %v564
    %596 = vst [vmem:[#allocation8 + $0x2d] sm:$0x1] %v578
    %597 = vst [vmem:[#allocation8 + $0x35] sm:$0x1] %v580
    %598 = vst [vmem:[#allocation8 + $0x3d] sm:$0x1] %v582
    %v600 = vcombine.high %v197, %v197
    %v602 = vunpack.c.l.s4 1966171168
    %v603 = vunpack.c.0.s8 %v602
    %v604 = vlaneseq
    %v605 = vshrl.u32 %v604, 7
    %v606 = vsub.s32 %v603, %v605
    %v607 = vrot.slane %v197, %v606
    %v609 = vunpack.c.l.s4 1966171168
    %v610 = vunpack.c.0.s8 %v609
    %v611 = vlaneseq
    %v612 = vshrl.u32 %v611, 7
    %v613 = vsub.s32 %v610, %v612
    %v614 = vrot.slane %v600, %v613
    %v615 = vcombine.high %v607, %v607
    %v616 = vcombine.high %v614, %v614
    %v618 = vunpack.c.l.s4 1966171168
    %v619 = vunpack.c.0.s8 %v618
    %v620 = vlaneseq
    %v621 = vshrl.u32 %v620, 7
    %v622 = vsub.s32 %v619, %v621
    %v623 = vrot.slane %v607, %v622
    %v625 = vunpack.c.l.s4 1966171168
    %v626 = vunpack.c.0.s8 %v625
    %v627 = vlaneseq
    %v628 = vshrl.u32 %v627, 7
    %v629 = vsub.s32 %v626, %v628
    %v630 = vrot.slane %v614, %v629
    %v632 = vunpack.c.l.s4 1966171168
    %v633 = vunpack.c.0.s8 %v632
    %v634 = vlaneseq
    %v635 = vshrl.u32 %v634, 7
    %v636 = vsub.s32 %v633, %v635
    %v637 = vrot.slane %v615, %v636
    %v639 = vunpack.c.l.s4 1966171168
    %v640 = vunpack.c.0.s8 %v639
    %v641 = vlaneseq
    %v642 = vshrl.u32 %v641, 7
    %v643 = vsub.s32 %v640, %v642
    %v644 = vrot.slane %v616, %v643
    %v645 = vcombine.high %v623, %v623
    %v646 = vcombine.high %v630, %v630
    %v647 = vcombine.high %v637, %v637
    %v648 = vcombine.high %v644, %v644
    %657 = vst [vmem:[#allocation8 + $0x6] sm:$0x1] %v623
    %658 = vst [vmem:[#allocation8 + $0xe] sm:$0x1] %v637
    %659 = vst [vmem:[#allocation8 + $0x16] sm:$0x1] %v645
    %660 = vst [vmem:[#allocation8 + $0x1e] sm:$0x1] %v647
    %661 = vst [vmem:[#allocation8 + $0x26] sm:$0x1] %v630
    %662 = vst [vmem:[#allocation8 + $0x2e] sm:$0x1] %v644
    %663 = vst [vmem:[#allocation8 + $0x36] sm:$0x1] %v646
    %664 = vst [vmem:[#allocation8 + $0x3e] sm:$0x1] %v648
    %v666 = vcombine.high %v200, %v200
    %v668 = vunpack.c.l.s4 1966171168
    %v669 = vunpack.c.0.s8 %v668
    %v670 = vlaneseq
    %v671 = vshrl.u32 %v670, 7
    %v672 = vsub.s32 %v669, %v671
    %v673 = vrot.slane %v200, %v672
    %v675 = vunpack.c.l.s4 1966171168
    %v676 = vunpack.c.0.s8 %v675
    %v677 = vlaneseq
    %v678 = vshrl.u32 %v677, 7
    %v679 = vsub.s32 %v676, %v678
    %v680 = vrot.slane %v666, %v679
    %v681 = vcombine.high %v673, %v673
    %v682 = vcombine.high %v680, %v680
    %v684 = vunpack.c.l.s4 1966171168
    %v685 = vunpack.c.0.s8 %v684
    %v686 = vlaneseq
    %v687 = vshrl.u32 %v686, 7
    %v688 = vsub.s32 %v685, %v687
    %v689 = vrot.slane %v673, %v688
    %v691 = vunpack.c.l.s4 1966171168
    %v692 = vunpack.c.0.s8 %v691
    %v693 = vlaneseq
    %v694 = vshrl.u32 %v693, 7
    %v695 = vsub.s32 %v692, %v694
    %v696 = vrot.slane %v680, %v695
    %v698 = vunpack.c.l.s4 1966171168
    %v699 = vunpack.c.0.s8 %v698
    %v700 = vlaneseq
    %v701 = vshrl.u32 %v700, 7
    %v702 = vsub.s32 %v699, %v701
    %v703 = vrot.slane %v681, %v702
    %v705 = vunpack.c.l.s4 1966171168
    %v706 = vunpack.c.0.s8 %v705
    %v707 = vlaneseq
    %v708 = vshrl.u32 %v707, 7
    %v709 = vsub.s32 %v706, %v708
    %v710 = vrot.slane %v682, %v709
    %v711 = vcombine.high %v689, %v689
    %v712 = vcombine.high %v696, %v696
    %v713 = vcombine.high %v703, %v703
    %v714 = vcombine.high %v710, %v710
    %723 = vst [vmem:[#allocation8 + $0x7] sm:$0x1] %v689
    %724 = vst [vmem:[#allocation8 + $0xf] sm:$0x1] %v703
    %725 = vst [vmem:[#allocation8 + $0x17] sm:$0x1] %v711
    %726 = vst [vmem:[#allocation8 + $0x1f] sm:$0x1] %v713
    %727 = vst [vmem:[#allocation8 + $0x27] sm:$0x1] %v696
    %728 = vst [vmem:[#allocation8 + $0x2f] sm:$0x1] %v710
    %729 = vst [vmem:[#allocation8 + $0x37] sm:$0x1] %v712
    %730 = vst [vmem:[#allocation8 + $0x3f] sm:$0x1] %v714
    // Predicated region
    $region26: #{_forward_impl.9} parent=1 // pred_check
      _
    $region27: #{_forward_impl.9} parent=1 // pred_check_branch
      %732 = sbr.rel (0) target = $region29
    $region28: #{_forward_impl.9} parent=1 // pred_region
      %s734 = ssub.s32 1024, 1024
      %735 = vsyncadd [#allocation4], %s734
      %s736 = sshll.u32 [#allocation8], 4
      %s737 = int_to_ptr.vmem [resolvable:$true] %s736
      %742 = dma.vmem_to_hbm [thread:$0]  %s737, 1024, %s3, [#allocation4], 128, 128, 8
    $region29: #{_forward_impl.9} parent=1 // pred_fallthru
      _
    // Predicated region
    $region30: #{_forward_impl.9} parent=1 // pred_check
      _
    $region31: #{_forward_impl.9} parent=1 // pred_check_branch
      %744 = sbr.rel (0) target = $region33
    $region32: #{_forward_impl.9} parent=1 // pred_region
      %745 = dma.done [#allocation4], 1024
    $region33: #{_forward_impl.9} parent=1 // pred_fallthru
      _
    %746 = vsyncpa [#allocation3], 1
    %747 = vsyncpa [#allocation6], 1
    %748 = vsyncpa [#allocation4], 1

// kernel: _forward_impl.6
$region0: #{_forward_impl.6}
  #allocation0 [shape = 'u32[]', space=smem, size = 0x4, offset = 0x4, fixed_abs, tag = 'smem constant byte address 0x4 - core index']
  #allocation1 [shape = 'u32[144,128]{1,0:T(1,128)}', space=vmem, size = 0x12000, scoped, tag = 'internal scratch']
  #allocation2 [shape = 'bf16[128,512]{1,0:T(16,128)(2,1)}', space=vmem, size = 0x20000, scoped, tag = 'scratch operand']
  #allocation3 [shape = 's32[1]{0}', space=sflag, size = 0x4, scoped, tag = 'scratch operand']
  #allocation14 [shape = 's32[]', space=sflag, size = 0x4, offset = 0, fixed_abs, tag = 'sflag constant byte address 0x0 - dummy sync flag']
  %s0 = inlined_call_operand.hbm [shape: f32[8,8,512], index: 0, kind: input, shape index: {}]
  %s1 = inlined_call_operand.hbm [shape: f32[8,128], index: 1, kind: input, shape index: {}]
  %s2 = inlined_call_operand.hbm [shape: f32[8,128], index: 2, kind: input, shape index: {}]
  %s3 = inlined_call_operand.hbm [shape: bf16[128,512], index: 3, kind: input, shape index: {}]
  %s4 = inlined_call_operand.hbm [shape: f32[8,8,128], index: 4, kind: output, shape index: {0}]
  %s5 = inlined_call_operand.hbm [shape: f32[8,128], index: 5, kind: output, shape index: {1}]
  %s6 = inlined_call_operand.hbm [shape: f32[8,128], index: 6, kind: output, shape index: {2}]
  %7 = xla_tuple %s4, %s5, %s6
  %s8 = sld [smem:[#allocation0]]
  $region54: #{_forward_impl.6} parent=0
    _
  %s10 = ssub.s32 1, %s8
  %s11 = scalar_select 0, %s10, %s8
  $region1: #{_forward_impl.6} parent=0
    #allocation4 [shape = 'u8[131072]{0}', space=vmem, size = 0x20000, scoped, tag = 'input window, operand 0, single buffered']
    #allocation5 [shape = 's32[1]{0}', space=sflag, size = 0x4, scoped, tag = 'scoped memory for _forward_impl.6']
    #allocation6 [shape = 's32[1]{0}', space=sflag, size = 0x4, scoped, tag = 'scoped memory for _forward_impl.6']
    #allocation7 [shape = 'u8[4096]{0}', space=vmem, size = 0x1000, scoped, tag = 'input window, operand 1, single buffered']
    #allocation8 [shape = 's32[1]{0}', space=sflag, size = 0x4, scoped, tag = 'scoped memory for _forward_impl.6']
    #allocation9 [shape = 'u8[4096]{0}', space=vmem, size = 0x1000, scoped, tag = 'input window, operand 2, single buffered']
    #allocation10 [shape = 'u8[32768]{0}', space=vmem, size = 0x8000, scoped, tag = 'output window, operand 0, single buffered']
    #allocation11 [shape = 'u8[4096]{0}', space=vmem, size = 0x1000, scoped, tag = 'output window, operand 1, single buffered']
    #allocation12 [shape = 's32[1]{0}', space=sflag, size = 0x4, scoped, tag = 'scoped memory for _forward_impl.6']
    #allocation13 [shape = 'u8[4096]{0}', space=vmem, size = 0x1000, scoped, tag = 'output window, operand 2, single buffered']
    %12 = vsyncpa [#allocation5], 0
    %13 = vsyncpa [#allocation8], 0
    %14 = vsyncpa [#allocation6], 0
    %15 = vsyncpa [#allocation12], 0
    // Predicated region
    $region2: #{_forward_impl.6} parent=1 // pred_check
      _
    $region3: #{_forward_impl.6} parent=1 // pred_check_branch
      %17 = sbr.rel (0) target = $region5
    $region4: #{_forward_impl.6} parent=1 // pred_region
      %s19 = ssub.s32 4096, 4096
      %20 = vsyncadd [#allocation5], %s19
      %s21 = sshll.u32 [#allocation4], 4
      %s22 = int_to_ptr.vmem [resolvable:$true] %s21
      %27 = dma.hbm_to_vmem [thread:$0]  %s0, 4096, %s22, [#allocation5], 512, 512, 32
    $region5: #{_forward_impl.6} parent=1 // pred_fallthru
      _
    // Predicated region
    $region6: #{_forward_impl.6} parent=1 // pred_check
      _
    $region7: #{_forward_impl.6} parent=1 // pred_check_branch
      %29 = sbr.rel (0) target = $region9
    $region8: #{_forward_impl.6} parent=1 // pred_region
      %s31 = ssub.s32 128, 128
      %32 = vsyncadd [#allocation8], %s31
      %s34 = sshll.u32 [#allocation7], 4
      %s35 = int_to_ptr.vmem [resolvable:$true] %s34
      %37 = dma.hbm_to_vmem [thread:$0]  %s1, 128, %s35, [#allocation8]
    $region9: #{_forward_impl.6} parent=1 // pred_fallthru
      _
    // Predicated region
    $region10: #{_forward_impl.6} parent=1 // pred_check
      _
    $region11: #{_forward_impl.6} parent=1 // pred_check_branch
      %39 = sbr.rel (0) target = $region13
    $region12: #{_forward_impl.6} parent=1 // pred_region
      %s41 = ssub.s32 128, 128
      %42 = vsyncadd [#allocation8], %s41
      %s44 = sshll.u32 [#allocation9], 4
      %s45 = int_to_ptr.vmem [resolvable:$true] %s44
      %47 = dma.hbm_to_vmem [thread:$0]  %s2, 128, %s45, [#allocation8]
    $region13: #{_forward_impl.6} parent=1 // pred_fallthru
      _
    // Predicated region
    $region14: #{_forward_impl.6} parent=1 // pred_check
      _
    $region15: #{_forward_impl.6} parent=1 // pred_check_branch
      %49 = sbr.rel (0) target = $region17
    $region16: #{_forward_impl.6} parent=1 // pred_region
      %50 = dma.done [#allocation5], 4096
    $region17: #{_forward_impl.6} parent=1 // pred_fallthru
      _
    // Predicated region
    $region18: #{_forward_impl.6} parent=1 // pred_check
      _
    $region19: #{_forward_impl.6} parent=1 // pred_check_branch
      %52 = sbr.rel (0) target = $region21
    $region20: #{_forward_impl.6} parent=1 // pred_region
      %53 = dma.done [#allocation8], 128
    $region21: #{_forward_impl.6} parent=1 // pred_fallthru
      _
    // Predicated region
    $region22: #{_forward_impl.6} parent=1 // pred_check
      _
    $region23: #{_forward_impl.6} parent=1 // pred_check_branch
      %55 = sbr.rel (0) target = $region25
    $region24: #{_forward_impl.6} parent=1 // pred_region
      %56 = dma.done [#allocation8], 128
    $region25: #{_forward_impl.6} parent=1 // pred_fallthru
      _
    %p58 = scmp.eq.s32.totalorder 0, 0
    // Predicated region
    $region26: #{_forward_impl.6} parent=1 // pred_check
      %p59 = pneg %p58
    $region27: #{_forward_impl.6} parent=1 // pred_check_branch
      %61 = sbr.rel (%p59) target = $region29
    $region28: #{_forward_impl.6} parent=1 // pred_region
      #allocation15 [shape = 'u32[9]{0}', space=smem, size = 0x24, scoped, tag = 'DMA stride descriptor']
      %s63 = sshll.u32 1, 14
      %s64 = sxor.u32 4294967295, %s63
      %s66 = sld [smem:[#allocation0]]
      %s67 = sadd.s32 2, %s66
      %s69 = sshll.u32 7, 26
      %s70 = sxor.u32 4294967295, %s69
      %s71 = sand.u32 0, %s70
      %s72 = sshll.u32 %s67, 26
      %s73 = sor.u32 %s71, %s72
      %s74 = sshll.u32 [#allocation2], 4
      %s75 = int_to_ptr.vmem [resolvable:$true] %s74
      %78 = sst [smem:[#allocation15]] 512
      %s79 = scalar_lea.smem [#allocation15], 1
      %80 = sst [smem:[%s79]] 512
      %s81 = scalar_lea.smem [#allocation15], 2
      %82 = sst [smem:[%s81]] 4
      %s83 = scalar_lea.smem [#allocation15], 3
      %84 = sst [smem:[%s83]] 64
      %s85 = scalar_lea.smem [#allocation15], 4
      %86 = sst [smem:[%s85]] 128
      %s87 = scalar_lea.smem [#allocation15], 5
      %88 = sst [smem:[%s87]] 2
      %s89 = scalar_lea.smem [#allocation15], 6
      %90 = sst [smem:[%s89]] 256
      %s91 = scalar_lea.smem [#allocation15], 7
      %92 = sst [smem:[%s91]] 64
      %s93 = scalar_lea.smem [#allocation15], 8
      %94 = sst [smem:[%s93]] 4
      %96 = dma.general %s3, 4096, %s75, [#allocation3], [#allocation14], [#allocation15], %s73, 0
      %s97 = smul.u32 4, 16
      %s98 = smul.u32 %s97, 4
      %s99 = sshll.u32 %s98, 4
      %100 = dma.done [#allocation3], %s99
      %v101 = vld [vmem:[#allocation7] sm:$0xff]
      %102 = vst [vmem:[#allocation11] sm:$0xff] %v101
      %v103 = vld [vmem:[#allocation9] sm:$0xff]
      %104 = vst [vmem:[#allocation13] sm:$0xff] %v103
    $region29: #{_forward_impl.6} parent=1 // pred_fallthru
      _
    %v105 = vld [vmem:[#allocation2] sm:$0xff]
    %v106 = vld [vmem:[#allocation2 + $0x8] sm:$0xff]
    %v107 = vld [vmem:[#allocation2 + $0x10] sm:$0xff]
    %v108 = vld [vmem:[#allocation2 + $0x18] sm:$0xff]
    %v109 = vld [vmem:[#allocation2 + $0x20] sm:$0xff]
    %v110 = vld [vmem:[#allocation2 + $0x28] sm:$0xff]
    %v111 = vld [vmem:[#allocation2 + $0x30] sm:$0xff]
    %v112 = vld [vmem:[#allocation2 + $0x38] sm:$0xff]
    %v113 = vld [vmem:[#allocation2 + $0x40] sm:$0xff]
    %v114 = vld [vmem:[#allocation2 + $0x48] sm:$0xff]
    %v115 = vld [vmem:[#allocation2 + $0x50] sm:$0xff]
    %v116 = vld [vmem:[#allocation2 + $0x58] sm:$0xff]
    %v117 = vld [vmem:[#allocation2 + $0x60] sm:$0xff]
    %v118 = vld [vmem:[#allocation2 + $0x68] sm:$0xff]
    %v119 = vld [vmem:[#allocation2 + $0x70] sm:$0xff]
    %v120 = vld [vmem:[#allocation2 + $0x78] sm:$0xff]
    %v121 = vld [vmem:[#allocation2 + $0x80] sm:$0xff]
    %v122 = vld [vmem:[#allocation2 + $0x88] sm:$0xff]
    %v123 = vld [vmem:[#allocation2 + $0x90] sm:$0xff]
    %v124 = vld [vmem:[#allocation2 + $0x98] sm:$0xff]
    %v125 = vld [vmem:[#allocation2 + $0xa0] sm:$0xff]
    %v126 = vld [vmem:[#allocation2 + $0xa8] sm:$0xff]
    %v127 = vld [vmem:[#allocation2 + $0xb0] sm:$0xff]
    %v128 = vld [vmem:[#allocation2 + $0xb8] sm:$0xff]
    %v129 = vld [vmem:[#allocation2 + $0xc0] sm:$0xff]
    %v130 = vld [vmem:[#allocation2 + $0xc8] sm:$0xff]
    %v131 = vld [vmem:[#allocation2 + $0xd0] sm:$0xff]
    %v132 = vld [vmem:[#allocation2 + $0xd8] sm:$0xff]
    %v133 = vld [vmem:[#allocation2 + $0xe0] sm:$0xff]
    %v134 = vld [vmem:[#allocation2 + $0xe8] sm:$0xff]
    %v135 = vld [vmem:[#allocation2 + $0xf0] sm:$0xff]
    %v136 = vld [vmem:[#allocation2 + $0xf8] sm:$0xff]
    %v137 = vld [vmem:[#allocation11] sm:$0xff]
    %v138 = vld [vmem:[#allocation13] sm:$0xff]
    %v139 = vld [vmem:[#allocation4] sm:$0xff]
    %v140 = vld [vmem:[#allocation4 + $0x8] sm:$0xff]
    %v141 = vld [vmem:[#allocation4 + $0x10] sm:$0xff]
    %v142 = vld [vmem:[#allocation4 + $0x18] sm:$0xff]
    %v143 = vpack.c.bf16 %v137, %v137
    %144 = vmatprep.subr.bf16.mxu0 %v106
    %145 = vmatpush1.bf16.msra.mxu0 %v105
    %146 = vmatprep.subr.bf16.mxu0 %v110
    %147 = vmatpush1.bf16.msra.mxu0 %v109
    %148 = vmatprep.subr.bf16.mxu0 %v114
    %149 = vmatpush1.bf16.msra.mxu0 %v113
    %150 = vmatprep.subr.bf16.mxu0 %v118
    %151 = vmatpush1.bf16.msra.mxu0 %v117
    %152 = vmatprep.subr.bf16.mxu0 %v122
    %153 = vmatpush1.bf16.msra.mxu0 %v121
    %154 = vmatprep.subr.bf16.mxu0 %v126
    %155 = vmatpush1.bf16.msra.mxu0 %v125
    %156 = vmatprep.subr.bf16.mxu0 %v130
    %157 = vmatpush1.bf16.msra.mxu0 %v129
    %158 = vmatprep.subr.bf16.mxu0 %v134
    %159 = vmatpush1.bf16.msra.mxu0 %v133
    %160 = vmatprep.subr.bf16.mxu0 0
    %161 = vmatpush1.bf16.msra.mxu0 0
    %162 = vmatprep.subr.bf16.mxu0 0
    %163 = vmatpush1.bf16.msra.mxu0 0
    %164 = vmatprep.subr.bf16.mxu0 0
    %165 = vmatpush1.bf16.msra.mxu0 0
    %166 = vmatprep.subr.bf16.mxu0 0
    %167 = vmatpush1.bf16.msra.mxu0 0
    %168 = vmatprep.subr.bf16.mxu0 0
    %169 = vmatpush1.bf16.msra.mxu0 0
    %170 = vmatprep.subr.bf16.mxu0 0
    %171 = vmatpush1.bf16.msra.mxu0 0
    %172 = vmatprep.subr.bf16.mxu0 0
    %173 = vmatpush1.bf16.msra.mxu0 0
    %174 = vmatprep.subr.bf16.mxu0 0
    %175 = vmatpush1.bf16.msra.mxu0 0
    %176 = vmatprep.mubr.bf16.mxu0 0
    %177 = vmatmul.mubr.bf16.gmra.mrb[0].mxu0 %v143
    %v178 = vpop.f32.mrb[0].mxu0
    %v179 = vadd.f32 0.0, %v178
    %v180 = vpop.f32.mrb[0].mxu0
    %v181 = vadd.f32 0.0, %v180
    %v182 = vpop.f32.mrb[0].mxu0
    %v183 = vpop.f32.mrb[0].mxu0
    %184 = vdwg.mxu0
    %185 = vmatprep.subr.bf16.mxu0 %v108
    %186 = vmatpush1.bf16.msra.mxu0 %v107
    %187 = vmatprep.subr.bf16.mxu0 %v112
    %188 = vmatpush1.bf16.msra.mxu0 %v111
    %189 = vmatprep.subr.bf16.mxu0 %v116
    %190 = vmatpush1.bf16.msra.mxu0 %v115
    %191 = vmatprep.subr.bf16.mxu0 %v120
    %192 = vmatpush1.bf16.msra.mxu0 %v119
    %193 = vmatprep.subr.bf16.mxu0 %v124
    %194 = vmatpush1.bf16.msra.mxu0 %v123
    %195 = vmatprep.subr.bf16.mxu0 %v128
    %196 = vmatpush1.bf16.msra.mxu0 %v127
    %197 = vmatprep.subr.bf16.mxu0 %v132
    %198 = vmatpush1.bf16.msra.mxu0 %v131
    %199 = vmatprep.subr.bf16.mxu0 %v136
    %200 = vmatpush1.bf16.msra.mxu0 %v135
    %201 = vmatprep.subr.bf16.mxu0 0
    %202 = vmatpush1.bf16.msra.mxu0 0
    %203 = vmatprep.subr.bf16.mxu0 0
    %204 = vmatpush1.bf16.msra.mxu0 0
    %205 = vmatprep.subr.bf16.mxu0 0
    %206 = vmatpush1.bf16.msra.mxu0 0
    %207 = vmatprep.subr.bf16.mxu0 0
    %208 = vmatpush1.bf16.msra.mxu0 0
    %209 = vmatprep.subr.bf16.mxu0 0
    %210 = vmatpush1.bf16.msra.mxu0 0
    %211 = vmatprep.subr.bf16.mxu0 0
    %212 = vmatpush1.bf16.msra.mxu0 0
    %213 = vmatprep.subr.bf16.mxu0 0
    %214 = vmatpush1.bf16.msra.mxu0 0
    %215 = vmatprep.subr.bf16.mxu0 0
    %216 = vmatpush1.bf16.msra.mxu0 0
    %217 = vmatprep.mubr.bf16.mxu0 0
    %218 = vmatmul.mubr.bf16.gmra.mrb[0].mxu0 %v143
    %v219 = vpop.f32.mrb[0].mxu0
    %v220 = vadd.f32 0.0, %v219
    %v221 = vpop.f32.mrb[0].mxu0
    %v222 = vadd.f32 0.0, %v221
    %v223 = vpop.f32.mrb[0].mxu0
    %v224 = vpop.f32.mrb[0].mxu0
    %225 = vdwg.mxu0
    %v226 = vadd.f32 %v139, %v179
    %v227 = vadd.f32 %v140, %v181
    %v228 = vadd.f32 %v141, %v220
    %v229 = vadd.f32 %v142, %v222
    %v230 = vxor.u32 %v226, 2147483648
    %v231 = vmul.f32 %v230, 1.442695
    %v232 = vpow.pop %v231
    %v233 = vadd.f32 %v232, 1.0
    %v234 = vrcp.pop %v233
    %v235 = vmul.f32 1.0, %v234
    %v236 = vxor.u32 %v227, 2147483648
    %v237 = vmul.f32 %v236, 1.442695
    %v238 = vpow.pop %v237
    %v239 = vadd.f32 %v238, 1.0
    %v240 = vrcp.pop %v239
    %v241 = vmul.f32 1.0, %v240
    %v242 = vtanh.pop %v228
    %v243 = vxor.u32 %v229, 2147483648
    %v244 = vmul.f32 %v243, 1.442695
    %v245 = vpow.pop %v244
    %v246 = vadd.f32 %v245, 1.0
    %v247 = vrcp.pop %v246
    %v248 = vmul.f32 1.0, %v247
    %v249 = vmul.f32 %v241, %v138
    %v250 = vmul.f32 %v235, %v242
    %v251 = vadd.f32 %v249, %v250
    %v252 = vtanh.pop %v251
    %v253 = vmul.f32 %v248, %v252
    %254 = vst [vmem:[#allocation10] sm:$0xff] %v253
    %s255 = scalar_lea.vmem [#allocation4], 32
    %v256 = vld [vmem:[%s255] sm:$0xff]
    %v257 = vld [vmem:[%s255 + $0x8] sm:$0xff]
    %v258 = vld [vmem:[%s255 + $0x10] sm:$0xff]
    %v259 = vld [vmem:[%s255 + $0x18] sm:$0xff]
    %v260 = vpack.c.bf16 %v253, %v253
    %261 = vmatprep.subr.bf16.mxu0 %v106
    %262 = vmatpush1.bf16.msra.mxu0 %v105
    %263 = vmatprep.subr.bf16.mxu0 %v110
    %264 = vmatpush1.bf16.msra.mxu0 %v109
    %265 = vmatprep.subr.bf16.mxu0 %v114
    %266 = vmatpush1.bf16.msra.mxu0 %v113
    %267 = vmatprep.subr.bf16.mxu0 %v118
    %268 = vmatpush1.bf16.msra.mxu0 %v117
    %269 = vmatprep.subr.bf16.mxu0 %v122
    %270 = vmatpush1.bf16.msra.mxu0 %v121
    %271 = vmatprep.subr.bf16.mxu0 %v126
    %272 = vmatpush1.bf16.msra.mxu0 %v125
    %273 = vmatprep.subr.bf16.mxu0 %v130
    %274 = vmatpush1.bf16.msra.mxu0 %v129
    %275 = vmatprep.subr.bf16.mxu0 %v134
    %276 = vmatpush1.bf16.msra.mxu0 %v133
    %277 = vmatprep.subr.bf16.mxu0 0
    %278 = vmatpush1.bf16.msra.mxu0 0
    %279 = vmatprep.subr.bf16.mxu0 0
    %280 = vmatpush1.bf16.msra.mxu0 0
    %281 = vmatprep.subr.bf16.mxu0 0
    %282 = vmatpush1.bf16.msra.mxu0 0
    %283 = vmatprep.subr.bf16.mxu0 0
    %284 = vmatpush1.bf16.msra.mxu0 0
    %285 = vmatprep.subr.bf16.mxu0 0
    %286 = vmatpush1.bf16.msra.mxu0 0
    %287 = vmatprep.subr.bf16.mxu0 0
    %288 = vmatpush1.bf16.msra.mxu0 0
    %289 = vmatprep.subr.bf16.mxu0 0
    %290 = vmatpush1.bf16.msra.mxu0 0
    %291 = vmatprep.subr.bf16.mxu0 0
    %292 = vmatpush1.bf16.msra.mxu0 0
    %293 = vmatprep.mubr.bf16.mxu0 0
    %294 = vmatmul.mubr.bf16.gmra.mrb[0].mxu0 %v260
    %v295 = vpop.f32.mrb[0].mxu0
    %v296 = vadd.f32 0.0, %v295
    %v297 = vpop.f32.mrb[0].mxu0
    %v298 = vadd.f32 0.0, %v297
    %v299 = vpop.f32.mrb[0].mxu0
    %v300 = vpop.f32.mrb[0].mxu0
    %301 = vdwg.mxu0
    %302 = vmatprep.subr.bf16.mxu0 %v108
    %303 = vmatpush1.bf16.msra.mxu0 %v107
    %304 = vmatprep.subr.bf16.mxu0 %v112
    %305 = vmatpush1.bf16.msra.mxu0 %v111
    %306 = vmatprep.subr.bf16.mxu0 %v116
    %307 = vmatpush1.bf16.msra.mxu0 %v115
    %308 = vmatprep.subr.bf16.mxu0 %v120
    %309 = vmatpush1.bf16.msra.mxu0 %v119
    %310 = vmatprep.subr.bf16.mxu0 %v124
    %311 = vmatpush1.bf16.msra.mxu0 %v123
    %312 = vmatprep.subr.bf16.mxu0 %v128
    %313 = vmatpush1.bf16.msra.mxu0 %v127
    %314 = vmatprep.subr.bf16.mxu0 %v132
    %315 = vmatpush1.bf16.msra.mxu0 %v131
    %316 = vmatprep.subr.bf16.mxu0 %v136
    %317 = vmatpush1.bf16.msra.mxu0 %v135
    %318 = vmatprep.subr.bf16.mxu0 0
    %319 = vmatpush1.bf16.msra.mxu0 0
    %320 = vmatprep.subr.bf16.mxu0 0
    %321 = vmatpush1.bf16.msra.mxu0 0
    %322 = vmatprep.subr.bf16.mxu0 0
    %323 = vmatpush1.bf16.msra.mxu0 0
    %324 = vmatprep.subr.bf16.mxu0 0
    %325 = vmatpush1.bf16.msra.mxu0 0
    %326 = vmatprep.subr.bf16.mxu0 0
    %327 = vmatpush1.bf16.msra.mxu0 0
    %328 = vmatprep.subr.bf16.mxu0 0
    %329 = vmatpush1.bf16.msra.mxu0 0
    %330 = vmatprep.subr.bf16.mxu0 0
    %331 = vmatpush1.bf16.msra.mxu0 0
    %332 = vmatprep.subr.bf16.mxu0 0
    %333 = vmatpush1.bf16.msra.mxu0 0
    %334 = vmatprep.mubr.bf16.mxu0 0
    %335 = vmatmul.mubr.bf16.gmra.mrb[0].mxu0 %v260
    %v336 = vpop.f32.mrb[0].mxu0
    %v337 = vadd.f32 0.0, %v336
    %v338 = vpop.f32.mrb[0].mxu0
    %v339 = vadd.f32 0.0, %v338
    %v340 = vpop.f32.mrb[0].mxu0
    %v341 = vpop.f32.mrb[0].mxu0
    %342 = vdwg.mxu0
    %v343 = vadd.f32 %v256, %v296
    %v344 = vadd.f32 %v257, %v298
    %v345 = vadd.f32 %v258, %v337
    %v346 = vadd.f32 %v259, %v339
    %v347 = vxor.u32 %v343, 2147483648
    %v348 = vmul.f32 %v347, 1.442695
    %v349 = vpow.pop %v348
    %v350 = vadd.f32 %v349, 1.0
    %v351 = vrcp.pop %v350
    %v352 = vmul.f32 1.0, %v351
    %v353 = vxor.u32 %v344, 2147483648
    %v354 = vmul.f32 %v353, 1.442695
    %v355 = vpow.pop %v354
    %v356 = vadd.f32 %v355, 1.0
    %v357 = vrcp.pop %v356
    %v358 = vmul.f32 1.0, %v357
    %v359 = vtanh.pop %v345
    %v360 = vxor.u32 %v346, 2147483648
    %v361 = vmul.f32 %v360, 1.442695
    %v362 = vpow.pop %v361
    %v363 = vadd.f32 %v362, 1.0
    %v364 = vrcp.pop %v363
    %v365 = vmul.f32 1.0, %v364
    %v366 = vmul.f32 %v358, %v251
    %v367 = vmul.f32 %v352, %v359
    %v368 = vadd.f32 %v366, %v367
    %v369 = vtanh.pop %v368
    %v370 = vmul.f32 %v365, %v369
    %s371 = scalar_lea.vmem [#allocation10], 8
    %372 = vst [vmem:[%s371] sm:$0xff] %v370
    %s373 = scalar_lea.vmem [#allocation4], 64
    %v374 = vld [vmem:[%s373] sm:$0xff]
    %v375 = vld [vmem:[%s373 + $0x8] sm:$0xff]
    %v376 = vld [vmem:[%s373 + $0x10] sm:$0xff]
    %v377 = vld [vmem:[%s373 + $0x18] sm:$0xff]
    %v378 = vpack.c.bf16 %v370, %v370
    %379 = vmatprep.subr.bf16.mxu0 %v106
    %380 = vmatpush1.bf16.msra.mxu0 %v105
    %381 = vmatprep.subr.bf16.mxu0 %v110
    %382 = vmatpush1.bf16.msra.mxu0 %v109
    %383 = vmatprep.subr.bf16.mxu0 %v114
    %384 = vmatpush1.bf16.msra.mxu0 %v113
    %385 = vmatprep.subr.bf16.mxu0 %v118
    %386 = vmatpush1.bf16.msra.mxu0 %v117
    %387 = vmatprep.subr.bf16.mxu0 %v122
    %388 = vmatpush1.bf16.msra.mxu0 %v121
    %389 = vmatprep.subr.bf16.mxu0 %v126
    %390 = vmatpush1.bf16.msra.mxu0 %v125
    %391 = vmatprep.subr.bf16.mxu0 %v130
    %392 = vmatpush1.bf16.msra.mxu0 %v129
    %393 = vmatprep.subr.bf16.mxu0 %v134
    %394 = vmatpush1.bf16.msra.mxu0 %v133
    %395 = vmatprep.subr.bf16.mxu0 0
    %396 = vmatpush1.bf16.msra.mxu0 0
    %397 = vmatprep.subr.bf16.mxu0 0
    %398 = vmatpush1.bf16.msra.mxu0 0
    %399 = vmatprep.subr.bf16.mxu0 0
    %400 = vmatpush1.bf16.msra.mxu0 0
    %401 = vmatprep.subr.bf16.mxu0 0
    %402 = vmatpush1.bf16.msra.mxu0 0
    %403 = vmatprep.subr.bf16.mxu0 0
    %404 = vmatpush1.bf16.msra.mxu0 0
    %405 = vmatprep.subr.bf16.mxu0 0
    %406 = vmatpush1.bf16.msra.mxu0 0
    %407 = vmatprep.subr.bf16.mxu0 0
    %408 = vmatpush1.bf16.msra.mxu0 0
    %409 = vmatprep.subr.bf16.mxu0 0
    %410 = vmatpush1.bf16.msra.mxu0 0
    %411 = vmatprep.mubr.bf16.mxu0 0
    %412 = vmatmul.mubr.bf16.gmra.mrb[0].mxu0 %v378
    %v413 = vpop.f32.mrb[0].mxu0
    %v414 = vadd.f32 0.0, %v413
    %v415 = vpop.f32.mrb[0].mxu0
    %v416 = vadd.f32 0.0, %v415
    %v417 = vpop.f32.mrb[0].mxu0
    %v418 = vpop.f32.mrb[0].mxu0
    %419 = vdwg.mxu0
    %420 = vmatprep.subr.bf16.mxu0 %v108
    %421 = vmatpush1.bf16.msra.mxu0 %v107
    %422 = vmatprep.subr.bf16.mxu0 %v112
    %423 = vmatpush1.bf16.msra.mxu0 %v111
    %424 = vmatprep.subr.bf16.mxu0 %v116
    %425 = vmatpush1.bf16.msra.mxu0 %v115
    %426 = vmatprep.subr.bf16.mxu0 %v120
    %427 = vmatpush1.bf16.msra.mxu0 %v119
    %428 = vmatprep.subr.bf16.mxu0 %v124
    %429 = vmatpush1.bf16.msra.mxu0 %v123
    %430 = vmatprep.subr.bf16.mxu0 %v128
    %431 = vmatpush1.bf16.msra.mxu0 %v127
    %432 = vmatprep.subr.bf16.mxu0 %v132
    %433 = vmatpush1.bf16.msra.mxu0 %v131
    %434 = vmatprep.subr.bf16.mxu0 %v136
    %435 = vmatpush1.bf16.msra.mxu0 %v135
    %436 = vmatprep.subr.bf16.mxu0 0
    %437 = vmatpush1.bf16.msra.mxu0 0
    %438 = vmatprep.subr.bf16.mxu0 0
    %439 = vmatpush1.bf16.msra.mxu0 0
    %440 = vmatprep.subr.bf16.mxu0 0
    %441 = vmatpush1.bf16.msra.mxu0 0
    %442 = vmatprep.subr.bf16.mxu0 0
    %443 = vmatpush1.bf16.msra.mxu0 0
    %444 = vmatprep.subr.bf16.mxu0 0
    %445 = vmatpush1.bf16.msra.mxu0 0
    %446 = vmatprep.subr.bf16.mxu0 0
    %447 = vmatpush1.bf16.msra.mxu0 0
    %448 = vmatprep.subr.bf16.mxu0 0
    %449 = vmatpush1.bf16.msra.mxu0 0
    %450 = vmatprep.subr.bf16.mxu0 0
    %451 = vmatpush1.bf16.msra.mxu0 0
    %452 = vmatprep.mubr.bf16.mxu0 0
    %453 = vmatmul.mubr.bf16.gmra.mrb[0].mxu0 %v378
    %v454 = vpop.f32.mrb[0].mxu0
    %v455 = vadd.f32 0.0, %v454
    %v456 = vpop.f32.mrb[0].mxu0
    %v457 = vadd.f32 0.0, %v456
    %v458 = vpop.f32.mrb[0].mxu0
    %v459 = vpop.f32.mrb[0].mxu0
    %460 = vdwg.mxu0
    %v461 = vadd.f32 %v374, %v414
    %v462 = vadd.f32 %v375, %v416
    %v463 = vadd.f32 %v376, %v455
    %v464 = vadd.f32 %v377, %v457
    %v465 = vxor.u32 %v461, 2147483648
    %v466 = vmul.f32 %v465, 1.442695
    %v467 = vpow.pop %v466
    %v468 = vadd.f32 %v467, 1.0
    %v469 = vrcp.pop %v468
    %v470 = vmul.f32 1.0, %v469
    %v471 = vxor.u32 %v462, 2147483648
    %v472 = vmul.f32 %v471, 1.442695
    %v473 = vpow.pop %v472
    %v474 = vadd.f32 %v473, 1.0
    %v475 = vrcp.pop %v474
    %v476 = vmul.f32 1.0, %v475
    %v477 = vtanh.pop %v463
    %v478 = vxor.u32 %v464, 2147483648
    %v479 = vmul.f32 %v478, 1.442695
    %v480 = vpow.pop %v479
    %v481 = vadd.f32 %v480, 1.0
    %v482 = vrcp.pop %v481
    %v483 = vmul.f32 1.0, %v482
    %v484 = vmul.f32 %v476, %v368
    %v485 = vmul.f32 %v470, %v477
    %v486 = vadd.f32 %v484, %v485
    %v487 = vtanh.pop %v486
    %v488 = vmul.f32 %v483, %v487
    %s489 = scalar_lea.vmem [#allocation10], 16
    %490 = vst [vmem:[%s489] sm:$0xff] %v488
    %s491 = scalar_lea.vmem [#allocation4], 96
    %v492 = vld [vmem:[%s491] sm:$0xff]
    %v493 = vld [vmem:[%s491 + $0x8] sm:$0xff]
    %v494 = vld [vmem:[%s491 + $0x10] sm:$0xff]
    %v495 = vld [vmem:[%s491 + $0x18] sm:$0xff]
    %v496 = vpack.c.bf16 %v488, %v488
    %497 = vmatprep.subr.bf16.mxu0 %v106
    %498 = vmatpush1.bf16.msra.mxu0 %v105
    %499 = vmatprep.subr.bf16.mxu0 %v110
    %500 = vmatpush1.bf16.msra.mxu0 %v109
    %501 = vmatprep.subr.bf16.mxu0 %v114
    %502 = vmatpush1.bf16.msra.mxu0 %v113
    %503 = vmatprep.subr.bf16.mxu0 %v118
    %504 = vmatpush1.bf16.msra.mxu0 %v117
    %505 = vmatprep.subr.bf16.mxu0 %v122
    %506 = vmatpush1.bf16.msra.mxu0 %v121
    %507 = vmatprep.subr.bf16.mxu0 %v126
    %508 = vmatpush1.bf16.msra.mxu0 %v125
    %509 = vmatprep.subr.bf16.mxu0 %v130
    %510 = vmatpush1.bf16.msra.mxu0 %v129
    %511 = vmatprep.subr.bf16.mxu0 %v134
    %512 = vmatpush1.bf16.msra.mxu0 %v133
    %513 = vmatprep.subr.bf16.mxu0 0
    %514 = vmatpush1.bf16.msra.mxu0 0
    %515 = vmatprep.subr.bf16.mxu0 0
    %516 = vmatpush1.bf16.msra.mxu0 0
    %517 = vmatprep.subr.bf16.mxu0 0
    %518 = vmatpush1.bf16.msra.mxu0 0
    %519 = vmatprep.subr.bf16.mxu0 0
    %520 = vmatpush1.bf16.msra.mxu0 0
    %521 = vmatprep.subr.bf16.mxu0 0
    %522 = vmatpush1.bf16.msra.mxu0 0
    %523 = vmatprep.subr.bf16.mxu0 0
    %524 = vmatpush1.bf16.msra.mxu0 0
    %525 = vmatprep.subr.bf16.mxu0 0
    %526 = vmatpush1.bf16.msra.mxu0 0
    %527 = vmatprep.subr.bf16.mxu0 0
    %528 = vmatpush1.bf16.msra.mxu0 0
    %529 = vmatprep.mubr.bf16.mxu0 0
    %530 = vmatmul.mubr.bf16.gmra.mrb[0].mxu0 %v496
    %v531 = vpop.f32.mrb[0].mxu0
    %v532 = vadd.f32 0.0, %v531
    %v533 = vpop.f32.mrb[0].mxu0
    %v534 = vadd.f32 0.0, %v533
    %v535 = vpop.f32.mrb[0].mxu0
    %v536 = vpop.f32.mrb[0].mxu0
    %537 = vdwg.mxu0
    %538 = vmatprep.subr.bf16.mxu0 %v108
    %539 = vmatpush1.bf16.msra.mxu0 %v107
    %540 = vmatprep.subr.bf16.mxu0 %v112
    %541 = vmatpush1.bf16.msra.mxu0 %v111
    %542 = vmatprep.subr.bf16.mxu0 %v116
    %543 = vmatpush1.bf16.msra.mxu0 %v115
    %544 = vmatprep.subr.bf16.mxu0 %v120
    %545 = vmatpush1.bf16.msra.mxu0 %v119
    %546 = vmatprep.subr.bf16.mxu0 %v124
    %547 = vmatpush1.bf16.msra.mxu0 %v123
    %548 = vmatprep.subr.bf16.mxu0 %v128
    %549 = vmatpush1.bf16.msra.mxu0 %v127
    %550 = vmatprep.subr.bf16.mxu0 %v132
    %551 = vmatpush1.bf16.msra.mxu0 %v131
    %552 = vmatprep.subr.bf16.mxu0 %v136
    %553 = vmatpush1.bf16.msra.mxu0 %v135
    %554 = vmatprep.subr.bf16.mxu0 0
    %555 = vmatpush1.bf16.msra.mxu0 0
    %556 = vmatprep.subr.bf16.mxu0 0
    %557 = vmatpush1.bf16.msra.mxu0 0
    %558 = vmatprep.subr.bf16.mxu0 0
    %559 = vmatpush1.bf16.msra.mxu0 0
    %560 = vmatprep.subr.bf16.mxu0 0
    %561 = vmatpush1.bf16.msra.mxu0 0
    %562 = vmatprep.subr.bf16.mxu0 0
    %563 = vmatpush1.bf16.msra.mxu0 0
    %564 = vmatprep.subr.bf16.mxu0 0
    %565 = vmatpush1.bf16.msra.mxu0 0
    %566 = vmatprep.subr.bf16.mxu0 0
    %567 = vmatpush1.bf16.msra.mxu0 0
    %568 = vmatprep.subr.bf16.mxu0 0
    %569 = vmatpush1.bf16.msra.mxu0 0
    %570 = vmatprep.mubr.bf16.mxu0 0
    %571 = vmatmul.mubr.bf16.gmra.mrb[0].mxu0 %v496
    %v572 = vpop.f32.mrb[0].mxu0
    %v573 = vadd.f32 0.0, %v572
    %v574 = vpop.f32.mrb[0].mxu0
    %v575 = vadd.f32 0.0, %v574
    %v576 = vpop.f32.mrb[0].mxu0
    %v577 = vpop.f32.mrb[0].mxu0
    %578 = vdwg.mxu0
    %v579 = vadd.f32 %v492, %v532
    %v580 = vadd.f32 %v493, %v534
    %v581 = vadd.f32 %v494, %v573
    %v582 = vadd.f32 %v495, %v575
    %v583 = vxor.u32 %v579, 2147483648
    %v584 = vmul.f32 %v583, 1.442695
    %v585 = vpow.pop %v584
    %v586 = vadd.f32 %v585, 1.0
    %v587 = vrcp.pop %v586
    %v588 = vmul.f32 1.0, %v587
    %v589 = vxor.u32 %v580, 2147483648
    %v590 = vmul.f32 %v589, 1.442695
    %v591 = vpow.pop %v590
    %v592 = vadd.f32 %v591, 1.0
    %v593 = vrcp.pop %v592
    %v594 = vmul.f32 1.0, %v593
    %v595 = vtanh.pop %v581
    %v596 = vxor.u32 %v582, 2147483648
    %v597 = vmul.f32 %v596, 1.442695
    %v598 = vpow.pop %v597
    %v599 = vadd.f32 %v598, 1.0
    %v600 = vrcp.pop %v599
    %v601 = vmul.f32 1.0, %v600
    %v602 = vmul.f32 %v594, %v486
    %v603 = vmul.f32 %v588, %v595
    %v604 = vadd.f32 %v602, %v603
    %v605 = vtanh.pop %v604
    %v606 = vmul.f32 %v601, %v605
    %s607 = scalar_lea.vmem [#allocation10], 24
    %608 = vst [vmem:[%s607] sm:$0xff] %v606
    %s609 = scalar_lea.vmem [#allocation4], 128
    %v610 = vld [vmem:[%s609] sm:$0xff]
    %v611 = vld [vmem:[%s609 + $0x8] sm:$0xff]
    %v612 = vld [vmem:[%s609 + $0x10] sm:$0xff]
    %v613 = vld [vmem:[%s609 + $0x18] sm:$0xff]
    %v614 = vpack.c.bf16 %v606, %v606
    %615 = vmatprep.subr.bf16.mxu0 %v106
    %616 = vmatpush1.bf16.msra.mxu0 %v105
    %617 = vmatprep.subr.bf16.mxu0 %v110
    %618 = vmatpush1.bf16.msra.mxu0 %v109
    %619 = vmatprep.subr.bf16.mxu0 %v114
    %620 = vmatpush1.bf16.msra.mxu0 %v113
    %621 = vmatprep.subr.bf16.mxu0 %v118
    %622 = vmatpush1.bf16.msra.mxu0 %v117
    %623 = vmatprep.subr.bf16.mxu0 %v122
    %624 = vmatpush1.bf16.msra.mxu0 %v121
    %625 = vmatprep.subr.bf16.mxu0 %v126
    %626 = vmatpush1.bf16.msra.mxu0 %v125
    %627 = vmatprep.subr.bf16.mxu0 %v130
    %628 = vmatpush1.bf16.msra.mxu0 %v129
    %629 = vmatprep.subr.bf16.mxu0 %v134
    %630 = vmatpush1.bf16.msra.mxu0 %v133
    %631 = vmatprep.subr.bf16.mxu0 0
    %632 = vmatpush1.bf16.msra.mxu0 0
    %633 = vmatprep.subr.bf16.mxu0 0
    %634 = vmatpush1.bf16.msra.mxu0 0
    %635 = vmatprep.subr.bf16.mxu0 0
    %636 = vmatpush1.bf16.msra.mxu0 0
    %637 = vmatprep.subr.bf16.mxu0 0
    %638 = vmatpush1.bf16.msra.mxu0 0
    %639 = vmatprep.subr.bf16.mxu0 0
    %640 = vmatpush1.bf16.msra.mxu0 0
    %641 = vmatprep.subr.bf16.mxu0 0
    %642 = vmatpush1.bf16.msra.mxu0 0
    %643 = vmatprep.subr.bf16.mxu0 0
    %644 = vmatpush1.bf16.msra.mxu0 0
    %645 = vmatprep.subr.bf16.mxu0 0
    %646 = vmatpush1.bf16.msra.mxu0 0
    %647 = vmatprep.mubr.bf16.mxu0 0
    %648 = vmatmul.mubr.bf16.gmra.mrb[0].mxu0 %v614
    %v649 = vpop.f32.mrb[0].mxu0
    %v650 = vadd.f32 0.0, %v649
    %v651 = vpop.f32.mrb[0].mxu0
    %v652 = vadd.f32 0.0, %v651
    %v653 = vpop.f32.mrb[0].mxu0
    %v654 = vpop.f32.mrb[0].mxu0
    %655 = vdwg.mxu0
    %656 = vmatprep.subr.bf16.mxu0 %v108
    %657 = vmatpush1.bf16.msra.mxu0 %v107
    %658 = vmatprep.subr.bf16.mxu0 %v112
    %659 = vmatpush1.bf16.msra.mxu0 %v111
    %660 = vmatprep.subr.bf16.mxu0 %v116
    %661 = vmatpush1.bf16.msra.mxu0 %v115
    %662 = vmatprep.subr.bf16.mxu0 %v120
    %663 = vmatpush1.bf16.msra.mxu0 %v119
    %664 = vmatprep.subr.bf16.mxu0 %v124
    %665 = vmatpush1.bf16.msra.mxu0 %v123
    %666 = vmatprep.subr.bf16.mxu0 %v128
    %667 = vmatpush1.bf16.msra.mxu0 %v127
    %668 = vmatprep.subr.bf16.mxu0 %v132
    %669 = vmatpush1.bf16.msra.mxu0 %v131
    %670 = vmatprep.subr.bf16.mxu0 %v136
    %671 = vmatpush1.bf16.msra.mxu0 %v135
    %672 = vmatprep.subr.bf16.mxu0 0
    %673 = vmatpush1.bf16.msra.mxu0 0
    %674 = vmatprep.subr.bf16.mxu0 0
    %675 = vmatpush1.bf16.msra.mxu0 0
    %676 = vmatprep.subr.bf16.mxu0 0
    %677 = vmatpush1.bf16.msra.mxu0 0
    %678 = vmatprep.subr.bf16.mxu0 0
    %679 = vmatpush1.bf16.msra.mxu0 0
    %680 = vmatprep.subr.bf16.mxu0 0
    %681 = vmatpush1.bf16.msra.mxu0 0
    %682 = vmatprep.subr.bf16.mxu0 0
    %683 = vmatpush1.bf16.msra.mxu0 0
    %684 = vmatprep.subr.bf16.mxu0 0
    %685 = vmatpush1.bf16.msra.mxu0 0
    %686 = vmatprep.subr.bf16.mxu0 0
    %687 = vmatpush1.bf16.msra.mxu0 0
    %688 = vmatprep.mubr.bf16.mxu0 0
    %689 = vmatmul.mubr.bf16.gmra.mrb[0].mxu0 %v614
    %v690 = vpop.f32.mrb[0].mxu0
    %v691 = vadd.f32 0.0, %v690
    %v692 = vpop.f32.mrb[0].mxu0
    %v693 = vadd.f32 0.0, %v692
    %v694 = vpop.f32.mrb[0].mxu0
    %v695 = vpop.f32.mrb[0].mxu0
    %696 = vdwg.mxu0
    %v697 = vadd.f32 %v610, %v650
    %v698 = vadd.f32 %v611, %v652
    %v699 = vadd.f32 %v612, %v691
    %v700 = vadd.f32 %v613, %v693
    %v701 = vxor.u32 %v697, 2147483648
    %v702 = vmul.f32 %v701, 1.442695
    %v703 = vpow.pop %v702
    %v704 = vadd.f32 %v703, 1.0
    %v705 = vrcp.pop %v704
    %v706 = vmul.f32 1.0, %v705
    %v707 = vxor.u32 %v698, 2147483648
    %v708 = vmul.f32 %v707, 1.442695
    %v709 = vpow.pop %v708
    %v710 = vadd.f32 %v709, 1.0
    %v711 = vrcp.pop %v710
    %v712 = vmul.f32 1.0, %v711
    %v713 = vtanh.pop %v699
    %v714 = vxor.u32 %v700, 2147483648
    %v715 = vmul.f32 %v714, 1.442695
    %v716 = vpow.pop %v715
    %v717 = vadd.f32 %v716, 1.0
    %v718 = vrcp.pop %v717
    %v719 = vmul.f32 1.0, %v718
    %v720 = vmul.f32 %v712, %v604
    %v721 = vmul.f32 %v706, %v713
    %v722 = vadd.f32 %v720, %v721
    %v723 = vtanh.pop %v722
    %v724 = vmul.f32 %v719, %v723
    %s725 = scalar_lea.vmem [#allocation10], 32
    %726 = vst [vmem:[%s725] sm:$0xff] %v724
    %s727 = scalar_lea.vmem [#allocation4], 160
    %v728 = vld [vmem:[%s727] sm:$0xff]
    %v729 = vld [vmem:[%s727 + $0x8] sm:$0xff]
    %v730 = vld [vmem:[%s727 + $0x10] sm:$0xff]
    %v731 = vld [vmem:[%s727 + $0x18] sm:$0xff]
    %v732 = vpack.c.bf16 %v724, %v724
    %733 = vmatprep.subr.bf16.mxu0 %v106
    %734 = vmatpush1.bf16.msra.mxu0 %v105
    %735 = vmatprep.subr.bf16.mxu0 %v110
    %736 = vmatpush1.bf16.msra.mxu0 %v109
    %737 = vmatprep.subr.bf16.mxu0 %v114
    %738 = vmatpush1.bf16.msra.mxu0 %v113
    %739 = vmatprep.subr.bf16.mxu0 %v118
    %740 = vmatpush1.bf16.msra.mxu0 %v117
    %741 = vmatprep.subr.bf16.mxu0 %v122
    %742 = vmatpush1.bf16.msra.mxu0 %v121
    %743 = vmatprep.subr.bf16.mxu0 %v126
    %744 = vmatpush1.bf16.msra.mxu0 %v125
    %745 = vmatprep.subr.bf16.mxu0 %v130
    %746 = vmatpush1.bf16.msra.mxu0 %v129
    %747 = vmatprep.subr.bf16.mxu0 %v134
    %748 = vmatpush1.bf16.msra.mxu0 %v133
    %749 = vmatprep.subr.bf16.mxu0 0
    %750 = vmatpush1.bf16.msra.mxu0 0
    %751 = vmatprep.subr.bf16.mxu0 0
    %752 = vmatpush1.bf16.msra.mxu0 0
    %753 = vmatprep.subr.bf16.mxu0 0
    %754 = vmatpush1.bf16.msra.mxu0 0
    %755 = vmatprep.subr.bf16.mxu0 0
    %756 = vmatpush1.bf16.msra.mxu0 0
    %757 = vmatprep.subr.bf16.mxu0 0
    %758 = vmatpush1.bf16.msra.mxu0 0
    %759 = vmatprep.subr.bf16.mxu0 0
    %760 = vmatpush1.bf16.msra.mxu0 0
    %761 = vmatprep.subr.bf16.mxu0 0
    %762 = vmatpush1.bf16.msra.mxu0 0
    %763 = vmatprep.subr.bf16.mxu0 0
    %764 = vmatpush1.bf16.msra.mxu0 0
    %765 = vmatprep.mubr.bf16.mxu0 0
    %766 = vmatmul.mubr.bf16.gmra.mrb[0].mxu0 %v732
    %v767 = vpop.f32.mrb[0].mxu0
    %v768 = vadd.f32 0.0, %v767
    %v769 = vpop.f32.mrb[0].mxu0
    %v770 = vadd.f32 0.0, %v769
    %v771 = vpop.f32.mrb[0].mxu0
    %v772 = vpop.f32.mrb[0].mxu0
    %773 = vdwg.mxu0
    %774 = vmatprep.subr.bf16.mxu0 %v108
    %775 = vmatpush1.bf16.msra.mxu0 %v107
    %776 = vmatprep.subr.bf16.mxu0 %v112
    %777 = vmatpush1.bf16.msra.mxu0 %v111
    %778 = vmatprep.subr.bf16.mxu0 %v116
    %779 = vmatpush1.bf16.msra.mxu0 %v115
    %780 = vmatprep.subr.bf16.mxu0 %v120
    %781 = vmatpush1.bf16.msra.mxu0 %v119
    %782 = vmatprep.subr.bf16.mxu0 %v124
    %783 = vmatpush1.bf16.msra.mxu0 %v123
    %784 = vmatprep.subr.bf16.mxu0 %v128
    %785 = vmatpush1.bf16.msra.mxu0 %v127
    %786 = vmatprep.subr.bf16.mxu0 %v132
    %787 = vmatpush1.bf16.msra.mxu0 %v131
    %788 = vmatprep.subr.bf16.mxu0 %v136
    %789 = vmatpush1.bf16.msra.mxu0 %v135
    %790 = vmatprep.subr.bf16.mxu0 0
    %791 = vmatpush1.bf16.msra.mxu0 0
    %792 = vmatprep.subr.bf16.mxu0 0
    %793 = vmatpush1.bf16.msra.mxu0 0
    %794 = vmatprep.subr.bf16.mxu0 0
    %795 = vmatpush1.bf16.msra.mxu0 0
    %796 = vmatprep.subr.bf16.mxu0 0
    %797 = vmatpush1.bf16.msra.mxu0 0
    %798 = vmatprep.subr.bf16.mxu0 0
    %799 = vmatpush1.bf16.msra.mxu0 0
    %800 = vmatprep.subr.bf16.mxu0 0
    %801 = vmatpush1.bf16.msra.mxu0 0
    %802 = vmatprep.subr.bf16.mxu0 0
    %803 = vmatpush1.bf16.msra.mxu0 0
    %804 = vmatprep.subr.bf16.mxu0 0
    %805 = vmatpush1.bf16.msra.mxu0 0
    %806 = vmatprep.mubr.bf16.mxu0 0
    %807 = vmatmul.mubr.bf16.gmra.mrb[0].mxu0 %v732
    %v808 = vpop.f32.mrb[0].mxu0
    %v809 = vadd.f32 0.0, %v808
    %v810 = vpop.f32.mrb[0].mxu0
    %v811 = vadd.f32 0.0, %v810
    %v812 = vpop.f32.mrb[0].mxu0
    %v813 = vpop.f32.mrb[0].mxu0
    %814 = vdwg.mxu0
    %v815 = vadd.f32 %v728, %v768
    %v816 = vadd.f32 %v729, %v770
    %v817 = vadd.f32 %v730, %v809
    %v818 = vadd.f32 %v731, %v811
    %v819 = vxor.u32 %v815, 2147483648
    %v820 = vmul.f32 %v819, 1.442695
    %v821 = vpow.pop %v820
    %v822 = vadd.f32 %v821, 1.0
    %v823 = vrcp.pop %v822
    %v824 = vmul.f32 1.0, %v823
    %v825 = vxor.u32 %v816, 2147483648
    %v826 = vmul.f32 %v825, 1.442695
    %v827 = vpow.pop %v826
    %v828 = vadd.f32 %v827, 1.0
    %v829 = vrcp.pop %v828
    %v830 = vmul.f32 1.0, %v829
    %v831 = vtanh.pop %v817
    %v832 = vxor.u32 %v818, 2147483648
    %v833 = vmul.f32 %v832, 1.442695
    %v834 = vpow.pop %v833
    %v835 = vadd.f32 %v834, 1.0
    %v836 = vrcp.pop %v835
    %v837 = vmul.f32 1.0, %v836
    %v838 = vmul.f32 %v830, %v722
    %v839 = vmul.f32 %v824, %v831
    %v840 = vadd.f32 %v838, %v839
    %v841 = vtanh.pop %v840
    %v842 = vmul.f32 %v837, %v841
    %s843 = scalar_lea.vmem [#allocation10], 40
    %844 = vst [vmem:[%s843] sm:$0xff] %v842
    %s845 = scalar_lea.vmem [#allocation4], 192
    %v846 = vld [vmem:[%s845] sm:$0xff]
    %v847 = vld [vmem:[%s845 + $0x8] sm:$0xff]
    %v848 = vld [vmem:[%s845 + $0x10] sm:$0xff]
    %v849 = vld [vmem:[%s845 + $0x18] sm:$0xff]
    %v850 = vpack.c.bf16 %v842, %v842
    %851 = vmatprep.subr.bf16.mxu0 %v106
    %852 = vmatpush1.bf16.msra.mxu0 %v105
    %853 = vmatprep.subr.bf16.mxu0 %v110
    %854 = vmatpush1.bf16.msra.mxu0 %v109
    %855 = vmatprep.subr.bf16.mxu0 %v114
    %856 = vmatpush1.bf16.msra.mxu0 %v113
    %857 = vmatprep.subr.bf16.mxu0 %v118
    %858 = vmatpush1.bf16.msra.mxu0 %v117
    %859 = vmatprep.subr.bf16.mxu0 %v122
    %860 = vmatpush1.bf16.msra.mxu0 %v121
    %861 = vmatprep.subr.bf16.mxu0 %v126
    %862 = vmatpush1.bf16.msra.mxu0 %v125
    %863 = vmatprep.subr.bf16.mxu0 %v130
    %864 = vmatpush1.bf16.msra.mxu0 %v129
    %865 = vmatprep.subr.bf16.mxu0 %v134
    %866 = vmatpush1.bf16.msra.mxu0 %v133
    %867 = vmatprep.subr.bf16.mxu0 0
    %868 = vmatpush1.bf16.msra.mxu0 0
    %869 = vmatprep.subr.bf16.mxu0 0
    %870 = vmatpush1.bf16.msra.mxu0 0
    %871 = vmatprep.subr.bf16.mxu0 0
    %872 = vmatpush1.bf16.msra.mxu0 0
    %873 = vmatprep.subr.bf16.mxu0 0
    %874 = vmatpush1.bf16.msra.mxu0 0
    %875 = vmatprep.subr.bf16.mxu0 0
    %876 = vmatpush1.bf16.msra.mxu0 0
    %877 = vmatprep.subr.bf16.mxu0 0
    %878 = vmatpush1.bf16.msra.mxu0 0
    %879 = vmatprep.subr.bf16.mxu0 0
    %880 = vmatpush1.bf16.msra.mxu0 0
    %881 = vmatprep.subr.bf16.mxu0 0
    %882 = vmatpush1.bf16.msra.mxu0 0
    %883 = vmatprep.mubr.bf16.mxu0 0
    %884 = vmatmul.mubr.bf16.gmra.mrb[0].mxu0 %v850
    %v885 = vpop.f32.mrb[0].mxu0
    %v886 = vadd.f32 0.0, %v885
    %v887 = vpop.f32.mrb[0].mxu0
    %v888 = vadd.f32 0.0, %v887
    %v889 = vpop.f32.mrb[0].mxu0
    %v890 = vpop.f32.mrb[0].mxu0
    %891 = vdwg.mxu0
    %892 = vmatprep.subr.bf16.mxu0 %v108
    %893 = vmatpush1.bf16.msra.mxu0 %v107
    %894 = vmatprep.subr.bf16.mxu0 %v112
    %895 = vmatpush1.bf16.msra.mxu0 %v111
    %896 = vmatprep.subr.bf16.mxu0 %v116
    %897 = vmatpush1.bf16.msra.mxu0 %v115
    %898 = vmatprep.subr.bf16.mxu0 %v120
    %899 = vmatpush1.bf16.msra.mxu0 %v119
    %900 = vmatprep.subr.bf16.mxu0 %v124
    %901 = vmatpush1.bf16.msra.mxu0 %v123
    %902 = vmatprep.subr.bf16.mxu0 %v128
    %903 = vmatpush1.bf16.msra.mxu0 %v127
    %904 = vmatprep.subr.bf16.mxu0 %v132
    %905 = vmatpush1.bf16.msra.mxu0 %v131
    %906 = vmatprep.subr.bf16.mxu0 %v136
    %907 = vmatpush1.bf16.msra.mxu0 %v135
    %908 = vmatprep.subr.bf16.mxu0 0
    %909 = vmatpush1.bf16.msra.mxu0 0
    %910 = vmatprep.subr.bf16.mxu0 0
    %911 = vmatpush1.bf16.msra.mxu0 0
    %912 = vmatprep.subr.bf16.mxu0 0
    %913 = vmatpush1.bf16.msra.mxu0 0
    %914 = vmatprep.subr.bf16.mxu0 0
    %915 = vmatpush1.bf16.msra.mxu0 0
    %916 = vmatprep.subr.bf16.mxu0 0
    %917 = vmatpush1.bf16.msra.mxu0 0
    %918 = vmatprep.subr.bf16.mxu0 0
    %919 = vmatpush1.bf16.msra.mxu0 0
    %920 = vmatprep.subr.bf16.mxu0 0
    %921 = vmatpush1.bf16.msra.mxu0 0
    %922 = vmatprep.subr.bf16.mxu0 0
    %923 = vmatpush1.bf16.msra.mxu0 0
    %924 = vmatprep.mubr.bf16.mxu0 0
    %925 = vmatmul.mubr.bf16.gmra.mrb[0].mxu0 %v850
    %v926 = vpop.f32.mrb[0].mxu0
    %v927 = vadd.f32 0.0, %v926
    %v928 = vpop.f32.mrb[0].mxu0
    %v929 = vadd.f32 0.0, %v928
    %v930 = vpop.f32.mrb[0].mxu0
    %v931 = vpop.f32.mrb[0].mxu0
    %932 = vdwg.mxu0
    %v933 = vadd.f32 %v846, %v886
    %v934 = vadd.f32 %v847, %v888
    %v935 = vadd.f32 %v848, %v927
    %v936 = vadd.f32 %v849, %v929
    %v937 = vxor.u32 %v933, 2147483648
    %v938 = vmul.f32 %v937, 1.442695
    %v939 = vpow.pop %v938
    %v940 = vadd.f32 %v939, 1.0
    %v941 = vrcp.pop %v940
    %v942 = vmul.f32 1.0, %v941
    %v943 = vxor.u32 %v934, 2147483648
    %v944 = vmul.f32 %v943, 1.442695
    %v945 = vpow.pop %v944
    %v946 = vadd.f32 %v945, 1.0
    %v947 = vrcp.pop %v946
    %v948 = vmul.f32 1.0, %v947
    %v949 = vtanh.pop %v935
    %v950 = vxor.u32 %v936, 2147483648
    %v951 = vmul.f32 %v950, 1.442695
    %v952 = vpow.pop %v951
    %v953 = vadd.f32 %v952, 1.0
    %v954 = vrcp.pop %v953
    %v955 = vmul.f32 1.0, %v954
    %v956 = vmul.f32 %v948, %v840
    %v957 = vmul.f32 %v942, %v949
    %v958 = vadd.f32 %v956, %v957
    %v959 = vtanh.pop %v958
    %v960 = vmul.f32 %v955, %v959
    %s961 = scalar_lea.vmem [#allocation10], 48
    %962 = vst [vmem:[%s961] sm:$0xff] %v960
    %s963 = scalar_lea.vmem [#allocation4], 224
    %v964 = vld [vmem:[%s963] sm:$0xff]
    %v965 = vld [vmem:[%s963 + $0x8] sm:$0xff]
    %v966 = vld [vmem:[%s963 + $0x10] sm:$0xff]
    %v967 = vld [vmem:[%s963 + $0x18] sm:$0xff]
    %v968 = vpack.c.bf16 %v960, %v960
    %969 = vmatprep.subr.bf16.mxu0 %v106
    %970 = vmatpush1.bf16.msra.mxu0 %v105
    %971 = vmatprep.subr.bf16.mxu0 %v110
    %972 = vmatpush1.bf16.msra.mxu0 %v109
    %973 = vmatprep.subr.bf16.mxu0 %v114
    %974 = vmatpush1.bf16.msra.mxu0 %v113
    %975 = vmatprep.subr.bf16.mxu0 %v118
    %976 = vmatpush1.bf16.msra.mxu0 %v117
    %977 = vmatprep.subr.bf16.mxu0 %v122
    %978 = vmatpush1.bf16.msra.mxu0 %v121
    %979 = vmatprep.subr.bf16.mxu0 %v126
    %980 = vmatpush1.bf16.msra.mxu0 %v125
    %981 = vmatprep.subr.bf16.mxu0 %v130
    %982 = vmatpush1.bf16.msra.mxu0 %v129
    %983 = vmatprep.subr.bf16.mxu0 %v134
    %984 = vmatpush1.bf16.msra.mxu0 %v133
    %985 = vmatprep.subr.bf16.mxu0 0
    %986 = vmatpush1.bf16.msra.mxu0 0
    %987 = vmatprep.subr.bf16.mxu0 0
    %988 = vmatpush1.bf16.msra.mxu0 0
    %989 = vmatprep.subr.bf16.mxu0 0
    %990 = vmatpush1.bf16.msra.mxu0 0
    %991 = vmatprep.subr.bf16.mxu0 0
    %992 = vmatpush1.bf16.msra.mxu0 0
    %993 = vmatprep.subr.bf16.mxu0 0
    %994 = vmatpush1.bf16.msra.mxu0 0
    %995 = vmatprep.subr.bf16.mxu0 0
    %996 = vmatpush1.bf16.msra.mxu0 0
    %997 = vmatprep.subr.bf16.mxu0 0
    %998 = vmatpush1.bf16.msra.mxu0 0
    %999 = vmatprep.subr.bf16.mxu0 0
    %1000 = vmatpush1.bf16.msra.mxu0 0
    %1001 = vmatprep.mubr.bf16.mxu0 0
    %1002 = vmatmul.mubr.bf16.gmra.mrb[0].mxu0 %v968
    %v1003 = vpop.f32.mrb[0].mxu0
    %v1004 = vadd.f32 0.0, %v1003
    %v1005 = vpop.f32.mrb[0].mxu0
    %v1006 = vadd.f32 0.0, %v1005
    %v1007 = vpop.f32.mrb[0].mxu0
    %v1008 = vpop.f32.mrb[0].mxu0
    %1009 = vdwg.mxu0
    %1010 = vmatprep.subr.bf16.mxu0 %v108
    %1011 = vmatpush1.bf16.msra.mxu0 %v107
    %1012 = vmatprep.subr.bf16.mxu0 %v112
    %1013 = vmatpush1.bf16.msra.mxu0 %v111
    %1014 = vmatprep.subr.bf16.mxu0 %v116
    %1015 = vmatpush1.bf16.msra.mxu0 %v115
    %1016 = vmatprep.subr.bf16.mxu0 %v120
    %1017 = vmatpush1.bf16.msra.mxu0 %v119
    %1018 = vmatprep.subr.bf16.mxu0 %v124
    %1019 = vmatpush1.bf16.msra.mxu0 %v123
    %1020 = vmatprep.subr.bf16.mxu0 %v128
    %1021 = vmatpush1.bf16.msra.mxu0 %v127
    %1022 = vmatprep.subr.bf16.mxu0 %v132
    %1023 = vmatpush1.bf16.msra.mxu0 %v131
    %1024 = vmatprep.subr.bf16.mxu0 %v136
    %1025 = vmatpush1.bf16.msra.mxu0 %v135
    %1026 = vmatprep.subr.bf16.mxu0 0
    %1027 = vmatpush1.bf16.msra.mxu0 0
    %1028 = vmatprep.subr.bf16.mxu0 0
    %1029 = vmatpush1.bf16.msra.mxu0 0
    %1030 = vmatprep.subr.bf16.mxu0 0
    %1031 = vmatpush1.bf16.msra.mxu0 0
    %1032 = vmatprep.subr.bf16.mxu0 0
    %1033 = vmatpush1.bf16.msra.mxu0 0
    %1034 = vmatprep.subr.bf16.mxu0 0
    %1035 = vmatpush1.bf16.msra.mxu0 0
    %1036 = vmatprep.subr.bf16.mxu0 0
    %1037 = vmatpush1.bf16.msra.mxu0 0
    %1038 = vmatprep.subr.bf16.mxu0 0
    %1039 = vmatpush1.bf16.msra.mxu0 0
    %1040 = vmatprep.subr.bf16.mxu0 0
    %1041 = vmatpush1.bf16.msra.mxu0 0
    %1042 = vmatprep.mubr.bf16.mxu0 0
    %1043 = vmatmul.mubr.bf16.gmra.mrb[0].mxu0 %v968
    %v1044 = vpop.f32.mrb[0].mxu0
    %v1045 = vadd.f32 0.0, %v1044
    %v1046 = vpop.f32.mrb[0].mxu0
    %v1047 = vadd.f32 0.0, %v1046
    %v1048 = vpop.f32.mrb[0].mxu0
    %v1049 = vpop.f32.mrb[0].mxu0
    %1050 = vdwg.mxu0
    %v1051 = vadd.f32 %v964, %v1004
    %v1052 = vadd.f32 %v965, %v1006
    %v1053 = vadd.f32 %v966, %v1045
    %v1054 = vadd.f32 %v967, %v1047
    %v1055 = vxor.u32 %v1051, 2147483648
    %v1056 = vmul.f32 %v1055, 1.442695
    %v1057 = vpow.pop %v1056
    %v1058 = vadd.f32 %v1057, 1.0
    %v1059 = vrcp.pop %v1058
    %v1060 = vmul.f32 1.0, %v1059
    %v1061 = vxor.u32 %v1052, 2147483648
    %v1062 = vmul.f32 %v1061, 1.442695
    %v1063 = vpow.pop %v1062
    %v1064 = vadd.f32 %v1063, 1.0
    %v1065 = vrcp.pop %v1064
    %v1066 = vmul.f32 1.0, %v1065
    %v1067 = vtanh.pop %v1053
    %v1068 = vxor.u32 %v1054, 2147483648
    %v1069 = vmul.f32 %v1068, 1.442695
    %v1070 = vpow.pop %v1069
    %v1071 = vadd.f32 %v1070, 1.0
    %v1072 = vrcp.pop %v1071
    %v1073 = vmul.f32 1.0, %v1072
    %v1074 = vmul.f32 %v1066, %v958
    %v1075 = vmul.f32 %v1060, %v1067
    %v1076 = vadd.f32 %v1074, %v1075
    %v1077 = vtanh.pop %v1076
    %v1078 = vmul.f32 %v1073, %v1077
    %s1079 = scalar_lea.vmem [#allocation10], 56
    %1080 = vst [vmem:[%s1079] sm:$0xff] %v1078
    %1081 = vst [vmem:[#allocation11] sm:$0xff] %v1078
    %1082 = vst [vmem:[#allocation13] sm:$0xff] %v1076
    // Predicated region
    $region30: #{_forward_impl.6} parent=1 // pred_check
      _
    $region31: #{_forward_impl.6} parent=1 // pred_check_branch
      %1084 = sbr.rel (0) target = $region33
    $region32: #{_forward_impl.6} parent=1 // pred_region
      %s1086 = ssub.s32 1024, 1024
      %1087 = vsyncadd [#allocation6], %s1086
      %s1088 = sshll.u32 [#allocation10], 4
      %s1089 = int_to_ptr.vmem [resolvable:$true] %s1088
      %1094 = dma.vmem_to_hbm [thread:$0]  %s1089, 1024, %s4, [#allocation6], 128, 128, 8
    $region33: #{_forward_impl.6} parent=1 // pred_fallthru
      _
    // Predicated region
    $region34: #{_forward_impl.6} parent=1 // pred_check
      _
    $region35: #{_forward_impl.6} parent=1 // pred_check_branch
      %1096 = sbr.rel (0) target = $region37
    $region36: #{_forward_impl.6} parent=1 // pred_region
      %s1098 = ssub.s32 128, 128
      %1099 = vsyncadd [#allocation12], %s1098
      %s1101 = sshll.u32 [#allocation11], 4
      %s1102 = int_to_ptr.vmem [resolvable:$true] %s1101
      %1104 = dma.vmem_to_hbm [thread:$0]  %s1102, 128, %s5, [#allocation12]
    $region37: #{_forward_impl.6} parent=1 // pred_fallthru
      _
    // Predicated region
    $region38: #{_forward_impl.6} parent=1 // pred_check
      _
    $region39: #{_forward_impl.6} parent=1 // pred_check_branch
      %1106 = sbr.rel (0) target = $region41
    $region40: #{_forward_impl.6} parent=1 // pred_region
      %s1108 = ssub.s32 128, 128
      %1109 = vsyncadd [#allocation12], %s1108
      %s1111 = sshll.u32 [#allocation13], 4
      %s1112 = int_to_ptr.vmem [resolvable:$true] %s1111
      %1114 = dma.vmem_to_hbm [thread:$0]  %s1112, 128, %s6, [#allocation12]
    $region41: #{_forward_impl.6} parent=1 // pred_fallthru
      _
    // Predicated region
    $region42: #{_forward_impl.6} parent=1 // pred_check
      _
    $region43: #{_forward_impl.6} parent=1 // pred_check_branch
      %1116 = sbr.rel (0) target = $region45
    $region44: #{_forward_impl.6} parent=1 // pred_region
      %1117 = dma.done [#allocation6], 1024
    $region45: #{_forward_impl.6} parent=1 // pred_fallthru
      _
    // Predicated region
    $region46: #{_forward_impl.6} parent=1 // pred_check
      _
    $region47: #{_forward_impl.6} parent=1 // pred_check_branch
      %1119 = sbr.rel (0) target = $region49
    $region48: #{_forward_impl.6} parent=1 // pred_region
      %1120 = dma.done [#allocation12], 128
    $region49: #{_forward_impl.6} parent=1 // pred_fallthru
      _
    // Predicated region
    $region50: #{_forward_impl.6} parent=1 // pred_check
      _
    $region51: #{_forward_impl.6} parent=1 // pred_check_branch
      %1122 = sbr.rel (0) target = $region53
    $region52: #{_forward_impl.6} parent=1 // pred_region
      %1123 = dma.done [#allocation12], 128
    $region53: #{_forward_impl.6} parent=1 // pred_fallthru
      _
    %1124 = vsyncpa [#allocation5], 1
    %1125 = vsyncpa [#allocation8], 1
    %1126 = vsyncpa [#allocation6], 1
    %1127 = vsyncpa [#allocation12], 1
  %1128 = vsyncmov [#allocation3]
  %s1129 = vpop.sfrf %1128
  %p1130 = scmp.eq.s32.totalorder %s1129, 0
  %p1131 = pneg %p1130
  %1133 = shalt.err (%p1131)

</llo_original>
